<compile_context>
chip_gen: v7x
topology: tpu7x:2x2x1
jax: 0.10.0
libtpu: 0.0.40
codegen_flags: <defaults>
</compile_context>

<pallas_src>
import jax
import jax.numpy as jnp
import numpy as np
from jax.experimental import pallas as pl
from jax.experimental.pallas import tpu as pltpu

Z_DIM = 2
H_DIM = 1000
X_DIM = 28 ** 2  # 784

# padded (TPU-friendly) dims
ZP = 8      # z_dim 2 -> 8 (sublane-aligned; full-dim block)
HP = 1024   # 1000 -> 1024 (lane-aligned hidden)
# output keeps its native 784 columns (block last dim == full array dim)


def _choose_tb(batch):
    """Batch tile selection.

    - small batches: one tile, rounded up to a multiple of 8 (sublanes)
    - medium batches (<=1024): TB=256 so the grid has >=2 steps and the
      "parallel" batch axis can be sharded across v7x's 2 TensorCores
    - large batches: TB=512 to amortize the ~0.35us fixed per-step overhead
      while keeping per-core VMEM use modest (safe on v7x's 64 MiB).
    """
    if batch <= 256:
        return max(8, ((batch + 7) // 8) * 8)
    if batch <= 1024:
        return 256
    return 512


def _pnet_kernel(x_ref, w1_ref, b1_ref, w2_ref, b2_ref, w3_ref, b3_ref, o_ref):
    x = x_ref[...]            # (TB, ZP) f32; only columns 0,1 are real, rest 0
    w1 = w1_ref[...]          # (ZP, HP) f32

    # lin1 on the VPU: K=2 contraction as two broadcast FMAs, all in f32.
    h = x[:, 0:1] * w1[0:1, :] + x[:, 1:2] * w1[1:2, :] + b1_ref[...]
    # dropout(p=0.25) is identity in eval mode; then relu
    h = jnp.maximum(h, 0.0)

    # lin2 on the MXU (bf16 operands, f32 accumulation) + eval-mode dropout
    h = jnp.dot(h.astype(jnp.bfloat16), w2_ref[...],
                preferred_element_type=jnp.float32) + b2_ref[...]

    # lin3 on the MXU, then sigmoid via EUP exp + approximate reciprocal
    h = jnp.dot(h.astype(jnp.bfloat16), w3_ref[...],
                preferred_element_type=jnp.float32) + b3_ref[...]
    o_ref[...] = pl.reciprocal(1.0 + jnp.exp(-h), approx=True).astype(o_ref.dtype)


def prepare_params(w1, b1, w2, b2, w3, b3):
    """One-time: transpose PyTorch [out,in] weights to [in,out], zero-pad to
    TPU-friendly shapes. w1 stays f32 (VPU path); w2/w3 are cast to bf16 for
    the MXU. Biases stay f32."""
    def padt(w, rp, cp, dtype):
        wt = jnp.asarray(w, jnp.float32).T
        out = jnp.zeros((rp, cp), jnp.float32)
        out = out.at[: wt.shape[0], : wt.shape[1]].set(wt)
        return out.astype(dtype)

    def padb(b, cp):
        b = jnp.asarray(b, jnp.float32)
        return jnp.zeros((1, cp), jnp.float32).at[0, : b.shape[0]].set(b)

    return (padt(w1, ZP, HP, jnp.float32),      # (8, 1024)   f32, 32 KiB
            padb(b1, HP),                       # (1, 1024)   f32
            padt(w2, HP, HP, jnp.bfloat16),     # (1024, 1024) bf16, 2 MiB
            padb(b2, HP),                       # (1, 1024)   f32
            padt(w3, HP, X_DIM, jnp.bfloat16),  # (1024, 784) bf16, ~1.5 MiB
            padb(b3, X_DIM))                    # (1, 784)    f32


@jax.jit
def pnet_forward(x, w1p, b1p, w2p, b2p, w3p, b3p):
    """x: [B, Z_DIM] float32. Params already padded/transposed (prepare_params)."""
    B = x.shape[0]
    TB = _choose_tb(B)
    n_tiles = pl.cdiv(B, TB)
    Bp = n_tiles * TB

    xp = jnp.zeros((Bp, ZP), jnp.float32)
    xp = xp.at[:B, :Z_DIM].set(x.astype(jnp.float32))

    out = pl.pallas_call(
        _pnet_kernel,
        out_shape=jax.ShapeDtypeStruct((Bp, X_DIM), jnp.float32),
        grid=(n_tiles,),
        in_specs=[
            pl.BlockSpec((TB, ZP), lambda i: (i, 0)),       # x tile (per grid step)
            pl.BlockSpec((ZP, HP), lambda i: (0, 0)),       # w1 (resident, f32)
            pl.BlockSpec((1, HP), lambda i: (0, 0)),        # b1
            pl.BlockSpec((HP, HP), lambda i: (0, 0)),       # w2 (resident, bf16)
            pl.BlockSpec((1, HP), lambda i: (0, 0)),        # b2
            pl.BlockSpec((HP, X_DIM), lambda i: (0, 0)),    # w3 (resident, bf16)
            pl.BlockSpec((1, X_DIM), lambda i: (0, 0)),     # b3
        ],
        out_specs=pl.BlockSpec((TB, X_DIM), lambda i: (i, 0)),
        compiler_params=pltpu.CompilerParams(
            dimension_semantics=("parallel",),              # megacore split on v7x
            vmem_limit_bytes=48 * 1024 * 1024,
        ),
    )(xp, w1p, b1p, w2p, b2p, w3p, b3p)

    # Row-only slice when the batch was padded; no column de-pad needed since
    # the kernel already writes exactly X_DIM=784 columns.
    return out if Bp == B else out[:B]


def init_params(key):
    """Deterministic init matching nn.Linear shapes (PyTorch [out, in] weights)."""
    ks = jax.random.split(key, 6)

    def linear(kw, kb, fan_in, fan_out):
        bound = 1.0 / np.sqrt(fan_in)
        w = jax.random.uniform(kw, (fan_out, fan_in), jnp.float32, -bound, bound)
        b = jax.random.uniform(kb, (fan_out,), jnp.float32, -bound, bound)
        return w, b

    w1, b1 = linear(ks[0], ks[1], Z_DIM, H_DIM)
    w2, b2 = linear(ks[2], ks[3], H_DIM, H_DIM)
    w3, b3 = linear(ks[4], ks[5], H_DIM, X_DIM)
    return w1, b1, w2, b2, w3, b3


def reference_forward(x, w1, b1, w2, b2, w3, b3):
    # PyTorch P_net in eval mode: no activation after lin2 (only dropout).
    h = x @ w1.T + b1
    h = jnp.maximum(h, 0.0)
    h = h @ w2.T + b2
    h = h @ w3.T + b3
    return jax.nn.sigmoid(h)


if __name__ == "__main__":
    key = jax.random.PRNGKey(0)
    k_x, k_p = jax.random.split(key)

    B = 12  # not a multiple of 8: exercises batch padding + final row slice
    x = jax.random.normal(k_x, (B, Z_DIM), jnp.float32)
    params = init_params(k_p)

    padded = prepare_params(*params)          # one-time transpose/pad/cast
    out = pnet_forward(x, *padded)
    out = jax.block_until_ready(out)

    ref = reference_forward(x, *params)       # pure f32 reference
    np.testing.assert_allclose(np.asarray(out), np.asarray(ref),
                               rtol=0.0, atol=2e-2)  # bf16 matmul + approx-recip tol
    assert out.shape == (B, X_DIM)

    print("KERNEL_OK")
</pallas_src>

<mosaic_0001>
module attributes {stable_mosaic.version = 11 : i64} {
  func.func @_pnet_kernel(%arg0: i32, %arg1: memref<16x8xf32, #tpu.memory_space<vmem>>, %arg2: memref<8x1024xf32, #tpu.memory_space<vmem>>, %arg3: memref<1x1024xf32, #tpu.memory_space<vmem>>, %arg4: memref<1024x1024xbf16, #tpu.memory_space<vmem>>, %arg5: memref<1x1024xf32, #tpu.memory_space<vmem>>, %arg6: memref<1024x784xbf16, #tpu.memory_space<vmem>>, %arg7: memref<1x784xf32, #tpu.memory_space<vmem>>, %arg8: memref<16x784xf32, #tpu.memory_space<vmem>>) attributes {dimension_semantics = [#tpu.dimension_semantics<parallel>], iteration_bounds = array<i64: 1>, scalar_prefetch = 0 : i64, scratch_operands = 0 : i64, tpu.core_type = #tpu.core_type<tc>, window_params = [{transform_indices = @transform_0, window_bounds = array<i64: 16, 8>}, {pipeline_mode = #tpu.pipeline_mode<synchronous>, transform_indices = @transform_1, window_bounds = array<i64: 8, 1024>}, {pipeline_mode = #tpu.pipeline_mode<synchronous>, transform_indices = @transform_2, window_bounds = array<i64: 1, 1024>}, {pipeline_mode = #tpu.pipeline_mode<synchronous>, transform_indices = @transform_3, window_bounds = array<i64: 1024, 1024>}, {pipeline_mode = #tpu.pipeline_mode<synchronous>, transform_indices = @transform_4, window_bounds = array<i64: 1, 1024>}, {pipeline_mode = #tpu.pipeline_mode<synchronous>, transform_indices = @transform_5, window_bounds = array<i64: 1024, 784>}, {pipeline_mode = #tpu.pipeline_mode<synchronous>, transform_indices = @transform_6, window_bounds = array<i64: 1, 784>}, {transform_indices = @transform_7, window_bounds = array<i64: 16, 784>}]} {
    %c0 = arith.constant 0 : index
    %c0_0 = arith.constant 0 : index
    %0 = vector.load %arg1[%c0, %c0_0] : memref<16x8xf32, #tpu.memory_space<vmem>>, vector<16x8xf32>
    %c0_1 = arith.constant 0 : index
    %c0_2 = arith.constant 0 : index
    %1 = vector.load %arg2[%c0_1, %c0_2] : memref<8x1024xf32, #tpu.memory_space<vmem>>, vector<8x1024xf32>
    %2 = vector.extract_strided_slice %0 {offsets = [0, 0], sizes = [16, 1], strides = [1, 1]} : vector<16x8xf32> to vector<16x1xf32>
    %3 = vector.extract_strided_slice %1 {offsets = [0, 0], sizes = [1, 1024], strides = [1, 1]} : vector<8x1024xf32> to vector<1x1024xf32>
    %4 = vector.broadcast %2 : vector<16x1xf32> to vector<16x1024xf32>
    %5 = vector.broadcast %3 : vector<1x1024xf32> to vector<16x1024xf32>
    %6 = arith.mulf %4, %5 : vector<16x1024xf32>
    %7 = vector.extract_strided_slice %0 {offsets = [0, 1], sizes = [16, 1], strides = [1, 1]} : vector<16x8xf32> to vector<16x1xf32>
    %8 = vector.extract_strided_slice %1 {offsets = [1, 0], sizes = [1, 1024], strides = [1, 1]} : vector<8x1024xf32> to vector<1x1024xf32>
    %9 = vector.broadcast %7 : vector<16x1xf32> to vector<16x1024xf32>
    %10 = vector.broadcast %8 : vector<1x1024xf32> to vector<16x1024xf32>
    %11 = arith.mulf %9, %10 : vector<16x1024xf32>
    %12 = arith.addf %6, %11 : vector<16x1024xf32>
    %c0_3 = arith.constant 0 : index
    %c0_4 = arith.constant 0 : index
    %13 = vector.load %arg3[%c0_3, %c0_4] : memref<1x1024xf32, #tpu.memory_space<vmem>>, vector<1x1024xf32>
    %14 = vector.broadcast %13 : vector<1x1024xf32> to vector<16x1024xf32>
    %15 = arith.addf %12, %14 : vector<16x1024xf32>
    %cst = arith.constant 0.000000e+00 : f32
    %16 = vector.broadcast %cst : f32 to vector<16x1024xf32>
    %17 = arith.maximumf %15, %16 : vector<16x1024xf32>
    %18 = arith.truncf %17 : vector<16x1024xf32> to vector<16x1024xbf16>
    %c0_5 = arith.constant 0 : index
    %c0_6 = arith.constant 0 : index
    %19 = vector.load %arg4[%c0_5, %c0_6] : memref<1024x1024xbf16, #tpu.memory_space<vmem>>, vector<1024x1024xbf16>
    %cst_7 = arith.constant dense<0.000000e+00> : vector<16x1024xf32>
    %20 = tpu.matmul %18, %19, %cst_7 {dimension_numbers = #tpu.dot_dimension_numbers<[1], [0], [0], [1], [0, 0, 1, 1], [], []>} : vector<16x1024xbf16>, vector<1024x1024xbf16>, vector<16x1024xf32> -> vector<16x1024xf32>
    %c0_8 = arith.constant 0 : index
    %c0_9 = arith.constant 0 : index
    %21 = vector.load %arg5[%c0_8, %c0_9] : memref<1x1024xf32, #tpu.memory_space<vmem>>, vector<1x1024xf32>
    %22 = vector.broadcast %21 : vector<1x1024xf32> to vector<16x1024xf32>
    %23 = arith.addf %20, %22 : vector<16x1024xf32>
    %24 = arith.truncf %23 : vector<16x1024xf32> to vector<16x1024xbf16>
    %c0_10 = arith.constant 0 : index
    %c0_11 = arith.constant 0 : index
    %25 = vector.load %arg6[%c0_10, %c0_11] : memref<1024x784xbf16, #tpu.memory_space<vmem>>, vector<1024x784xbf16>
    %cst_12 = arith.constant dense<0.000000e+00> : vector<16x784xf32>
    %26 = tpu.matmul %24, %25, %cst_12 {dimension_numbers = #tpu.dot_dimension_numbers<[1], [0], [0], [1], [0, 0, 1, 1], [], []>} : vector<16x1024xbf16>, vector<1024x784xbf16>, vector<16x784xf32> -> vector<16x784xf32>
    %c0_13 = arith.constant 0 : index
    %c0_14 = arith.constant 0 : index
    %27 = vector.load %arg7[%c0_13, %c0_14] : memref<1x784xf32, #tpu.memory_space<vmem>>, vector<1x784xf32>
    %28 = vector.broadcast %27 : vector<1x784xf32> to vector<16x784xf32>
    %29 = arith.addf %26, %28 : vector<16x784xf32>
    %cst_15 = arith.constant 0.000000e+00 : f32
    %30 = vector.broadcast %cst_15 : f32 to vector<16x784xf32>
    %31 = arith.subf %30, %29 : vector<16x784xf32>
    %32 = math.exp %31 : vector<16x784xf32>
    %cst_16 = arith.constant 1.000000e+00 : f32
    %33 = vector.broadcast %cst_16 : f32 to vector<16x784xf32>
    %34 = arith.addf %33, %32 : vector<16x784xf32>
    %35 = tpu.reciprocal %34 {approx = true} : vector<16x784xf32> -> vector<16x784xf32>
    %c0_17 = arith.constant 0 : index
    %c0_18 = arith.constant 0 : index
    %36 = vector.load %arg8[%c0_17, %c0_18] : memref<16x784xf32, #tpu.memory_space<vmem>>, vector<16x784xf32>
    tpu.vector_store %arg8[%c0_17, %c0_18], %35 {strides = array<i32>} : memref<16x784xf32, #tpu.memory_space<vmem>>, vector<16x784xf32>,
    return
  }
  func.func @transform_0(%arg0: i32) -> (i32, i32) {
    %c0_i32 = arith.constant 0 : i32
    %c0_i32_0 = arith.constant 0 : i32
    return %arg0, %c0_i32 : i32, i32
  }
  func.func @transform_1(%arg0: i32) -> (i32, i32) {
    %c0_i32 = arith.constant 0 : i32
    %c0_i32_0 = arith.constant 0 : i32
    %c0_i32_1 = arith.constant 0 : i32
    return %c0_i32, %c0_i32_0 : i32, i32
  }
  func.func @transform_2(%arg0: i32) -> (i32, i32) {
    %c0_i32 = arith.constant 0 : i32
    %c0_i32_0 = arith.constant 0 : i32
    %c0_i32_1 = arith.constant 0 : i32
    return %c0_i32, %c0_i32_0 : i32, i32
  }
  func.func @transform_3(%arg0: i32) -> (i32, i32) {
    %c0_i32 = arith.constant 0 : i32
    %c0_i32_0 = arith.constant 0 : i32
    %c0_i32_1 = arith.constant 0 : i32
    return %c0_i32, %c0_i32_0 : i32, i32
  }
  func.func @transform_4(%arg0: i32) -> (i32, i32) {
    %c0_i32 = arith.constant 0 : i32
    %c0_i32_0 = arith.constant 0 : i32
    %c0_i32_1 = arith.constant 0 : i32
    return %c0_i32, %c0_i32_0 : i32, i32
  }
  func.func @transform_5(%arg0: i32) -> (i32, i32) {
    %c0_i32 = arith.constant 0 : i32
    %c0_i32_0 = arith.constant 0 : i32
    %c0_i32_1 = arith.constant 0 : i32
    return %c0_i32, %c0_i32_0 : i32, i32
  }
  func.func @transform_6(%arg0: i32) -> (i32, i32) {
    %c0_i32 = arith.constant 0 : i32
    %c0_i32_0 = arith.constant 0 : i32
    %c0_i32_1 = arith.constant 0 : i32
    return %c0_i32, %c0_i32_0 : i32, i32
  }
  func.func @transform_7(%arg0: i32) -> (i32, i32) {
    %c0_i32 = arith.constant 0 : i32
    %c0_i32_0 = arith.constant 0 : i32
    return %arg0, %c0_i32 : i32, i32
  }
}

</mosaic_0001>

<llo_original>
// kernel: pnet_forward.1
$region0: #{pnet_forward.1}
  #allocation0 [shape = 'u32[]', space=smem, size = 0x4, offset = 0x4, fixed_abs, tag = 'smem constant byte address 0x4 - core index']
  #allocation1 [shape = 'u32[144,128]{1,0:T(1,128)}', space=vmem, size = 0x12000, scoped, tag = 'internal scratch']
  %s0 = inlined_call_operand.vmem [shape: f32[16,8], index: 0, kind: input, shape index: {}]
  %s1 = inlined_call_operand.vmem [shape: f32[8,1024], index: 1, kind: input, shape index: {}]
  %s2 = inlined_call_operand.vmem [shape: f32[1,1024], index: 2, kind: input, shape index: {}]
  %s3 = inlined_call_operand.vmem [shape: bf16[1024,1024], index: 3, kind: input, shape index: {}]
  %s4 = inlined_call_operand.vmem [shape: f32[1,1024], index: 4, kind: input, shape index: {}]
  %s5 = inlined_call_operand.vmem [shape: bf16[1024,784], index: 5, kind: input, shape index: {}]
  %s6 = inlined_call_operand.vmem [shape: f32[1,784], index: 6, kind: input, shape index: {}]
  %s7 = inlined_call_operand.hbm [shape: f32[16,784], index: 7, kind: output, shape index: {}]
  %s8 = sld [smem:[#allocation0]]
  $region38: #{pnet_forward.1} parent=0
    _
  %s10 = ssub.s32 1, %s8
  %s11 = scalar_select 0, %s10, %s8
  $region1: #{pnet_forward.1} parent=0
    #allocation2 [shape = 'u8[57344]{0}', space=vmem, size = 0xe000, scoped, tag = 'output window, operand 0, single buffered']
    #allocation3 [shape = 's32[1]{0}', space=sflag, size = 0x4, scoped, tag = 'scoped memory for pnet_forward.1']
    %12 = vsyncpa [#allocation3], 0
    // Predicated region
    $region2: #{pnet_forward.1} parent=1 // pred_check
      _
    $region3: #{pnet_forward.1} parent=1 // pred_check_branch
      %14 = sbr.rel (0) target = $region5
    $region4: #{pnet_forward.1} parent=1 // pred_region
      _
    $region5: #{pnet_forward.1} parent=1 // pred_fallthru
      _
    // Predicated region
    $region6: #{pnet_forward.1} parent=1 // pred_check
      _
    $region7: #{pnet_forward.1} parent=1 // pred_check_branch
      %16 = sbr.rel (0) target = $region9
    $region8: #{pnet_forward.1} parent=1 // pred_region
      _
    $region9: #{pnet_forward.1} parent=1 // pred_fallthru
      _
    // Predicated region
    $region10: #{pnet_forward.1} parent=1 // pred_check
      _
    $region11: #{pnet_forward.1} parent=1 // pred_check_branch
      %18 = sbr.rel (0) target = $region13
    $region12: #{pnet_forward.1} parent=1 // pred_region
      _
    $region13: #{pnet_forward.1} parent=1 // pred_fallthru
      _
    // Predicated region
    $region14: #{pnet_forward.1} parent=1 // pred_check
      _
    $region15: #{pnet_forward.1} parent=1 // pred_check_branch
      %20 = sbr.rel (0) target = $region17
    $region16: #{pnet_forward.1} parent=1 // pred_region
      _
    $region17: #{pnet_forward.1} parent=1 // pred_fallthru
      _
    // Predicated region
    $region18: #{pnet_forward.1} parent=1 // pred_check
      _
    $region19: #{pnet_forward.1} parent=1 // pred_check_branch
      %22 = sbr.rel (0) target = $region21
    $region20: #{pnet_forward.1} parent=1 // pred_region
      _
    $region21: #{pnet_forward.1} parent=1 // pred_fallthru
      _
    // Predicated region
    $region22: #{pnet_forward.1} parent=1 // pred_check
      _
    $region23: #{pnet_forward.1} parent=1 // pred_check_branch
      %24 = sbr.rel (0) target = $region25
    $region24: #{pnet_forward.1} parent=1 // pred_region
      _
    $region25: #{pnet_forward.1} parent=1 // pred_fallthru
      _
    // Predicated region
    $region26: #{pnet_forward.1} parent=1 // pred_check
      _
    $region27: #{pnet_forward.1} parent=1 // pred_check_branch
      %26 = sbr.rel (0) target = $region29
    $region28: #{pnet_forward.1} parent=1 // pred_region
      _
    $region29: #{pnet_forward.1} parent=1 // pred_fallthru
      _
    %v28 = vld [vmem:[%s0] sm:$0xff]
    %v29 = vld [vmem:[%s0 + $0x8] sm:$0xff]
    %v30 = vld [vmem:[%s1] sm:$0xff]
    %v31 = vld [vmem:[%s1 + $0x8] sm:$0xff]
    %v32 = vld [vmem:[%s1 + $0x10] sm:$0xff]
    %v33 = vld [vmem:[%s1 + $0x18] sm:$0xff]
    %v34 = vld [vmem:[%s1 + $0x20] sm:$0xff]
    %v35 = vld [vmem:[%s1 + $0x28] sm:$0xff]
    %v36 = vld [vmem:[%s1 + $0x30] sm:$0xff]
    %v37 = vld [vmem:[%s1 + $0x38] sm:$0xff]
    %39 = vset.pattern.permute.xlu0 0
    %40 = vperm.xlu0 %39, %v28
    %v41 = vpop.permute.xlu0 %40
    %44 = vset.pattern.permute.xlu0 0
    %45 = vperm.xlu0 %44, %v29
    %v46 = vpop.permute.xlu0 %45
    %v48 = vlaneseq
    %v49 = vshrl.u32 %v48, 7
    %v50 = vsub.s32 0, %v49
    %v51 = vrot.slane %v30, %v50
    %v52 = vlaneseq
    %v53 = vshrl.u32 %v52, 7
    %v54 = vsub.s32 0, %v53
    %v55 = vrot.slane %v31, %v54
    %v56 = vlaneseq
    %v57 = vshrl.u32 %v56, 7
    %v58 = vsub.s32 0, %v57
    %v59 = vrot.slane %v32, %v58
    %v60 = vlaneseq
    %v61 = vshrl.u32 %v60, 7
    %v62 = vsub.s32 0, %v61
    %v63 = vrot.slane %v33, %v62
    %v64 = vlaneseq
    %v65 = vshrl.u32 %v64, 7
    %v66 = vsub.s32 0, %v65
    %v67 = vrot.slane %v34, %v66
    %v68 = vlaneseq
    %v69 = vshrl.u32 %v68, 7
    %v70 = vsub.s32 0, %v69
    %v71 = vrot.slane %v35, %v70
    %v72 = vlaneseq
    %v73 = vshrl.u32 %v72, 7
    %v74 = vsub.s32 0, %v73
    %v75 = vrot.slane %v36, %v74
    %v76 = vlaneseq
    %v77 = vshrl.u32 %v76, 7
    %v78 = vsub.s32 0, %v77
    %v79 = vrot.slane %v37, %v78
    %v80 = vmul.f32 %v41, %v51
    %v81 = vmul.f32 %v41, %v55
    %v82 = vmul.f32 %v41, %v59
    %v83 = vmul.f32 %v41, %v63
    %v84 = vmul.f32 %v41, %v67
    %v85 = vmul.f32 %v41, %v71
    %v86 = vmul.f32 %v41, %v75
    %v87 = vmul.f32 %v41, %v79
    %v88 = vmul.f32 %v46, %v51
    %v89 = vmul.f32 %v46, %v55
    %v90 = vmul.f32 %v46, %v59
    %v91 = vmul.f32 %v46, %v63
    %v92 = vmul.f32 %v46, %v67
    %v93 = vmul.f32 %v46, %v71
    %v94 = vmul.f32 %v46, %v75
    %v95 = vmul.f32 %v46, %v79
    %96 = vset.pattern.permute.xlu0 1
    %97 = vperm.xlu0 %96, %v28
    %v98 = vpop.permute.xlu0 %97
    %100 = vset.pattern.permute.xlu0 1
    %101 = vperm.xlu0 %100, %v29
    %v102 = vpop.permute.xlu0 %101
    %v104 = vlaneseq
    %v105 = vshrl.u32 %v104, 7
    %v106 = vsub.s32 1, %v105
    %v107 = vrot.slane %v30, %v106
    %v108 = vlaneseq
    %v109 = vshrl.u32 %v108, 7
    %v110 = vsub.s32 1, %v109
    %v111 = vrot.slane %v31, %v110
    %v112 = vlaneseq
    %v113 = vshrl.u32 %v112, 7
    %v114 = vsub.s32 1, %v113
    %v115 = vrot.slane %v32, %v114
    %v116 = vlaneseq
    %v117 = vshrl.u32 %v116, 7
    %v118 = vsub.s32 1, %v117
    %v119 = vrot.slane %v33, %v118
    %v120 = vlaneseq
    %v121 = vshrl.u32 %v120, 7
    %v122 = vsub.s32 1, %v121
    %v123 = vrot.slane %v34, %v122
    %v124 = vlaneseq
    %v125 = vshrl.u32 %v124, 7
    %v126 = vsub.s32 1, %v125
    %v127 = vrot.slane %v35, %v126
    %v128 = vlaneseq
    %v129 = vshrl.u32 %v128, 7
    %v130 = vsub.s32 1, %v129
    %v131 = vrot.slane %v36, %v130
    %v132 = vlaneseq
    %v133 = vshrl.u32 %v132, 7
    %v134 = vsub.s32 1, %v133
    %v135 = vrot.slane %v37, %v134
    %v136 = vmul.f32 %v98, %v107
    %v137 = vmul.f32 %v98, %v111
    %v138 = vmul.f32 %v98, %v115
    %v139 = vmul.f32 %v98, %v119
    %v140 = vmul.f32 %v98, %v123
    %v141 = vmul.f32 %v98, %v127
    %v142 = vmul.f32 %v98, %v131
    %v143 = vmul.f32 %v98, %v135
    %v144 = vmul.f32 %v102, %v107
    %v145 = vmul.f32 %v102, %v111
    %v146 = vmul.f32 %v102, %v115
    %v147 = vmul.f32 %v102, %v119
    %v148 = vmul.f32 %v102, %v123
    %v149 = vmul.f32 %v102, %v127
    %v150 = vmul.f32 %v102, %v131
    %v151 = vmul.f32 %v102, %v135
    %v152 = vadd.f32 %v80, %v136
    %v153 = vadd.f32 %v81, %v137
    %v154 = vadd.f32 %v82, %v138
    %v155 = vadd.f32 %v83, %v139
    %v156 = vadd.f32 %v84, %v140
    %v157 = vadd.f32 %v85, %v141
    %v158 = vadd.f32 %v86, %v142
    %v159 = vadd.f32 %v87, %v143
    %v160 = vadd.f32 %v88, %v144
    %v161 = vadd.f32 %v89, %v145
    %v162 = vadd.f32 %v90, %v146
    %v163 = vadd.f32 %v91, %v147
    %v164 = vadd.f32 %v92, %v148
    %v165 = vadd.f32 %v93, %v149
    %v166 = vadd.f32 %v94, %v150
    %v167 = vadd.f32 %v95, %v151
    %v168 = vld [vmem:[%s2] sm:$0xff]
    %v170 = vlaneseq
    %v171 = vshrl.u32 %v170, 7
    %v172 = vsub.s32 0, %v171
    %v173 = vrot.slane %v168, %v172
    %v174 = vlaneseq
    %v175 = vshrl.u32 %v174, 7
    %v176 = vsub.s32 1, %v175
    %v177 = vrot.slane %v168, %v176
    %v178 = vlaneseq
    %v179 = vshrl.u32 %v178, 7
    %v180 = vsub.s32 2, %v179
    %v181 = vrot.slane %v168, %v180
    %v182 = vlaneseq
    %v183 = vshrl.u32 %v182, 7
    %v184 = vsub.s32 3, %v183
    %v185 = vrot.slane %v168, %v184
    %v186 = vlaneseq
    %v187 = vshrl.u32 %v186, 7
    %v188 = vsub.s32 4, %v187
    %v189 = vrot.slane %v168, %v188
    %v190 = vlaneseq
    %v191 = vshrl.u32 %v190, 7
    %v192 = vsub.s32 5, %v191
    %v193 = vrot.slane %v168, %v192
    %v194 = vlaneseq
    %v195 = vshrl.u32 %v194, 7
    %v196 = vsub.s32 6, %v195
    %v197 = vrot.slane %v168, %v196
    %v198 = vlaneseq
    %v199 = vshrl.u32 %v198, 7
    %v200 = vsub.s32 7, %v199
    %v201 = vrot.slane %v168, %v200
    %v210 = vadd.f32 %v152, %v173
    %v211 = vadd.f32 %v153, %v177
    %v212 = vadd.f32 %v154, %v181
    %v213 = vadd.f32 %v155, %v185
    %v214 = vadd.f32 %v156, %v189
    %v215 = vadd.f32 %v157, %v193
    %v216 = vadd.f32 %v158, %v197
    %v217 = vadd.f32 %v159, %v201
    %v218 = vadd.f32 %v160, %v173
    %v219 = vadd.f32 %v161, %v177
    %v220 = vadd.f32 %v162, %v181
    %v221 = vadd.f32 %v163, %v185
    %v222 = vadd.f32 %v164, %v189
    %v223 = vadd.f32 %v165, %v193
    %v224 = vadd.f32 %v166, %v197
    %v225 = vadd.f32 %v167, %v201
    %v226 = vmax.f32 %v210, 0.0
    %v227 = vmax.f32 %v211, 0.0
    %v228 = vmax.f32 %v212, 0.0
    %v229 = vmax.f32 %v213, 0.0
    %v230 = vmax.f32 %v214, 0.0
    %v231 = vmax.f32 %v215, 0.0
    %v232 = vmax.f32 %v216, 0.0
    %v233 = vmax.f32 %v217, 0.0
    %v234 = vmax.f32 %v218, 0.0
    %v235 = vmax.f32 %v219, 0.0
    %v236 = vmax.f32 %v220, 0.0
    %v237 = vmax.f32 %v221, 0.0
    %v238 = vmax.f32 %v222, 0.0
    %v239 = vmax.f32 %v223, 0.0
    %v240 = vmax.f32 %v224, 0.0
    %v241 = vmax.f32 %v225, 0.0
    %v242 = vpack.c.bf16 %v234, %v226
    %v243 = vpack.c.bf16 %v235, %v227
    %v244 = vpack.c.bf16 %v236, %v228
    %v245 = vpack.c.bf16 %v237, %v229
    %v246 = vpack.c.bf16 %v238, %v230
    %v247 = vpack.c.bf16 %v239, %v231
    %v248 = vpack.c.bf16 %v240, %v232
    %v249 = vpack.c.bf16 %v241, %v233
    %v250 = vld [vmem:[%s3] sm:$0xff]
    %v251 = vld [vmem:[%s3 + $0x8] sm:$0xff]
    %v252 = vld [vmem:[%s3 + $0x10] sm:$0xff]
    %v253 = vld [vmem:[%s3 + $0x18] sm:$0xff]
    %v254 = vld [vmem:[%s3 + $0x20] sm:$0xff]
    %v255 = vld [vmem:[%s3 + $0x28] sm:$0xff]
    %v256 = vld [vmem:[%s3 + $0x30] sm:$0xff]
    %v257 = vld [vmem:[%s3 + $0x38] sm:$0xff]
    %v258 = vld [vmem:[%s3 + $0x40] sm:$0xff]
    %v259 = vld [vmem:[%s3 + $0x48] sm:$0xff]
    %v260 = vld [vmem:[%s3 + $0x50] sm:$0xff]
    %v261 = vld [vmem:[%s3 + $0x58] sm:$0xff]
    %v262 = vld [vmem:[%s3 + $0x60] sm:$0xff]
    %v263 = vld [vmem:[%s3 + $0x68] sm:$0xff]
    %v264 = vld [vmem:[%s3 + $0x70] sm:$0xff]
    %v265 = vld [vmem:[%s3 + $0x78] sm:$0xff]
    %v266 = vld [vmem:[%s3 + $0x80] sm:$0xff]
    %v267 = vld [vmem:[%s3 + $0x88] sm:$0xff]
    %v268 = vld [vmem:[%s3 + $0x90] sm:$0xff]
    %v269 = vld [vmem:[%s3 + $0x98] sm:$0xff]
    %v270 = vld [vmem:[%s3 + $0xa0] sm:$0xff]
    %v271 = vld [vmem:[%s3 + $0xa8] sm:$0xff]
    %v272 = vld [vmem:[%s3 + $0xb0] sm:$0xff]
    %v273 = vld [vmem:[%s3 + $0xb8] sm:$0xff]
    %v274 = vld [vmem:[%s3 + $0xc0] sm:$0xff]
    %v275 = vld [vmem:[%s3 + $0xc8] sm:$0xff]
    %v276 = vld [vmem:[%s3 + $0xd0] sm:$0xff]
    %v277 = vld [vmem:[%s3 + $0xd8] sm:$0xff]
    %v278 = vld [vmem:[%s3 + $0xe0] sm:$0xff]
    %v279 = vld [vmem:[%s3 + $0xe8] sm:$0xff]
    %v280 = vld [vmem:[%s3 + $0xf0] sm:$0xff]
    %v281 = vld [vmem:[%s3 + $0xf8] sm:$0xff]
    %v282 = vld [vmem:[%s3 + $0x100] sm:$0xff]
    %v283 = vld [vmem:[%s3 + $0x108] sm:$0xff]
    %v284 = vld [vmem:[%s3 + $0x110] sm:$0xff]
    %v285 = vld [vmem:[%s3 + $0x118] sm:$0xff]
    %v286 = vld [vmem:[%s3 + $0x120] sm:$0xff]
    %v287 = vld [vmem:[%s3 + $0x128] sm:$0xff]
    %v288 = vld [vmem:[%s3 + $0x130] sm:$0xff]
    %v289 = vld [vmem:[%s3 + $0x138] sm:$0xff]
    %v290 = vld [vmem:[%s3 + $0x140] sm:$0xff]
    %v291 = vld [vmem:[%s3 + $0x148] sm:$0xff]
    %v292 = vld [vmem:[%s3 + $0x150] sm:$0xff]
    %v293 = vld [vmem:[%s3 + $0x158] sm:$0xff]
    %v294 = vld [vmem:[%s3 + $0x160] sm:$0xff]
    %v295 = vld [vmem:[%s3 + $0x168] sm:$0xff]
    %v296 = vld [vmem:[%s3 + $0x170] sm:$0xff]
    %v297 = vld [vmem:[%s3 + $0x178] sm:$0xff]
    %v298 = vld [vmem:[%s3 + $0x180] sm:$0xff]
    %v299 = vld [vmem:[%s3 + $0x188] sm:$0xff]
    %v300 = vld [vmem:[%s3 + $0x190] sm:$0xff]
    %v301 = vld [vmem:[%s3 + $0x198] sm:$0xff]
    %v302 = vld [vmem:[%s3 + $0x1a0] sm:$0xff]
    %v303 = vld [vmem:[%s3 + $0x1a8] sm:$0xff]
    %v304 = vld [vmem:[%s3 + $0x1b0] sm:$0xff]
    %v305 = vld [vmem:[%s3 + $0x1b8] sm:$0xff]
    %v306 = vld [vmem:[%s3 + $0x1c0] sm:$0xff]
    %v307 = vld [vmem:[%s3 + $0x1c8] sm:$0xff]
    %v308 = vld [vmem:[%s3 + $0x1d0] sm:$0xff]
    %v309 = vld [vmem:[%s3 + $0x1d8] sm:$0xff]
    %v310 = vld [vmem:[%s3 + $0x1e0] sm:$0xff]
    %v311 = vld [vmem:[%s3 + $0x1e8] sm:$0xff]
    %v312 = vld [vmem:[%s3 + $0x1f0] sm:$0xff]
    %v313 = vld [vmem:[%s3 + $0x1f8] sm:$0xff]
    %v314 = vld [vmem:[%s3 + $0x200] sm:$0xff]
    %v315 = vld [vmem:[%s3 + $0x208] sm:$0xff]
    %v316 = vld [vmem:[%s3 + $0x210] sm:$0xff]
    %v317 = vld [vmem:[%s3 + $0x218] sm:$0xff]
    %v318 = vld [vmem:[%s3 + $0x220] sm:$0xff]
    %v319 = vld [vmem:[%s3 + $0x228] sm:$0xff]
    %v320 = vld [vmem:[%s3 + $0x230] sm:$0xff]
    %v321 = vld [vmem:[%s3 + $0x238] sm:$0xff]
    %v322 = vld [vmem:[%s3 + $0x240] sm:$0xff]
    %v323 = vld [vmem:[%s3 + $0x248] sm:$0xff]
    %v324 = vld [vmem:[%s3 + $0x250] sm:$0xff]
    %v325 = vld [vmem:[%s3 + $0x258] sm:$0xff]
    %v326 = vld [vmem:[%s3 + $0x260] sm:$0xff]
    %v327 = vld [vmem:[%s3 + $0x268] sm:$0xff]
    %v328 = vld [vmem:[%s3 + $0x270] sm:$0xff]
    %v329 = vld [vmem:[%s3 + $0x278] sm:$0xff]
    %v330 = vld [vmem:[%s3 + $0x280] sm:$0xff]
    %v331 = vld [vmem:[%s3 + $0x288] sm:$0xff]
    %v332 = vld [vmem:[%s3 + $0x290] sm:$0xff]
    %v333 = vld [vmem:[%s3 + $0x298] sm:$0xff]
    %v334 = vld [vmem:[%s3 + $0x2a0] sm:$0xff]
    %v335 = vld [vmem:[%s3 + $0x2a8] sm:$0xff]
    %v336 = vld [vmem:[%s3 + $0x2b0] sm:$0xff]
    %v337 = vld [vmem:[%s3 + $0x2b8] sm:$0xff]
    %v338 = vld [vmem:[%s3 + $0x2c0] sm:$0xff]
    %v339 = vld [vmem:[%s3 + $0x2c8] sm:$0xff]
    %v340 = vld [vmem:[%s3 + $0x2d0] sm:$0xff]
    %v341 = vld [vmem:[%s3 + $0x2d8] sm:$0xff]
    %v342 = vld [vmem:[%s3 + $0x2e0] sm:$0xff]
    %v343 = vld [vmem:[%s3 + $0x2e8] sm:$0xff]
    %v344 = vld [vmem:[%s3 + $0x2f0] sm:$0xff]
    %v345 = vld [vmem:[%s3 + $0x2f8] sm:$0xff]
    %v346 = vld [vmem:[%s3 + $0x300] sm:$0xff]
    %v347 = vld [vmem:[%s3 + $0x308] sm:$0xff]
    %v348 = vld [vmem:[%s3 + $0x310] sm:$0xff]
    %v349 = vld [vmem:[%s3 + $0x318] sm:$0xff]
    %v350 = vld [vmem:[%s3 + $0x320] sm:$0xff]
    %v351 = vld [vmem:[%s3 + $0x328] sm:$0xff]
    %v352 = vld [vmem:[%s3 + $0x330] sm:$0xff]
    %v353 = vld [vmem:[%s3 + $0x338] sm:$0xff]
    %v354 = vld [vmem:[%s3 + $0x340] sm:$0xff]
    %v355 = vld [vmem:[%s3 + $0x348] sm:$0xff]
    %v356 = vld [vmem:[%s3 + $0x350] sm:$0xff]
    %v357 = vld [vmem:[%s3 + $0x358] sm:$0xff]
    %v358 = vld [vmem:[%s3 + $0x360] sm:$0xff]
    %v359 = vld [vmem:[%s3 + $0x368] sm:$0xff]
    %v360 = vld [vmem:[%s3 + $0x370] sm:$0xff]
    %v361 = vld [vmem:[%s3 + $0x378] sm:$0xff]
    %v362 = vld [vmem:[%s3 + $0x380] sm:$0xff]
    %v363 = vld [vmem:[%s3 + $0x388] sm:$0xff]
    %v364 = vld [vmem:[%s3 + $0x390] sm:$0xff]
    %v365 = vld [vmem:[%s3 + $0x398] sm:$0xff]
    %v366 = vld [vmem:[%s3 + $0x3a0] sm:$0xff]
    %v367 = vld [vmem:[%s3 + $0x3a8] sm:$0xff]
    %v368 = vld [vmem:[%s3 + $0x3b0] sm:$0xff]
    %v369 = vld [vmem:[%s3 + $0x3b8] sm:$0xff]
    %v370 = vld [vmem:[%s3 + $0x3c0] sm:$0xff]
    %v371 = vld [vmem:[%s3 + $0x3c8] sm:$0xff]
    %v372 = vld [vmem:[%s3 + $0x3d0] sm:$0xff]
    %v373 = vld [vmem:[%s3 + $0x3d8] sm:$0xff]
    %v374 = vld [vmem:[%s3 + $0x3e0] sm:$0xff]
    %v375 = vld [vmem:[%s3 + $0x3e8] sm:$0xff]
    %v376 = vld [vmem:[%s3 + $0x3f0] sm:$0xff]
    %v377 = vld [vmem:[%s3 + $0x3f8] sm:$0xff]
    %v378 = vld [vmem:[%s3 + $0x400] sm:$0xff]
    %v379 = vld [vmem:[%s3 + $0x408] sm:$0xff]
    %v380 = vld [vmem:[%s3 + $0x410] sm:$0xff]
    %v381 = vld [vmem:[%s3 + $0x418] sm:$0xff]
    %v382 = vld [vmem:[%s3 + $0x420] sm:$0xff]
    %v383 = vld [vmem:[%s3 + $0x428] sm:$0xff]
    %v384 = vld [vmem:[%s3 + $0x430] sm:$0xff]
    %v385 = vld [vmem:[%s3 + $0x438] sm:$0xff]
    %v386 = vld [vmem:[%s3 + $0x440] sm:$0xff]
    %v387 = vld [vmem:[%s3 + $0x448] sm:$0xff]
    %v388 = vld [vmem:[%s3 + $0x450] sm:$0xff]
    %v389 = vld [vmem:[%s3 + $0x458] sm:$0xff]
    %v390 = vld [vmem:[%s3 + $0x460] sm:$0xff]
    %v391 = vld [vmem:[%s3 + $0x468] sm:$0xff]
    %v392 = vld [vmem:[%s3 + $0x470] sm:$0xff]
    %v393 = vld [vmem:[%s3 + $0x478] sm:$0xff]
    %v394 = vld [vmem:[%s3 + $0x480] sm:$0xff]
    %v395 = vld [vmem:[%s3 + $0x488] sm:$0xff]
    %v396 = vld [vmem:[%s3 + $0x490] sm:$0xff]
    %v397 = vld [vmem:[%s3 + $0x498] sm:$0xff]
    %v398 = vld [vmem:[%s3 + $0x4a0] sm:$0xff]
    %v399 = vld [vmem:[%s3 + $0x4a8] sm:$0xff]
    %v400 = vld [vmem:[%s3 + $0x4b0] sm:$0xff]
    %v401 = vld [vmem:[%s3 + $0x4b8] sm:$0xff]
    %v402 = vld [vmem:[%s3 + $0x4c0] sm:$0xff]
    %v403 = vld [vmem:[%s3 + $0x4c8] sm:$0xff]
    %v404 = vld [vmem:[%s3 + $0x4d0] sm:$0xff]
    %v405 = vld [vmem:[%s3 + $0x4d8] sm:$0xff]
    %v406 = vld [vmem:[%s3 + $0x4e0] sm:$0xff]
    %v407 = vld [vmem:[%s3 + $0x4e8] sm:$0xff]
    %v408 = vld [vmem:[%s3 + $0x4f0] sm:$0xff]
    %v409 = vld [vmem:[%s3 + $0x4f8] sm:$0xff]
    %v410 = vld [vmem:[%s3 + $0x500] sm:$0xff]
    %v411 = vld [vmem:[%s3 + $0x508] sm:$0xff]
    %v412 = vld [vmem:[%s3 + $0x510] sm:$0xff]
    %v413 = vld [vmem:[%s3 + $0x518] sm:$0xff]
    %v414 = vld [vmem:[%s3 + $0x520] sm:$0xff]
    %v415 = vld [vmem:[%s3 + $0x528] sm:$0xff]
    %v416 = vld [vmem:[%s3 + $0x530] sm:$0xff]
    %v417 = vld [vmem:[%s3 + $0x538] sm:$0xff]
    %v418 = vld [vmem:[%s3 + $0x540] sm:$0xff]
    %v419 = vld [vmem:[%s3 + $0x548] sm:$0xff]
    %v420 = vld [vmem:[%s3 + $0x550] sm:$0xff]
    %v421 = vld [vmem:[%s3 + $0x558] sm:$0xff]
    %v422 = vld [vmem:[%s3 + $0x560] sm:$0xff]
    %v423 = vld [vmem:[%s3 + $0x568] sm:$0xff]
    %v424 = vld [vmem:[%s3 + $0x570] sm:$0xff]
    %v425 = vld [vmem:[%s3 + $0x578] sm:$0xff]
    %v426 = vld [vmem:[%s3 + $0x580] sm:$0xff]
    %v427 = vld [vmem:[%s3 + $0x588] sm:$0xff]
    %v428 = vld [vmem:[%s3 + $0x590] sm:$0xff]
    %v429 = vld [vmem:[%s3 + $0x598] sm:$0xff]
    %v430 = vld [vmem:[%s3 + $0x5a0] sm:$0xff]
    %v431 = vld [vmem:[%s3 + $0x5a8] sm:$0xff]
    %v432 = vld [vmem:[%s3 + $0x5b0] sm:$0xff]
    %v433 = vld [vmem:[%s3 + $0x5b8] sm:$0xff]
    %v434 = vld [vmem:[%s3 + $0x5c0] sm:$0xff]
    %v435 = vld [vmem:[%s3 + $0x5c8] sm:$0xff]
    %v436 = vld [vmem:[%s3 + $0x5d0] sm:$0xff]
    %v437 = vld [vmem:[%s3 + $0x5d8] sm:$0xff]
    %v438 = vld [vmem:[%s3 + $0x5e0] sm:$0xff]
    %v439 = vld [vmem:[%s3 + $0x5e8] sm:$0xff]
    %v440 = vld [vmem:[%s3 + $0x5f0] sm:$0xff]
    %v441 = vld [vmem:[%s3 + $0x5f8] sm:$0xff]
    %v442 = vld [vmem:[%s3 + $0x600] sm:$0xff]
    %v443 = vld [vmem:[%s3 + $0x608] sm:$0xff]
    %v444 = vld [vmem:[%s3 + $0x610] sm:$0xff]
    %v445 = vld [vmem:[%s3 + $0x618] sm:$0xff]
    %v446 = vld [vmem:[%s3 + $0x620] sm:$0xff]
    %v447 = vld [vmem:[%s3 + $0x628] sm:$0xff]
    %v448 = vld [vmem:[%s3 + $0x630] sm:$0xff]
    %v449 = vld [vmem:[%s3 + $0x638] sm:$0xff]
    %v450 = vld [vmem:[%s3 + $0x640] sm:$0xff]
    %v451 = vld [vmem:[%s3 + $0x648] sm:$0xff]
    %v452 = vld [vmem:[%s3 + $0x650] sm:$0xff]
    %v453 = vld [vmem:[%s3 + $0x658] sm:$0xff]
    %v454 = vld [vmem:[%s3 + $0x660] sm:$0xff]
    %v455 = vld [vmem:[%s3 + $0x668] sm:$0xff]
    %v456 = vld [vmem:[%s3 + $0x670] sm:$0xff]
    %v457 = vld [vmem:[%s3 + $0x678] sm:$0xff]
    %v458 = vld [vmem:[%s3 + $0x680] sm:$0xff]
    %v459 = vld [vmem:[%s3 + $0x688] sm:$0xff]
    %v460 = vld [vmem:[%s3 + $0x690] sm:$0xff]
    %v461 = vld [vmem:[%s3 + $0x698] sm:$0xff]
    %v462 = vld [vmem:[%s3 + $0x6a0] sm:$0xff]
    %v463 = vld [vmem:[%s3 + $0x6a8] sm:$0xff]
    %v464 = vld [vmem:[%s3 + $0x6b0] sm:$0xff]
    %v465 = vld [vmem:[%s3 + $0x6b8] sm:$0xff]
    %v466 = vld [vmem:[%s3 + $0x6c0] sm:$0xff]
    %v467 = vld [vmem:[%s3 + $0x6c8] sm:$0xff]
    %v468 = vld [vmem:[%s3 + $0x6d0] sm:$0xff]
    %v469 = vld [vmem:[%s3 + $0x6d8] sm:$0xff]
    %v470 = vld [vmem:[%s3 + $0x6e0] sm:$0xff]
    %v471 = vld [vmem:[%s3 + $0x6e8] sm:$0xff]
    %v472 = vld [vmem:[%s3 + $0x6f0] sm:$0xff]
    %v473 = vld [vmem:[%s3 + $0x6f8] sm:$0xff]
    %v474 = vld [vmem:[%s3 + $0x700] sm:$0xff]
    %v475 = vld [vmem:[%s3 + $0x708] sm:$0xff]
    %v476 = vld [vmem:[%s3 + $0x710] sm:$0xff]
    %v477 = vld [vmem:[%s3 + $0x718] sm:$0xff]
    %v478 = vld [vmem:[%s3 + $0x720] sm:$0xff]
    %v479 = vld [vmem:[%s3 + $0x728] sm:$0xff]
    %v480 = vld [vmem:[%s3 + $0x730] sm:$0xff]
    %v481 = vld [vmem:[%s3 + $0x738] sm:$0xff]
    %v482 = vld [vmem:[%s3 + $0x740] sm:$0xff]
    %v483 = vld [vmem:[%s3 + $0x748] sm:$0xff]
    %v484 = vld [vmem:[%s3 + $0x750] sm:$0xff]
    %v485 = vld [vmem:[%s3 + $0x758] sm:$0xff]
    %v486 = vld [vmem:[%s3 + $0x760] sm:$0xff]
    %v487 = vld [vmem:[%s3 + $0x768] sm:$0xff]
    %v488 = vld [vmem:[%s3 + $0x770] sm:$0xff]
    %v489 = vld [vmem:[%s3 + $0x778] sm:$0xff]
    %v490 = vld [vmem:[%s3 + $0x780] sm:$0xff]
    %v491 = vld [vmem:[%s3 + $0x788] sm:$0xff]
    %v492 = vld [vmem:[%s3 + $0x790] sm:$0xff]
    %v493 = vld [vmem:[%s3 + $0x798] sm:$0xff]
    %v494 = vld [vmem:[%s3 + $0x7a0] sm:$0xff]
    %v495 = vld [vmem:[%s3 + $0x7a8] sm:$0xff]
    %v496 = vld [vmem:[%s3 + $0x7b0] sm:$0xff]
    %v497 = vld [vmem:[%s3 + $0x7b8] sm:$0xff]
    %v498 = vld [vmem:[%s3 + $0x7c0] sm:$0xff]
    %v499 = vld [vmem:[%s3 + $0x7c8] sm:$0xff]
    %v500 = vld [vmem:[%s3 + $0x7d0] sm:$0xff]
    %v501 = vld [vmem:[%s3 + $0x7d8] sm:$0xff]
    %v502 = vld [vmem:[%s3 + $0x7e0] sm:$0xff]
    %v503 = vld [vmem:[%s3 + $0x7e8] sm:$0xff]
    %v504 = vld [vmem:[%s3 + $0x7f0] sm:$0xff]
    %v505 = vld [vmem:[%s3 + $0x7f8] sm:$0xff]
    %v506 = vld [vmem:[%s3 + $0x800] sm:$0xff]
    %v507 = vld [vmem:[%s3 + $0x808] sm:$0xff]
    %v508 = vld [vmem:[%s3 + $0x810] sm:$0xff]
    %v509 = vld [vmem:[%s3 + $0x818] sm:$0xff]
    %v510 = vld [vmem:[%s3 + $0x820] sm:$0xff]
    %v511 = vld [vmem:[%s3 + $0x828] sm:$0xff]
    %v512 = vld [vmem:[%s3 + $0x830] sm:$0xff]
    %v513 = vld [vmem:[%s3 + $0x838] sm:$0xff]
    %v514 = vld [vmem:[%s3 + $0x840] sm:$0xff]
    %v515 = vld [vmem:[%s3 + $0x848] sm:$0xff]
    %v516 = vld [vmem:[%s3 + $0x850] sm:$0xff]
    %v517 = vld [vmem:[%s3 + $0x858] sm:$0xff]
    %v518 = vld [vmem:[%s3 + $0x860] sm:$0xff]
    %v519 = vld [vmem:[%s3 + $0x868] sm:$0xff]
    %v520 = vld [vmem:[%s3 + $0x870] sm:$0xff]
    %v521 = vld [vmem:[%s3 + $0x878] sm:$0xff]
    %v522 = vld [vmem:[%s3 + $0x880] sm:$0xff]
    %v523 = vld [vmem:[%s3 + $0x888] sm:$0xff]
    %v524 = vld [vmem:[%s3 + $0x890] sm:$0xff]
    %v525 = vld [vmem:[%s3 + $0x898] sm:$0xff]
    %v526 = vld [vmem:[%s3 + $0x8a0] sm:$0xff]
    %v527 = vld [vmem:[%s3 + $0x8a8] sm:$0xff]
    %v528 = vld [vmem:[%s3 + $0x8b0] sm:$0xff]
    %v529 = vld [vmem:[%s3 + $0x8b8] sm:$0xff]
    %v530 = vld [vmem:[%s3 + $0x8c0] sm:$0xff]
    %v531 = vld [vmem:[%s3 + $0x8c8] sm:$0xff]
    %v532 = vld [vmem:[%s3 + $0x8d0] sm:$0xff]
    %v533 = vld [vmem:[%s3 + $0x8d8] sm:$0xff]
    %v534 = vld [vmem:[%s3 + $0x8e0] sm:$0xff]
    %v535 = vld [vmem:[%s3 + $0x8e8] sm:$0xff]
    %v536 = vld [vmem:[%s3 + $0x8f0] sm:$0xff]
    %v537 = vld [vmem:[%s3 + $0x8f8] sm:$0xff]
    %v538 = vld [vmem:[%s3 + $0x900] sm:$0xff]
    %v539 = vld [vmem:[%s3 + $0x908] sm:$0xff]
    %v540 = vld [vmem:[%s3 + $0x910] sm:$0xff]
    %v541 = vld [vmem:[%s3 + $0x918] sm:$0xff]
    %v542 = vld [vmem:[%s3 + $0x920] sm:$0xff]
    %v543 = vld [vmem:[%s3 + $0x928] sm:$0xff]
    %v544 = vld [vmem:[%s3 + $0x930] sm:$0xff]
    %v545 = vld [vmem:[%s3 + $0x938] sm:$0xff]
    %v546 = vld [vmem:[%s3 + $0x940] sm:$0xff]
    %v547 = vld [vmem:[%s3 + $0x948] sm:$0xff]
    %v548 = vld [vmem:[%s3 + $0x950] sm:$0xff]
    %v549 = vld [vmem:[%s3 + $0x958] sm:$0xff]
    %v550 = vld [vmem:[%s3 + $0x960] sm:$0xff]
    %v551 = vld [vmem:[%s3 + $0x968] sm:$0xff]
    %v552 = vld [vmem:[%s3 + $0x970] sm:$0xff]
    %v553 = vld [vmem:[%s3 + $0x978] sm:$0xff]
    %v554 = vld [vmem:[%s3 + $0x980] sm:$0xff]
    %v555 = vld [vmem:[%s3 + $0x988] sm:$0xff]
    %v556 = vld [vmem:[%s3 + $0x990] sm:$0xff]
    %v557 = vld [vmem:[%s3 + $0x998] sm:$0xff]
    %v558 = vld [vmem:[%s3 + $0x9a0] sm:$0xff]
    %v559 = vld [vmem:[%s3 + $0x9a8] sm:$0xff]
    %v560 = vld [vmem:[%s3 + $0x9b0] sm:$0xff]
    %v561 = vld [vmem:[%s3 + $0x9b8] sm:$0xff]
    %v562 = vld [vmem:[%s3 + $0x9c0] sm:$0xff]
    %v563 = vld [vmem:[%s3 + $0x9c8] sm:$0xff]
    %v564 = vld [vmem:[%s3 + $0x9d0] sm:$0xff]
    %v565 = vld [vmem:[%s3 + $0x9d8] sm:$0xff]
    %v566 = vld [vmem:[%s3 + $0x9e0] sm:$0xff]
    %v567 = vld [vmem:[%s3 + $0x9e8] sm:$0xff]
    %v568 = vld [vmem:[%s3 + $0x9f0] sm:$0xff]
    %v569 = vld [vmem:[%s3 + $0x9f8] sm:$0xff]
    %v570 = vld [vmem:[%s3 + $0xa00] sm:$0xff]
    %v571 = vld [vmem:[%s3 + $0xa08] sm:$0xff]
    %v572 = vld [vmem:[%s3 + $0xa10] sm:$0xff]
    %v573 = vld [vmem:[%s3 + $0xa18] sm:$0xff]
    %v574 = vld [vmem:[%s3 + $0xa20] sm:$0xff]
    %v575 = vld [vmem:[%s3 + $0xa28] sm:$0xff]
    %v576 = vld [vmem:[%s3 + $0xa30] sm:$0xff]
    %v577 = vld [vmem:[%s3 + $0xa38] sm:$0xff]
    %v578 = vld [vmem:[%s3 + $0xa40] sm:$0xff]
    %v579 = vld [vmem:[%s3 + $0xa48] sm:$0xff]
    %v580 = vld [vmem:[%s3 + $0xa50] sm:$0xff]
    %v581 = vld [vmem:[%s3 + $0xa58] sm:$0xff]
    %v582 = vld [vmem:[%s3 + $0xa60] sm:$0xff]
    %v583 = vld [vmem:[%s3 + $0xa68] sm:$0xff]
    %v584 = vld [vmem:[%s3 + $0xa70] sm:$0xff]
    %v585 = vld [vmem:[%s3 + $0xa78] sm:$0xff]
    %v586 = vld [vmem:[%s3 + $0xa80] sm:$0xff]
    %v587 = vld [vmem:[%s3 + $0xa88] sm:$0xff]
    %v588 = vld [vmem:[%s3 + $0xa90] sm:$0xff]
    %v589 = vld [vmem:[%s3 + $0xa98] sm:$0xff]
    %v590 = vld [vmem:[%s3 + $0xaa0] sm:$0xff]
    %v591 = vld [vmem:[%s3 + $0xaa8] sm:$0xff]
    %v592 = vld [vmem:[%s3 + $0xab0] sm:$0xff]
    %v593 = vld [vmem:[%s3 + $0xab8] sm:$0xff]
    %v594 = vld [vmem:[%s3 + $0xac0] sm:$0xff]
    %v595 = vld [vmem:[%s3 + $0xac8] sm:$0xff]
    %v596 = vld [vmem:[%s3 + $0xad0] sm:$0xff]
    %v597 = vld [vmem:[%s3 + $0xad8] sm:$0xff]
    %v598 = vld [vmem:[%s3 + $0xae0] sm:$0xff]
    %v599 = vld [vmem:[%s3 + $0xae8] sm:$0xff]
    %v600 = vld [vmem:[%s3 + $0xaf0] sm:$0xff]
    %v601 = vld [vmem:[%s3 + $0xaf8] sm:$0xff]
    %v602 = vld [vmem:[%s3 + $0xb00] sm:$0xff]
    %v603 = vld [vmem:[%s3 + $0xb08] sm:$0xff]
    %v604 = vld [vmem:[%s3 + $0xb10] sm:$0xff]
    %v605 = vld [vmem:[%s3 + $0xb18] sm:$0xff]
    %v606 = vld [vmem:[%s3 + $0xb20] sm:$0xff]
    %v607 = vld [vmem:[%s3 + $0xb28] sm:$0xff]
    %v608 = vld [vmem:[%s3 + $0xb30] sm:$0xff]
    %v609 = vld [vmem:[%s3 + $0xb38] sm:$0xff]
    %v610 = vld [vmem:[%s3 + $0xb40] sm:$0xff]
    %v611 = vld [vmem:[%s3 + $0xb48] sm:$0xff]
    %v612 = vld [vmem:[%s3 + $0xb50] sm:$0xff]
    %v613 = vld [vmem:[%s3 + $0xb58] sm:$0xff]
    %v614 = vld [vmem:[%s3 + $0xb60] sm:$0xff]
    %v615 = vld [vmem:[%s3 + $0xb68] sm:$0xff]
    %v616 = vld [vmem:[%s3 + $0xb70] sm:$0xff]
    %v617 = vld [vmem:[%s3 + $0xb78] sm:$0xff]
    %v618 = vld [vmem:[%s3 + $0xb80] sm:$0xff]
    %v619 = vld [vmem:[%s3 + $0xb88] sm:$0xff]
    %v620 = vld [vmem:[%s3 + $0xb90] sm:$0xff]
    %v621 = vld [vmem:[%s3 + $0xb98] sm:$0xff]
    %v622 = vld [vmem:[%s3 + $0xba0] sm:$0xff]
    %v623 = vld [vmem:[%s3 + $0xba8] sm:$0xff]
    %v624 = vld [vmem:[%s3 + $0xbb0] sm:$0xff]
    %v625 = vld [vmem:[%s3 + $0xbb8] sm:$0xff]
    %v626 = vld [vmem:[%s3 + $0xbc0] sm:$0xff]
    %v627 = vld [vmem:[%s3 + $0xbc8] sm:$0xff]
    %v628 = vld [vmem:[%s3 + $0xbd0] sm:$0xff]
    %v629 = vld [vmem:[%s3 + $0xbd8] sm:$0xff]
    %v630 = vld [vmem:[%s3 + $0xbe0] sm:$0xff]
    %v631 = vld [vmem:[%s3 + $0xbe8] sm:$0xff]
    %v632 = vld [vmem:[%s3 + $0xbf0] sm:$0xff]
    %v633 = vld [vmem:[%s3 + $0xbf8] sm:$0xff]
    %v634 = vld [vmem:[%s3 + $0xc00] sm:$0xff]
    %v635 = vld [vmem:[%s3 + $0xc08] sm:$0xff]
    %v636 = vld [vmem:[%s3 + $0xc10] sm:$0xff]
    %v637 = vld [vmem:[%s3 + $0xc18] sm:$0xff]
    %v638 = vld [vmem:[%s3 + $0xc20] sm:$0xff]
    %v639 = vld [vmem:[%s3 + $0xc28] sm:$0xff]
    %v640 = vld [vmem:[%s3 + $0xc30] sm:$0xff]
    %v641 = vld [vmem:[%s3 + $0xc38] sm:$0xff]
    %v642 = vld [vmem:[%s3 + $0xc40] sm:$0xff]
    %v643 = vld [vmem:[%s3 + $0xc48] sm:$0xff]
    %v644 = vld [vmem:[%s3 + $0xc50] sm:$0xff]
    %v645 = vld [vmem:[%s3 + $0xc58] sm:$0xff]
    %v646 = vld [vmem:[%s3 + $0xc60] sm:$0xff]
    %v647 = vld [vmem:[%s3 + $0xc68] sm:$0xff]
    %v648 = vld [vmem:[%s3 + $0xc70] sm:$0xff]
    %v649 = vld [vmem:[%s3 + $0xc78] sm:$0xff]
    %v650 = vld [vmem:[%s3 + $0xc80] sm:$0xff]
    %v651 = vld [vmem:[%s3 + $0xc88] sm:$0xff]
    %v652 = vld [vmem:[%s3 + $0xc90] sm:$0xff]
    %v653 = vld [vmem:[%s3 + $0xc98] sm:$0xff]
    %v654 = vld [vmem:[%s3 + $0xca0] sm:$0xff]
    %v655 = vld [vmem:[%s3 + $0xca8] sm:$0xff]
    %v656 = vld [vmem:[%s3 + $0xcb0] sm:$0xff]
    %v657 = vld [vmem:[%s3 + $0xcb8] sm:$0xff]
    %v658 = vld [vmem:[%s3 + $0xcc0] sm:$0xff]
    %v659 = vld [vmem:[%s3 + $0xcc8] sm:$0xff]
    %v660 = vld [vmem:[%s3 + $0xcd0] sm:$0xff]
    %v661 = vld [vmem:[%s3 + $0xcd8] sm:$0xff]
    %v662 = vld [vmem:[%s3 + $0xce0] sm:$0xff]
    %v663 = vld [vmem:[%s3 + $0xce8] sm:$0xff]
    %v664 = vld [vmem:[%s3 + $0xcf0] sm:$0xff]
    %v665 = vld [vmem:[%s3 + $0xcf8] sm:$0xff]
    %v666 = vld [vmem:[%s3 + $0xd00] sm:$0xff]
    %v667 = vld [vmem:[%s3 + $0xd08] sm:$0xff]
    %v668 = vld [vmem:[%s3 + $0xd10] sm:$0xff]
    %v669 = vld [vmem:[%s3 + $0xd18] sm:$0xff]
    %v670 = vld [vmem:[%s3 + $0xd20] sm:$0xff]
    %v671 = vld [vmem:[%s3 + $0xd28] sm:$0xff]
    %v672 = vld [vmem:[%s3 + $0xd30] sm:$0xff]
    %v673 = vld [vmem:[%s3 + $0xd38] sm:$0xff]
    %v674 = vld [vmem:[%s3 + $0xd40] sm:$0xff]
    %v675 = vld [vmem:[%s3 + $0xd48] sm:$0xff]
    %v676 = vld [vmem:[%s3 + $0xd50] sm:$0xff]
    %v677 = vld [vmem:[%s3 + $0xd58] sm:$0xff]
    %v678 = vld [vmem:[%s3 + $0xd60] sm:$0xff]
    %v679 = vld [vmem:[%s3 + $0xd68] sm:$0xff]
    %v680 = vld [vmem:[%s3 + $0xd70] sm:$0xff]
    %v681 = vld [vmem:[%s3 + $0xd78] sm:$0xff]
    %v682 = vld [vmem:[%s3 + $0xd80] sm:$0xff]
    %v683 = vld [vmem:[%s3 + $0xd88] sm:$0xff]
    %v684 = vld [vmem:[%s3 + $0xd90] sm:$0xff]
    %v685 = vld [vmem:[%s3 + $0xd98] sm:$0xff]
    %v686 = vld [vmem:[%s3 + $0xda0] sm:$0xff]
    %v687 = vld [vmem:[%s3 + $0xda8] sm:$0xff]
    %v688 = vld [vmem:[%s3 + $0xdb0] sm:$0xff]
    %v689 = vld [vmem:[%s3 + $0xdb8] sm:$0xff]
    %v690 = vld [vmem:[%s3 + $0xdc0] sm:$0xff]
    %v691 = vld [vmem:[%s3 + $0xdc8] sm:$0xff]
    %v692 = vld [vmem:[%s3 + $0xdd0] sm:$0xff]
    %v693 = vld [vmem:[%s3 + $0xdd8] sm:$0xff]
    %v694 = vld [vmem:[%s3 + $0xde0] sm:$0xff]
    %v695 = vld [vmem:[%s3 + $0xde8] sm:$0xff]
    %v696 = vld [vmem:[%s3 + $0xdf0] sm:$0xff]
    %v697 = vld [vmem:[%s3 + $0xdf8] sm:$0xff]
    %v698 = vld [vmem:[%s3 + $0xe00] sm:$0xff]
    %v699 = vld [vmem:[%s3 + $0xe08] sm:$0xff]
    %v700 = vld [vmem:[%s3 + $0xe10] sm:$0xff]
    %v701 = vld [vmem:[%s3 + $0xe18] sm:$0xff]
    %v702 = vld [vmem:[%s3 + $0xe20] sm:$0xff]
    %v703 = vld [vmem:[%s3 + $0xe28] sm:$0xff]
    %v704 = vld [vmem:[%s3 + $0xe30] sm:$0xff]
    %v705 = vld [vmem:[%s3 + $0xe38] sm:$0xff]
    %v706 = vld [vmem:[%s3 + $0xe40] sm:$0xff]
    %v707 = vld [vmem:[%s3 + $0xe48] sm:$0xff]
    %v708 = vld [vmem:[%s3 + $0xe50] sm:$0xff]
    %v709 = vld [vmem:[%s3 + $0xe58] sm:$0xff]
    %v710 = vld [vmem:[%s3 + $0xe60] sm:$0xff]
    %v711 = vld [vmem:[%s3 + $0xe68] sm:$0xff]
    %v712 = vld [vmem:[%s3 + $0xe70] sm:$0xff]
    %v713 = vld [vmem:[%s3 + $0xe78] sm:$0xff]
    %v714 = vld [vmem:[%s3 + $0xe80] sm:$0xff]
    %v715 = vld [vmem:[%s3 + $0xe88] sm:$0xff]
    %v716 = vld [vmem:[%s3 + $0xe90] sm:$0xff]
    %v717 = vld [vmem:[%s3 + $0xe98] sm:$0xff]
    %v718 = vld [vmem:[%s3 + $0xea0] sm:$0xff]
    %v719 = vld [vmem:[%s3 + $0xea8] sm:$0xff]
    %v720 = vld [vmem:[%s3 + $0xeb0] sm:$0xff]
    %v721 = vld [vmem:[%s3 + $0xeb8] sm:$0xff]
    %v722 = vld [vmem:[%s3 + $0xec0] sm:$0xff]
    %v723 = vld [vmem:[%s3 + $0xec8] sm:$0xff]
    %v724 = vld [vmem:[%s3 + $0xed0] sm:$0xff]
    %v725 = vld [vmem:[%s3 + $0xed8] sm:$0xff]
    %v726 = vld [vmem:[%s3 + $0xee0] sm:$0xff]
    %v727 = vld [vmem:[%s3 + $0xee8] sm:$0xff]
    %v728 = vld [vmem:[%s3 + $0xef0] sm:$0xff]
    %v729 = vld [vmem:[%s3 + $0xef8] sm:$0xff]
    %v730 = vld [vmem:[%s3 + $0xf00] sm:$0xff]
    %v731 = vld [vmem:[%s3 + $0xf08] sm:$0xff]
    %v732 = vld [vmem:[%s3 + $0xf10] sm:$0xff]
    %v733 = vld [vmem:[%s3 + $0xf18] sm:$0xff]
    %v734 = vld [vmem:[%s3 + $0xf20] sm:$0xff]
    %v735 = vld [vmem:[%s3 + $0xf28] sm:$0xff]
    %v736 = vld [vmem:[%s3 + $0xf30] sm:$0xff]
    %v737 = vld [vmem:[%s3 + $0xf38] sm:$0xff]
    %v738 = vld [vmem:[%s3 + $0xf40] sm:$0xff]
    %v739 = vld [vmem:[%s3 + $0xf48] sm:$0xff]
    %v740 = vld [vmem:[%s3 + $0xf50] sm:$0xff]
    %v741 = vld [vmem:[%s3 + $0xf58] sm:$0xff]
    %v742 = vld [vmem:[%s3 + $0xf60] sm:$0xff]
    %v743 = vld [vmem:[%s3 + $0xf68] sm:$0xff]
    %v744 = vld [vmem:[%s3 + $0xf70] sm:$0xff]
    %v745 = vld [vmem:[%s3 + $0xf78] sm:$0xff]
    %v746 = vld [vmem:[%s3 + $0xf80] sm:$0xff]
    %v747 = vld [vmem:[%s3 + $0xf88] sm:$0xff]
    %v748 = vld [vmem:[%s3 + $0xf90] sm:$0xff]
    %v749 = vld [vmem:[%s3 + $0xf98] sm:$0xff]
    %v750 = vld [vmem:[%s3 + $0xfa0] sm:$0xff]
    %v751 = vld [vmem:[%s3 + $0xfa8] sm:$0xff]
    %v752 = vld [vmem:[%s3 + $0xfb0] sm:$0xff]
    %v753 = vld [vmem:[%s3 + $0xfb8] sm:$0xff]
    %v754 = vld [vmem:[%s3 + $0xfc0] sm:$0xff]
    %v755 = vld [vmem:[%s3 + $0xfc8] sm:$0xff]
    %v756 = vld [vmem:[%s3 + $0xfd0] sm:$0xff]
    %v757 = vld [vmem:[%s3 + $0xfd8] sm:$0xff]
    %v758 = vld [vmem:[%s3 + $0xfe0] sm:$0xff]
    %v759 = vld [vmem:[%s3 + $0xfe8] sm:$0xff]
    %v760 = vld [vmem:[%s3 + $0xff0] sm:$0xff]
    %v761 = vld [vmem:[%s3 + $0xff8] sm:$0xff]
    %v762 = vld [vmem:[%s4] sm:$0xff]
    %v764 = vlaneseq
    %v765 = vshrl.u32 %v764, 7
    %v766 = vsub.s32 0, %v765
    %v767 = vrot.slane %v762, %v766
    %v768 = vlaneseq
    %v769 = vshrl.u32 %v768, 7
    %v770 = vsub.s32 1, %v769
    %v771 = vrot.slane %v762, %v770
    %v772 = vlaneseq
    %v773 = vshrl.u32 %v772, 7
    %v774 = vsub.s32 2, %v773
    %v775 = vrot.slane %v762, %v774
    %v776 = vlaneseq
    %v777 = vshrl.u32 %v776, 7
    %v778 = vsub.s32 3, %v777
    %v779 = vrot.slane %v762, %v778
    %v780 = vlaneseq
    %v781 = vshrl.u32 %v780, 7
    %v782 = vsub.s32 4, %v781
    %v783 = vrot.slane %v762, %v782
    %v784 = vlaneseq
    %v785 = vshrl.u32 %v784, 7
    %v786 = vsub.s32 5, %v785
    %v787 = vrot.slane %v762, %v786
    %v788 = vlaneseq
    %v789 = vshrl.u32 %v788, 7
    %v790 = vsub.s32 6, %v789
    %v791 = vrot.slane %v762, %v790
    %v792 = vlaneseq
    %v793 = vshrl.u32 %v792, 7
    %v794 = vsub.s32 7, %v793
    %v795 = vrot.slane %v762, %v794
    %v1316 = vunpack.c.l.b16 %v250
    %v1317 = vunpack.c.h.b16 %v250
    %v1318 = vunpack.c.l.b16 %v251
    %v1319 = vunpack.c.h.b16 %v251
    %v1320 = vunpack.c.l.b16 %v252
    %v1321 = vunpack.c.h.b16 %v252
    %v1322 = vunpack.c.l.b16 %v253
    %v1323 = vunpack.c.h.b16 %v253
    %v1324 = vunpack.c.l.b16 %v254
    %v1325 = vunpack.c.h.b16 %v254
    %v1326 = vunpack.c.l.b16 %v255
    %v1327 = vunpack.c.h.b16 %v255
    %v1328 = vunpack.c.l.b16 %v256
    %v1329 = vunpack.c.h.b16 %v256
    %v1330 = vunpack.c.l.b16 %v257
    %v1331 = vunpack.c.h.b16 %v257
    %v1332 = vunpack.c.l.b16 %v258
    %v1333 = vunpack.c.h.b16 %v258
    %v1334 = vunpack.c.l.b16 %v259
    %v1335 = vunpack.c.h.b16 %v259
    %v1336 = vunpack.c.l.b16 %v260
    %v1337 = vunpack.c.h.b16 %v260
    %v1338 = vunpack.c.l.b16 %v261
    %v1339 = vunpack.c.h.b16 %v261
    %v1340 = vunpack.c.l.b16 %v262
    %v1341 = vunpack.c.h.b16 %v262
    %v1342 = vunpack.c.l.b16 %v263
    %v1343 = vunpack.c.h.b16 %v263
    %v1344 = vunpack.c.l.b16 %v264
    %v1345 = vunpack.c.h.b16 %v264
    %v1346 = vunpack.c.l.b16 %v265
    %v1347 = vunpack.c.h.b16 %v265
    %v1348 = vunpack.c.l.b16 %v266
    %v1349 = vunpack.c.h.b16 %v266
    %v1350 = vunpack.c.l.b16 %v267
    %v1351 = vunpack.c.h.b16 %v267
    %v1352 = vunpack.c.l.b16 %v268
    %v1353 = vunpack.c.h.b16 %v268
    %v1354 = vunpack.c.l.b16 %v269
    %v1355 = vunpack.c.h.b16 %v269
    %v1356 = vunpack.c.l.b16 %v270
    %v1357 = vunpack.c.h.b16 %v270
    %v1358 = vunpack.c.l.b16 %v271
    %v1359 = vunpack.c.h.b16 %v271
    %v1360 = vunpack.c.l.b16 %v272
    %v1361 = vunpack.c.h.b16 %v272
    %v1362 = vunpack.c.l.b16 %v273
    %v1363 = vunpack.c.h.b16 %v273
    %v1364 = vunpack.c.l.b16 %v274
    %v1365 = vunpack.c.h.b16 %v274
    %v1366 = vunpack.c.l.b16 %v275
    %v1367 = vunpack.c.h.b16 %v275
    %v1368 = vunpack.c.l.b16 %v276
    %v1369 = vunpack.c.h.b16 %v276
    %v1370 = vunpack.c.l.b16 %v277
    %v1371 = vunpack.c.h.b16 %v277
    %v1372 = vunpack.c.l.b16 %v278
    %v1373 = vunpack.c.h.b16 %v278
    %v1374 = vunpack.c.l.b16 %v279
    %v1375 = vunpack.c.h.b16 %v279
    %v1376 = vunpack.c.l.b16 %v280
    %v1377 = vunpack.c.h.b16 %v280
    %v1378 = vunpack.c.l.b16 %v281
    %v1379 = vunpack.c.h.b16 %v281
    %v1380 = vunpack.c.l.b16 %v282
    %v1381 = vunpack.c.h.b16 %v282
    %v1382 = vunpack.c.l.b16 %v283
    %v1383 = vunpack.c.h.b16 %v283
    %v1384 = vunpack.c.l.b16 %v284
    %v1385 = vunpack.c.h.b16 %v284
    %v1386 = vunpack.c.l.b16 %v285
    %v1387 = vunpack.c.h.b16 %v285
    %v1388 = vunpack.c.l.b16 %v286
    %v1389 = vunpack.c.h.b16 %v286
    %v1390 = vunpack.c.l.b16 %v287
    %v1391 = vunpack.c.h.b16 %v287
    %v1392 = vunpack.c.l.b16 %v288
    %v1393 = vunpack.c.h.b16 %v288
    %v1394 = vunpack.c.l.b16 %v289
    %v1395 = vunpack.c.h.b16 %v289
    %v1396 = vunpack.c.l.b16 %v290
    %v1397 = vunpack.c.h.b16 %v290
    %v1398 = vunpack.c.l.b16 %v291
    %v1399 = vunpack.c.h.b16 %v291
    %v1400 = vunpack.c.l.b16 %v292
    %v1401 = vunpack.c.h.b16 %v292
    %v1402 = vunpack.c.l.b16 %v293
    %v1403 = vunpack.c.h.b16 %v293
    %v1404 = vunpack.c.l.b16 %v294
    %v1405 = vunpack.c.h.b16 %v294
    %v1406 = vunpack.c.l.b16 %v295
    %v1407 = vunpack.c.h.b16 %v295
    %v1408 = vunpack.c.l.b16 %v296
    %v1409 = vunpack.c.h.b16 %v296
    %v1410 = vunpack.c.l.b16 %v297
    %v1411 = vunpack.c.h.b16 %v297
    %v1412 = vunpack.c.l.b16 %v298
    %v1413 = vunpack.c.h.b16 %v298
    %v1414 = vunpack.c.l.b16 %v299
    %v1415 = vunpack.c.h.b16 %v299
    %v1416 = vunpack.c.l.b16 %v300
    %v1417 = vunpack.c.h.b16 %v300
    %v1418 = vunpack.c.l.b16 %v301
    %v1419 = vunpack.c.h.b16 %v301
    %v1420 = vunpack.c.l.b16 %v302
    %v1421 = vunpack.c.h.b16 %v302
    %v1422 = vunpack.c.l.b16 %v303
    %v1423 = vunpack.c.h.b16 %v303
    %v1424 = vunpack.c.l.b16 %v304
    %v1425 = vunpack.c.h.b16 %v304
    %v1426 = vunpack.c.l.b16 %v305
    %v1427 = vunpack.c.h.b16 %v305
    %v1428 = vunpack.c.l.b16 %v306
    %v1429 = vunpack.c.h.b16 %v306
    %v1430 = vunpack.c.l.b16 %v307
    %v1431 = vunpack.c.h.b16 %v307
    %v1432 = vunpack.c.l.b16 %v308
    %v1433 = vunpack.c.h.b16 %v308
    %v1434 = vunpack.c.l.b16 %v309
    %v1435 = vunpack.c.h.b16 %v309
    %v1436 = vunpack.c.l.b16 %v310
    %v1437 = vunpack.c.h.b16 %v310
    %v1438 = vunpack.c.l.b16 %v311
    %v1439 = vunpack.c.h.b16 %v311
    %v1440 = vunpack.c.l.b16 %v312
    %v1441 = vunpack.c.h.b16 %v312
    %v1442 = vunpack.c.l.b16 %v313
    %v1443 = vunpack.c.h.b16 %v313
    %v1444 = vunpack.c.l.b16 %v314
    %v1445 = vunpack.c.h.b16 %v314
    %v1446 = vunpack.c.l.b16 %v315
    %v1447 = vunpack.c.h.b16 %v315
    %v1448 = vunpack.c.l.b16 %v316
    %v1449 = vunpack.c.h.b16 %v316
    %v1450 = vunpack.c.l.b16 %v317
    %v1451 = vunpack.c.h.b16 %v317
    %v1452 = vunpack.c.l.b16 %v318
    %v1453 = vunpack.c.h.b16 %v318
    %v1454 = vunpack.c.l.b16 %v319
    %v1455 = vunpack.c.h.b16 %v319
    %v1456 = vunpack.c.l.b16 %v320
    %v1457 = vunpack.c.h.b16 %v320
    %v1458 = vunpack.c.l.b16 %v321
    %v1459 = vunpack.c.h.b16 %v321
    %v1460 = vunpack.c.l.b16 %v322
    %v1461 = vunpack.c.h.b16 %v322
    %v1462 = vunpack.c.l.b16 %v323
    %v1463 = vunpack.c.h.b16 %v323
    %v1464 = vunpack.c.l.b16 %v324
    %v1465 = vunpack.c.h.b16 %v324
    %v1466 = vunpack.c.l.b16 %v325
    %v1467 = vunpack.c.h.b16 %v325
    %v1468 = vunpack.c.l.b16 %v326
    %v1469 = vunpack.c.h.b16 %v326
    %v1470 = vunpack.c.l.b16 %v327
    %v1471 = vunpack.c.h.b16 %v327
    %v1472 = vunpack.c.l.b16 %v328
    %v1473 = vunpack.c.h.b16 %v328
    %v1474 = vunpack.c.l.b16 %v329
    %v1475 = vunpack.c.h.b16 %v329
    %v1476 = vunpack.c.l.b16 %v330
    %v1477 = vunpack.c.h.b16 %v330
    %v1478 = vunpack.c.l.b16 %v331
    %v1479 = vunpack.c.h.b16 %v331
    %v1480 = vunpack.c.l.b16 %v332
    %v1481 = vunpack.c.h.b16 %v332
    %v1482 = vunpack.c.l.b16 %v333
    %v1483 = vunpack.c.h.b16 %v333
    %v1484 = vunpack.c.l.b16 %v334
    %v1485 = vunpack.c.h.b16 %v334
    %v1486 = vunpack.c.l.b16 %v335
    %v1487 = vunpack.c.h.b16 %v335
    %v1488 = vunpack.c.l.b16 %v336
    %v1489 = vunpack.c.h.b16 %v336
    %v1490 = vunpack.c.l.b16 %v337
    %v1491 = vunpack.c.h.b16 %v337
    %v1492 = vunpack.c.l.b16 %v338
    %v1493 = vunpack.c.h.b16 %v338
    %v1494 = vunpack.c.l.b16 %v339
    %v1495 = vunpack.c.h.b16 %v339
    %v1496 = vunpack.c.l.b16 %v340
    %v1497 = vunpack.c.h.b16 %v340
    %v1498 = vunpack.c.l.b16 %v341
    %v1499 = vunpack.c.h.b16 %v341
    %v1500 = vunpack.c.l.b16 %v342
    %v1501 = vunpack.c.h.b16 %v342
    %v1502 = vunpack.c.l.b16 %v343
    %v1503 = vunpack.c.h.b16 %v343
    %v1504 = vunpack.c.l.b16 %v344
    %v1505 = vunpack.c.h.b16 %v344
    %v1506 = vunpack.c.l.b16 %v345
    %v1507 = vunpack.c.h.b16 %v345
    %v1508 = vunpack.c.l.b16 %v346
    %v1509 = vunpack.c.h.b16 %v346
    %v1510 = vunpack.c.l.b16 %v347
    %v1511 = vunpack.c.h.b16 %v347
    %v1512 = vunpack.c.l.b16 %v348
    %v1513 = vunpack.c.h.b16 %v348
    %v1514 = vunpack.c.l.b16 %v349
    %v1515 = vunpack.c.h.b16 %v349
    %v1516 = vunpack.c.l.b16 %v350
    %v1517 = vunpack.c.h.b16 %v350
    %v1518 = vunpack.c.l.b16 %v351
    %v1519 = vunpack.c.h.b16 %v351
    %v1520 = vunpack.c.l.b16 %v352
    %v1521 = vunpack.c.h.b16 %v352
    %v1522 = vunpack.c.l.b16 %v353
    %v1523 = vunpack.c.h.b16 %v353
    %v1524 = vunpack.c.l.b16 %v354
    %v1525 = vunpack.c.h.b16 %v354
    %v1526 = vunpack.c.l.b16 %v355
    %v1527 = vunpack.c.h.b16 %v355
    %v1528 = vunpack.c.l.b16 %v356
    %v1529 = vunpack.c.h.b16 %v356
    %v1530 = vunpack.c.l.b16 %v357
    %v1531 = vunpack.c.h.b16 %v357
    %v1532 = vunpack.c.l.b16 %v358
    %v1533 = vunpack.c.h.b16 %v358
    %v1534 = vunpack.c.l.b16 %v359
    %v1535 = vunpack.c.h.b16 %v359
    %v1536 = vunpack.c.l.b16 %v360
    %v1537 = vunpack.c.h.b16 %v360
    %v1538 = vunpack.c.l.b16 %v361
    %v1539 = vunpack.c.h.b16 %v361
    %v1540 = vunpack.c.l.b16 %v362
    %v1541 = vunpack.c.h.b16 %v362
    %v1542 = vunpack.c.l.b16 %v363
    %v1543 = vunpack.c.h.b16 %v363
    %v1544 = vunpack.c.l.b16 %v364
    %v1545 = vunpack.c.h.b16 %v364
    %v1546 = vunpack.c.l.b16 %v365
    %v1547 = vunpack.c.h.b16 %v365
    %v1548 = vunpack.c.l.b16 %v366
    %v1549 = vunpack.c.h.b16 %v366
    %v1550 = vunpack.c.l.b16 %v367
    %v1551 = vunpack.c.h.b16 %v367
    %v1552 = vunpack.c.l.b16 %v368
    %v1553 = vunpack.c.h.b16 %v368
    %v1554 = vunpack.c.l.b16 %v369
    %v1555 = vunpack.c.h.b16 %v369
    %v1556 = vunpack.c.l.b16 %v370
    %v1557 = vunpack.c.h.b16 %v370
    %v1558 = vunpack.c.l.b16 %v371
    %v1559 = vunpack.c.h.b16 %v371
    %v1560 = vunpack.c.l.b16 %v372
    %v1561 = vunpack.c.h.b16 %v372
    %v1562 = vunpack.c.l.b16 %v373
    %v1563 = vunpack.c.h.b16 %v373
    %v1564 = vunpack.c.l.b16 %v374
    %v1565 = vunpack.c.h.b16 %v374
    %v1566 = vunpack.c.l.b16 %v375
    %v1567 = vunpack.c.h.b16 %v375
    %v1568 = vunpack.c.l.b16 %v376
    %v1569 = vunpack.c.h.b16 %v376
    %v1570 = vunpack.c.l.b16 %v377
    %v1571 = vunpack.c.h.b16 %v377
    %v1572 = vunpack.c.l.b16 %v378
    %v1573 = vunpack.c.h.b16 %v378
    %v1574 = vunpack.c.l.b16 %v379
    %v1575 = vunpack.c.h.b16 %v379
    %v1576 = vunpack.c.l.b16 %v380
    %v1577 = vunpack.c.h.b16 %v380
    %v1578 = vunpack.c.l.b16 %v381
    %v1579 = vunpack.c.h.b16 %v381
    %v1580 = vunpack.c.l.b16 %v382
    %v1581 = vunpack.c.h.b16 %v382
    %v1582 = vunpack.c.l.b16 %v383
    %v1583 = vunpack.c.h.b16 %v383
    %v1584 = vunpack.c.l.b16 %v384
    %v1585 = vunpack.c.h.b16 %v384
    %v1586 = vunpack.c.l.b16 %v385
    %v1587 = vunpack.c.h.b16 %v385
    %v1588 = vunpack.c.l.b16 %v386
    %v1589 = vunpack.c.h.b16 %v386
    %v1590 = vunpack.c.l.b16 %v387
    %v1591 = vunpack.c.h.b16 %v387
    %v1592 = vunpack.c.l.b16 %v388
    %v1593 = vunpack.c.h.b16 %v388
    %v1594 = vunpack.c.l.b16 %v389
    %v1595 = vunpack.c.h.b16 %v389
    %v1596 = vunpack.c.l.b16 %v390
    %v1597 = vunpack.c.h.b16 %v390
    %v1598 = vunpack.c.l.b16 %v391
    %v1599 = vunpack.c.h.b16 %v391
    %v1600 = vunpack.c.l.b16 %v392
    %v1601 = vunpack.c.h.b16 %v392
    %v1602 = vunpack.c.l.b16 %v393
    %v1603 = vunpack.c.h.b16 %v393
    %v1604 = vunpack.c.l.b16 %v394
    %v1605 = vunpack.c.h.b16 %v394
    %v1606 = vunpack.c.l.b16 %v395
    %v1607 = vunpack.c.h.b16 %v395
    %v1608 = vunpack.c.l.b16 %v396
    %v1609 = vunpack.c.h.b16 %v396
    %v1610 = vunpack.c.l.b16 %v397
    %v1611 = vunpack.c.h.b16 %v397
    %v1612 = vunpack.c.l.b16 %v398
    %v1613 = vunpack.c.h.b16 %v398
    %v1614 = vunpack.c.l.b16 %v399
    %v1615 = vunpack.c.h.b16 %v399
    %v1616 = vunpack.c.l.b16 %v400
    %v1617 = vunpack.c.h.b16 %v400
    %v1618 = vunpack.c.l.b16 %v401
    %v1619 = vunpack.c.h.b16 %v401
    %v1620 = vunpack.c.l.b16 %v402
    %v1621 = vunpack.c.h.b16 %v402
    %v1622 = vunpack.c.l.b16 %v403
    %v1623 = vunpack.c.h.b16 %v403
    %v1624 = vunpack.c.l.b16 %v404
    %v1625 = vunpack.c.h.b16 %v404
    %v1626 = vunpack.c.l.b16 %v405
    %v1627 = vunpack.c.h.b16 %v405
    %v1628 = vunpack.c.l.b16 %v406
    %v1629 = vunpack.c.h.b16 %v406
    %v1630 = vunpack.c.l.b16 %v407
    %v1631 = vunpack.c.h.b16 %v407
    %v1632 = vunpack.c.l.b16 %v408
    %v1633 = vunpack.c.h.b16 %v408
    %v1634 = vunpack.c.l.b16 %v409
    %v1635 = vunpack.c.h.b16 %v409
    %v1636 = vunpack.c.l.b16 %v410
    %v1637 = vunpack.c.h.b16 %v410
    %v1638 = vunpack.c.l.b16 %v411
    %v1639 = vunpack.c.h.b16 %v411
    %v1640 = vunpack.c.l.b16 %v412
    %v1641 = vunpack.c.h.b16 %v412
    %v1642 = vunpack.c.l.b16 %v413
    %v1643 = vunpack.c.h.b16 %v413
    %v1644 = vunpack.c.l.b16 %v414
    %v1645 = vunpack.c.h.b16 %v414
    %v1646 = vunpack.c.l.b16 %v415
    %v1647 = vunpack.c.h.b16 %v415
    %v1648 = vunpack.c.l.b16 %v416
    %v1649 = vunpack.c.h.b16 %v416
    %v1650 = vunpack.c.l.b16 %v417
    %v1651 = vunpack.c.h.b16 %v417
    %v1652 = vunpack.c.l.b16 %v418
    %v1653 = vunpack.c.h.b16 %v418
    %v1654 = vunpack.c.l.b16 %v419
    %v1655 = vunpack.c.h.b16 %v419
    %v1656 = vunpack.c.l.b16 %v420
    %v1657 = vunpack.c.h.b16 %v420
    %v1658 = vunpack.c.l.b16 %v421
    %v1659 = vunpack.c.h.b16 %v421
    %v1660 = vunpack.c.l.b16 %v422
    %v1661 = vunpack.c.h.b16 %v422
    %v1662 = vunpack.c.l.b16 %v423
    %v1663 = vunpack.c.h.b16 %v423
    %v1664 = vunpack.c.l.b16 %v424
    %v1665 = vunpack.c.h.b16 %v424
    %v1666 = vunpack.c.l.b16 %v425
    %v1667 = vunpack.c.h.b16 %v425
    %v1668 = vunpack.c.l.b16 %v426
    %v1669 = vunpack.c.h.b16 %v426
    %v1670 = vunpack.c.l.b16 %v427
    %v1671 = vunpack.c.h.b16 %v427
    %v1672 = vunpack.c.l.b16 %v428
    %v1673 = vunpack.c.h.b16 %v428
    %v1674 = vunpack.c.l.b16 %v429
    %v1675 = vunpack.c.h.b16 %v429
    %v1676 = vunpack.c.l.b16 %v430
    %v1677 = vunpack.c.h.b16 %v430
    %v1678 = vunpack.c.l.b16 %v431
    %v1679 = vunpack.c.h.b16 %v431
    %v1680 = vunpack.c.l.b16 %v432
    %v1681 = vunpack.c.h.b16 %v432
    %v1682 = vunpack.c.l.b16 %v433
    %v1683 = vunpack.c.h.b16 %v433
    %v1684 = vunpack.c.l.b16 %v434
    %v1685 = vunpack.c.h.b16 %v434
    %v1686 = vunpack.c.l.b16 %v435
    %v1687 = vunpack.c.h.b16 %v435
    %v1688 = vunpack.c.l.b16 %v436
    %v1689 = vunpack.c.h.b16 %v436
    %v1690 = vunpack.c.l.b16 %v437
    %v1691 = vunpack.c.h.b16 %v437
    %v1692 = vunpack.c.l.b16 %v438
    %v1693 = vunpack.c.h.b16 %v438
    %v1694 = vunpack.c.l.b16 %v439
    %v1695 = vunpack.c.h.b16 %v439
    %v1696 = vunpack.c.l.b16 %v440
    %v1697 = vunpack.c.h.b16 %v440
    %v1698 = vunpack.c.l.b16 %v441
    %v1699 = vunpack.c.h.b16 %v441
    %v1700 = vunpack.c.l.b16 %v442
    %v1701 = vunpack.c.h.b16 %v442
    %v1702 = vunpack.c.l.b16 %v443
    %v1703 = vunpack.c.h.b16 %v443
    %v1704 = vunpack.c.l.b16 %v444
    %v1705 = vunpack.c.h.b16 %v444
    %v1706 = vunpack.c.l.b16 %v445
    %v1707 = vunpack.c.h.b16 %v445
    %v1708 = vunpack.c.l.b16 %v446
    %v1709 = vunpack.c.h.b16 %v446
    %v1710 = vunpack.c.l.b16 %v447
    %v1711 = vunpack.c.h.b16 %v447
    %v1712 = vunpack.c.l.b16 %v448
    %v1713 = vunpack.c.h.b16 %v448
    %v1714 = vunpack.c.l.b16 %v449
    %v1715 = vunpack.c.h.b16 %v449
    %v1716 = vunpack.c.l.b16 %v450
    %v1717 = vunpack.c.h.b16 %v450
    %v1718 = vunpack.c.l.b16 %v451
    %v1719 = vunpack.c.h.b16 %v451
    %v1720 = vunpack.c.l.b16 %v452
    %v1721 = vunpack.c.h.b16 %v452
    %v1722 = vunpack.c.l.b16 %v453
    %v1723 = vunpack.c.h.b16 %v453
    %v1724 = vunpack.c.l.b16 %v454
    %v1725 = vunpack.c.h.b16 %v454
    %v1726 = vunpack.c.l.b16 %v455
    %v1727 = vunpack.c.h.b16 %v455
    %v1728 = vunpack.c.l.b16 %v456
    %v1729 = vunpack.c.h.b16 %v456
    %v1730 = vunpack.c.l.b16 %v457
    %v1731 = vunpack.c.h.b16 %v457
    %v1732 = vunpack.c.l.b16 %v458
    %v1733 = vunpack.c.h.b16 %v458
    %v1734 = vunpack.c.l.b16 %v459
    %v1735 = vunpack.c.h.b16 %v459
    %v1736 = vunpack.c.l.b16 %v460
    %v1737 = vunpack.c.h.b16 %v460
    %v1738 = vunpack.c.l.b16 %v461
    %v1739 = vunpack.c.h.b16 %v461
    %v1740 = vunpack.c.l.b16 %v462
    %v1741 = vunpack.c.h.b16 %v462
    %v1742 = vunpack.c.l.b16 %v463
    %v1743 = vunpack.c.h.b16 %v463
    %v1744 = vunpack.c.l.b16 %v464
    %v1745 = vunpack.c.h.b16 %v464
    %v1746 = vunpack.c.l.b16 %v465
    %v1747 = vunpack.c.h.b16 %v465
    %v1748 = vunpack.c.l.b16 %v466
    %v1749 = vunpack.c.h.b16 %v466
    %v1750 = vunpack.c.l.b16 %v467
    %v1751 = vunpack.c.h.b16 %v467
    %v1752 = vunpack.c.l.b16 %v468
    %v1753 = vunpack.c.h.b16 %v468
    %v1754 = vunpack.c.l.b16 %v469
    %v1755 = vunpack.c.h.b16 %v469
    %v1756 = vunpack.c.l.b16 %v470
    %v1757 = vunpack.c.h.b16 %v470
    %v1758 = vunpack.c.l.b16 %v471
    %v1759 = vunpack.c.h.b16 %v471
    %v1760 = vunpack.c.l.b16 %v472
    %v1761 = vunpack.c.h.b16 %v472
    %v1762 = vunpack.c.l.b16 %v473
    %v1763 = vunpack.c.h.b16 %v473
    %v1764 = vunpack.c.l.b16 %v474
    %v1765 = vunpack.c.h.b16 %v474
    %v1766 = vunpack.c.l.b16 %v475
    %v1767 = vunpack.c.h.b16 %v475
    %v1768 = vunpack.c.l.b16 %v476
    %v1769 = vunpack.c.h.b16 %v476
    %v1770 = vunpack.c.l.b16 %v477
    %v1771 = vunpack.c.h.b16 %v477
    %v1772 = vunpack.c.l.b16 %v478
    %v1773 = vunpack.c.h.b16 %v478
    %v1774 = vunpack.c.l.b16 %v479
    %v1775 = vunpack.c.h.b16 %v479
    %v1776 = vunpack.c.l.b16 %v480
    %v1777 = vunpack.c.h.b16 %v480
    %v1778 = vunpack.c.l.b16 %v481
    %v1779 = vunpack.c.h.b16 %v481
    %v1780 = vunpack.c.l.b16 %v482
    %v1781 = vunpack.c.h.b16 %v482
    %v1782 = vunpack.c.l.b16 %v483
    %v1783 = vunpack.c.h.b16 %v483
    %v1784 = vunpack.c.l.b16 %v484
    %v1785 = vunpack.c.h.b16 %v484
    %v1786 = vunpack.c.l.b16 %v485
    %v1787 = vunpack.c.h.b16 %v485
    %v1788 = vunpack.c.l.b16 %v486
    %v1789 = vunpack.c.h.b16 %v486
    %v1790 = vunpack.c.l.b16 %v487
    %v1791 = vunpack.c.h.b16 %v487
    %v1792 = vunpack.c.l.b16 %v488
    %v1793 = vunpack.c.h.b16 %v488
    %v1794 = vunpack.c.l.b16 %v489
    %v1795 = vunpack.c.h.b16 %v489
    %v1796 = vunpack.c.l.b16 %v490
    %v1797 = vunpack.c.h.b16 %v490
    %v1798 = vunpack.c.l.b16 %v491
    %v1799 = vunpack.c.h.b16 %v491
    %v1800 = vunpack.c.l.b16 %v492
    %v1801 = vunpack.c.h.b16 %v492
    %v1802 = vunpack.c.l.b16 %v493
    %v1803 = vunpack.c.h.b16 %v493
    %v1804 = vunpack.c.l.b16 %v494
    %v1805 = vunpack.c.h.b16 %v494
    %v1806 = vunpack.c.l.b16 %v495
    %v1807 = vunpack.c.h.b16 %v495
    %v1808 = vunpack.c.l.b16 %v496
    %v1809 = vunpack.c.h.b16 %v496
    %v1810 = vunpack.c.l.b16 %v497
    %v1811 = vunpack.c.h.b16 %v497
    %v1812 = vunpack.c.l.b16 %v498
    %v1813 = vunpack.c.h.b16 %v498
    %v1814 = vunpack.c.l.b16 %v499
    %v1815 = vunpack.c.h.b16 %v499
    %v1816 = vunpack.c.l.b16 %v500
    %v1817 = vunpack.c.h.b16 %v500
    %v1818 = vunpack.c.l.b16 %v501
    %v1819 = vunpack.c.h.b16 %v501
    %v1820 = vunpack.c.l.b16 %v502
    %v1821 = vunpack.c.h.b16 %v502
    %v1822 = vunpack.c.l.b16 %v503
    %v1823 = vunpack.c.h.b16 %v503
    %v1824 = vunpack.c.l.b16 %v504
    %v1825 = vunpack.c.h.b16 %v504
    %v1826 = vunpack.c.l.b16 %v505
    %v1827 = vunpack.c.h.b16 %v505
    %v1828 = vunpack.c.l.b16 %v506
    %v1829 = vunpack.c.h.b16 %v506
    %v1830 = vunpack.c.l.b16 %v507
    %v1831 = vunpack.c.h.b16 %v507
    %v1832 = vunpack.c.l.b16 %v508
    %v1833 = vunpack.c.h.b16 %v508
    %v1834 = vunpack.c.l.b16 %v509
    %v1835 = vunpack.c.h.b16 %v509
    %v1836 = vunpack.c.l.b16 %v510
    %v1837 = vunpack.c.h.b16 %v510
    %v1838 = vunpack.c.l.b16 %v511
    %v1839 = vunpack.c.h.b16 %v511
    %v1840 = vunpack.c.l.b16 %v512
    %v1841 = vunpack.c.h.b16 %v512
    %v1842 = vunpack.c.l.b16 %v513
    %v1843 = vunpack.c.h.b16 %v513
    %v1844 = vunpack.c.l.b16 %v514
    %v1845 = vunpack.c.h.b16 %v514
    %v1846 = vunpack.c.l.b16 %v515
    %v1847 = vunpack.c.h.b16 %v515
    %v1848 = vunpack.c.l.b16 %v516
    %v1849 = vunpack.c.h.b16 %v516
    %v1850 = vunpack.c.l.b16 %v517
    %v1851 = vunpack.c.h.b16 %v517
    %v1852 = vunpack.c.l.b16 %v518
    %v1853 = vunpack.c.h.b16 %v518
    %v1854 = vunpack.c.l.b16 %v519
    %v1855 = vunpack.c.h.b16 %v519
    %v1856 = vunpack.c.l.b16 %v520
    %v1857 = vunpack.c.h.b16 %v520
    %v1858 = vunpack.c.l.b16 %v521
    %v1859 = vunpack.c.h.b16 %v521
    %v1860 = vunpack.c.l.b16 %v522
    %v1861 = vunpack.c.h.b16 %v522
    %v1862 = vunpack.c.l.b16 %v523
    %v1863 = vunpack.c.h.b16 %v523
    %v1864 = vunpack.c.l.b16 %v524
    %v1865 = vunpack.c.h.b16 %v524
    %v1866 = vunpack.c.l.b16 %v525
    %v1867 = vunpack.c.h.b16 %v525
    %v1868 = vunpack.c.l.b16 %v526
    %v1869 = vunpack.c.h.b16 %v526
    %v1870 = vunpack.c.l.b16 %v527
    %v1871 = vunpack.c.h.b16 %v527
    %v1872 = vunpack.c.l.b16 %v528
    %v1873 = vunpack.c.h.b16 %v528
    %v1874 = vunpack.c.l.b16 %v529
    %v1875 = vunpack.c.h.b16 %v529
    %v1876 = vunpack.c.l.b16 %v530
    %v1877 = vunpack.c.h.b16 %v530
    %v1878 = vunpack.c.l.b16 %v531
    %v1879 = vunpack.c.h.b16 %v531
    %v1880 = vunpack.c.l.b16 %v532
    %v1881 = vunpack.c.h.b16 %v532
    %v1882 = vunpack.c.l.b16 %v533
    %v1883 = vunpack.c.h.b16 %v533
    %v1884 = vunpack.c.l.b16 %v534
    %v1885 = vunpack.c.h.b16 %v534
    %v1886 = vunpack.c.l.b16 %v535
    %v1887 = vunpack.c.h.b16 %v535
    %v1888 = vunpack.c.l.b16 %v536
    %v1889 = vunpack.c.h.b16 %v536
    %v1890 = vunpack.c.l.b16 %v537
    %v1891 = vunpack.c.h.b16 %v537
    %v1892 = vunpack.c.l.b16 %v538
    %v1893 = vunpack.c.h.b16 %v538
    %v1894 = vunpack.c.l.b16 %v539
    %v1895 = vunpack.c.h.b16 %v539
    %v1896 = vunpack.c.l.b16 %v540
    %v1897 = vunpack.c.h.b16 %v540
    %v1898 = vunpack.c.l.b16 %v541
    %v1899 = vunpack.c.h.b16 %v541
    %v1900 = vunpack.c.l.b16 %v542
    %v1901 = vunpack.c.h.b16 %v542
    %v1902 = vunpack.c.l.b16 %v543
    %v1903 = vunpack.c.h.b16 %v543
    %v1904 = vunpack.c.l.b16 %v544
    %v1905 = vunpack.c.h.b16 %v544
    %v1906 = vunpack.c.l.b16 %v545
    %v1907 = vunpack.c.h.b16 %v545
    %v1908 = vunpack.c.l.b16 %v546
    %v1909 = vunpack.c.h.b16 %v546
    %v1910 = vunpack.c.l.b16 %v547
    %v1911 = vunpack.c.h.b16 %v547
    %v1912 = vunpack.c.l.b16 %v548
    %v1913 = vunpack.c.h.b16 %v548
    %v1914 = vunpack.c.l.b16 %v549
    %v1915 = vunpack.c.h.b16 %v549
    %v1916 = vunpack.c.l.b16 %v550
    %v1917 = vunpack.c.h.b16 %v550
    %v1918 = vunpack.c.l.b16 %v551
    %v1919 = vunpack.c.h.b16 %v551
    %v1920 = vunpack.c.l.b16 %v552
    %v1921 = vunpack.c.h.b16 %v552
    %v1922 = vunpack.c.l.b16 %v553
    %v1923 = vunpack.c.h.b16 %v553
    %v1924 = vunpack.c.l.b16 %v554
    %v1925 = vunpack.c.h.b16 %v554
    %v1926 = vunpack.c.l.b16 %v555
    %v1927 = vunpack.c.h.b16 %v555
    %v1928 = vunpack.c.l.b16 %v556
    %v1929 = vunpack.c.h.b16 %v556
    %v1930 = vunpack.c.l.b16 %v557
    %v1931 = vunpack.c.h.b16 %v557
    %v1932 = vunpack.c.l.b16 %v558
    %v1933 = vunpack.c.h.b16 %v558
    %v1934 = vunpack.c.l.b16 %v559
    %v1935 = vunpack.c.h.b16 %v559
    %v1936 = vunpack.c.l.b16 %v560
    %v1937 = vunpack.c.h.b16 %v560
    %v1938 = vunpack.c.l.b16 %v561
    %v1939 = vunpack.c.h.b16 %v561
    %v1940 = vunpack.c.l.b16 %v562
    %v1941 = vunpack.c.h.b16 %v562
    %v1942 = vunpack.c.l.b16 %v563
    %v1943 = vunpack.c.h.b16 %v563
    %v1944 = vunpack.c.l.b16 %v564
    %v1945 = vunpack.c.h.b16 %v564
    %v1946 = vunpack.c.l.b16 %v565
    %v1947 = vunpack.c.h.b16 %v565
    %v1948 = vunpack.c.l.b16 %v566
    %v1949 = vunpack.c.h.b16 %v566
    %v1950 = vunpack.c.l.b16 %v567
    %v1951 = vunpack.c.h.b16 %v567
    %v1952 = vunpack.c.l.b16 %v568
    %v1953 = vunpack.c.h.b16 %v568
    %v1954 = vunpack.c.l.b16 %v569
    %v1955 = vunpack.c.h.b16 %v569
    %v1956 = vunpack.c.l.b16 %v570
    %v1957 = vunpack.c.h.b16 %v570
    %v1958 = vunpack.c.l.b16 %v571
    %v1959 = vunpack.c.h.b16 %v571
    %v1960 = vunpack.c.l.b16 %v572
    %v1961 = vunpack.c.h.b16 %v572
    %v1962 = vunpack.c.l.b16 %v573
    %v1963 = vunpack.c.h.b16 %v573
    %v1964 = vunpack.c.l.b16 %v574
    %v1965 = vunpack.c.h.b16 %v574
    %v1966 = vunpack.c.l.b16 %v575
    %v1967 = vunpack.c.h.b16 %v575
    %v1968 = vunpack.c.l.b16 %v576
    %v1969 = vunpack.c.h.b16 %v576
    %v1970 = vunpack.c.l.b16 %v577
    %v1971 = vunpack.c.h.b16 %v577
    %v1972 = vunpack.c.l.b16 %v578
    %v1973 = vunpack.c.h.b16 %v578
    %v1974 = vunpack.c.l.b16 %v579
    %v1975 = vunpack.c.h.b16 %v579
    %v1976 = vunpack.c.l.b16 %v580
    %v1977 = vunpack.c.h.b16 %v580
    %v1978 = vunpack.c.l.b16 %v581
    %v1979 = vunpack.c.h.b16 %v581
    %v1980 = vunpack.c.l.b16 %v582
    %v1981 = vunpack.c.h.b16 %v582
    %v1982 = vunpack.c.l.b16 %v583
    %v1983 = vunpack.c.h.b16 %v583
    %v1984 = vunpack.c.l.b16 %v584
    %v1985 = vunpack.c.h.b16 %v584
    %v1986 = vunpack.c.l.b16 %v585
    %v1987 = vunpack.c.h.b16 %v585
    %v1988 = vunpack.c.l.b16 %v586
    %v1989 = vunpack.c.h.b16 %v586
    %v1990 = vunpack.c.l.b16 %v587
    %v1991 = vunpack.c.h.b16 %v587
    %v1992 = vunpack.c.l.b16 %v588
    %v1993 = vunpack.c.h.b16 %v588
    %v1994 = vunpack.c.l.b16 %v589
    %v1995 = vunpack.c.h.b16 %v589
    %v1996 = vunpack.c.l.b16 %v590
    %v1997 = vunpack.c.h.b16 %v590
    %v1998 = vunpack.c.l.b16 %v591
    %v1999 = vunpack.c.h.b16 %v591
    %v2000 = vunpack.c.l.b16 %v592
    %v2001 = vunpack.c.h.b16 %v592
    %v2002 = vunpack.c.l.b16 %v593
    %v2003 = vunpack.c.h.b16 %v593
    %v2004 = vunpack.c.l.b16 %v594
    %v2005 = vunpack.c.h.b16 %v594
    %v2006 = vunpack.c.l.b16 %v595
    %v2007 = vunpack.c.h.b16 %v595
    %v2008 = vunpack.c.l.b16 %v596
    %v2009 = vunpack.c.h.b16 %v596
    %v2010 = vunpack.c.l.b16 %v597
    %v2011 = vunpack.c.h.b16 %v597
    %v2012 = vunpack.c.l.b16 %v598
    %v2013 = vunpack.c.h.b16 %v598
    %v2014 = vunpack.c.l.b16 %v599
    %v2015 = vunpack.c.h.b16 %v599
    %v2016 = vunpack.c.l.b16 %v600
    %v2017 = vunpack.c.h.b16 %v600
    %v2018 = vunpack.c.l.b16 %v601
    %v2019 = vunpack.c.h.b16 %v601
    %v2020 = vunpack.c.l.b16 %v602
    %v2021 = vunpack.c.h.b16 %v602
    %v2022 = vunpack.c.l.b16 %v603
    %v2023 = vunpack.c.h.b16 %v603
    %v2024 = vunpack.c.l.b16 %v604
    %v2025 = vunpack.c.h.b16 %v604
    %v2026 = vunpack.c.l.b16 %v605
    %v2027 = vunpack.c.h.b16 %v605
    %v2028 = vunpack.c.l.b16 %v606
    %v2029 = vunpack.c.h.b16 %v606
    %v2030 = vunpack.c.l.b16 %v607
    %v2031 = vunpack.c.h.b16 %v607
    %v2032 = vunpack.c.l.b16 %v608
    %v2033 = vunpack.c.h.b16 %v608
    %v2034 = vunpack.c.l.b16 %v609
    %v2035 = vunpack.c.h.b16 %v609
    %v2036 = vunpack.c.l.b16 %v610
    %v2037 = vunpack.c.h.b16 %v610
    %v2038 = vunpack.c.l.b16 %v611
    %v2039 = vunpack.c.h.b16 %v611
    %v2040 = vunpack.c.l.b16 %v612
    %v2041 = vunpack.c.h.b16 %v612
    %v2042 = vunpack.c.l.b16 %v613
    %v2043 = vunpack.c.h.b16 %v613
    %v2044 = vunpack.c.l.b16 %v614
    %v2045 = vunpack.c.h.b16 %v614
    %v2046 = vunpack.c.l.b16 %v615
    %v2047 = vunpack.c.h.b16 %v615
    %v2048 = vunpack.c.l.b16 %v616
    %v2049 = vunpack.c.h.b16 %v616
    %v2050 = vunpack.c.l.b16 %v617
    %v2051 = vunpack.c.h.b16 %v617
    %v2052 = vunpack.c.l.b16 %v618
    %v2053 = vunpack.c.h.b16 %v618
    %v2054 = vunpack.c.l.b16 %v619
    %v2055 = vunpack.c.h.b16 %v619
    %v2056 = vunpack.c.l.b16 %v620
    %v2057 = vunpack.c.h.b16 %v620
    %v2058 = vunpack.c.l.b16 %v621
    %v2059 = vunpack.c.h.b16 %v621
    %v2060 = vunpack.c.l.b16 %v622
    %v2061 = vunpack.c.h.b16 %v622
    %v2062 = vunpack.c.l.b16 %v623
    %v2063 = vunpack.c.h.b16 %v623
    %v2064 = vunpack.c.l.b16 %v624
    %v2065 = vunpack.c.h.b16 %v624
    %v2066 = vunpack.c.l.b16 %v625
    %v2067 = vunpack.c.h.b16 %v625
    %v2068 = vunpack.c.l.b16 %v626
    %v2069 = vunpack.c.h.b16 %v626
    %v2070 = vunpack.c.l.b16 %v627
    %v2071 = vunpack.c.h.b16 %v627
    %v2072 = vunpack.c.l.b16 %v628
    %v2073 = vunpack.c.h.b16 %v628
    %v2074 = vunpack.c.l.b16 %v629
    %v2075 = vunpack.c.h.b16 %v629
    %v2076 = vunpack.c.l.b16 %v630
    %v2077 = vunpack.c.h.b16 %v630
    %v2078 = vunpack.c.l.b16 %v631
    %v2079 = vunpack.c.h.b16 %v631
    %v2080 = vunpack.c.l.b16 %v632
    %v2081 = vunpack.c.h.b16 %v632
    %v2082 = vunpack.c.l.b16 %v633
    %v2083 = vunpack.c.h.b16 %v633
    %v2084 = vunpack.c.l.b16 %v634
    %v2085 = vunpack.c.h.b16 %v634
    %v2086 = vunpack.c.l.b16 %v635
    %v2087 = vunpack.c.h.b16 %v635
    %v2088 = vunpack.c.l.b16 %v636
    %v2089 = vunpack.c.h.b16 %v636
    %v2090 = vunpack.c.l.b16 %v637
    %v2091 = vunpack.c.h.b16 %v637
    %v2092 = vunpack.c.l.b16 %v638
    %v2093 = vunpack.c.h.b16 %v638
    %v2094 = vunpack.c.l.b16 %v639
    %v2095 = vunpack.c.h.b16 %v639
    %v2096 = vunpack.c.l.b16 %v640
    %v2097 = vunpack.c.h.b16 %v640
    %v2098 = vunpack.c.l.b16 %v641
    %v2099 = vunpack.c.h.b16 %v641
    %v2100 = vunpack.c.l.b16 %v642
    %v2101 = vunpack.c.h.b16 %v642
    %v2102 = vunpack.c.l.b16 %v643
    %v2103 = vunpack.c.h.b16 %v643
    %v2104 = vunpack.c.l.b16 %v644
    %v2105 = vunpack.c.h.b16 %v644
    %v2106 = vunpack.c.l.b16 %v645
    %v2107 = vunpack.c.h.b16 %v645
    %v2108 = vunpack.c.l.b16 %v646
    %v2109 = vunpack.c.h.b16 %v646
    %v2110 = vunpack.c.l.b16 %v647
    %v2111 = vunpack.c.h.b16 %v647
    %v2112 = vunpack.c.l.b16 %v648
    %v2113 = vunpack.c.h.b16 %v648
    %v2114 = vunpack.c.l.b16 %v649
    %v2115 = vunpack.c.h.b16 %v649
    %v2116 = vunpack.c.l.b16 %v650
    %v2117 = vunpack.c.h.b16 %v650
    %v2118 = vunpack.c.l.b16 %v651
    %v2119 = vunpack.c.h.b16 %v651
    %v2120 = vunpack.c.l.b16 %v652
    %v2121 = vunpack.c.h.b16 %v652
    %v2122 = vunpack.c.l.b16 %v653
    %v2123 = vunpack.c.h.b16 %v653
    %v2124 = vunpack.c.l.b16 %v654
    %v2125 = vunpack.c.h.b16 %v654
    %v2126 = vunpack.c.l.b16 %v655
    %v2127 = vunpack.c.h.b16 %v655
    %v2128 = vunpack.c.l.b16 %v656
    %v2129 = vunpack.c.h.b16 %v656
    %v2130 = vunpack.c.l.b16 %v657
    %v2131 = vunpack.c.h.b16 %v657
    %v2132 = vunpack.c.l.b16 %v658
    %v2133 = vunpack.c.h.b16 %v658
    %v2134 = vunpack.c.l.b16 %v659
    %v2135 = vunpack.c.h.b16 %v659
    %v2136 = vunpack.c.l.b16 %v660
    %v2137 = vunpack.c.h.b16 %v660
    %v2138 = vunpack.c.l.b16 %v661
    %v2139 = vunpack.c.h.b16 %v661
    %v2140 = vunpack.c.l.b16 %v662
    %v2141 = vunpack.c.h.b16 %v662
    %v2142 = vunpack.c.l.b16 %v663
    %v2143 = vunpack.c.h.b16 %v663
    %v2144 = vunpack.c.l.b16 %v664
    %v2145 = vunpack.c.h.b16 %v664
    %v2146 = vunpack.c.l.b16 %v665
    %v2147 = vunpack.c.h.b16 %v665
    %v2148 = vunpack.c.l.b16 %v666
    %v2149 = vunpack.c.h.b16 %v666
    %v2150 = vunpack.c.l.b16 %v667
    %v2151 = vunpack.c.h.b16 %v667
    %v2152 = vunpack.c.l.b16 %v668
    %v2153 = vunpack.c.h.b16 %v668
    %v2154 = vunpack.c.l.b16 %v669
    %v2155 = vunpack.c.h.b16 %v669
    %v2156 = vunpack.c.l.b16 %v670
    %v2157 = vunpack.c.h.b16 %v670
    %v2158 = vunpack.c.l.b16 %v671
    %v2159 = vunpack.c.h.b16 %v671
    %v2160 = vunpack.c.l.b16 %v672
    %v2161 = vunpack.c.h.b16 %v672
    %v2162 = vunpack.c.l.b16 %v673
    %v2163 = vunpack.c.h.b16 %v673
    %v2164 = vunpack.c.l.b16 %v674
    %v2165 = vunpack.c.h.b16 %v674
    %v2166 = vunpack.c.l.b16 %v675
    %v2167 = vunpack.c.h.b16 %v675
    %v2168 = vunpack.c.l.b16 %v676
    %v2169 = vunpack.c.h.b16 %v676
    %v2170 = vunpack.c.l.b16 %v677
    %v2171 = vunpack.c.h.b16 %v677
    %v2172 = vunpack.c.l.b16 %v678
    %v2173 = vunpack.c.h.b16 %v678
    %v2174 = vunpack.c.l.b16 %v679
    %v2175 = vunpack.c.h.b16 %v679
    %v2176 = vunpack.c.l.b16 %v680
    %v2177 = vunpack.c.h.b16 %v680
    %v2178 = vunpack.c.l.b16 %v681
    %v2179 = vunpack.c.h.b16 %v681
    %v2180 = vunpack.c.l.b16 %v682
    %v2181 = vunpack.c.h.b16 %v682
    %v2182 = vunpack.c.l.b16 %v683
    %v2183 = vunpack.c.h.b16 %v683
    %v2184 = vunpack.c.l.b16 %v684
    %v2185 = vunpack.c.h.b16 %v684
    %v2186 = vunpack.c.l.b16 %v685
    %v2187 = vunpack.c.h.b16 %v685
    %v2188 = vunpack.c.l.b16 %v686
    %v2189 = vunpack.c.h.b16 %v686
    %v2190 = vunpack.c.l.b16 %v687
    %v2191 = vunpack.c.h.b16 %v687
    %v2192 = vunpack.c.l.b16 %v688
    %v2193 = vunpack.c.h.b16 %v688
    %v2194 = vunpack.c.l.b16 %v689
    %v2195 = vunpack.c.h.b16 %v689
    %v2196 = vunpack.c.l.b16 %v690
    %v2197 = vunpack.c.h.b16 %v690
    %v2198 = vunpack.c.l.b16 %v691
    %v2199 = vunpack.c.h.b16 %v691
    %v2200 = vunpack.c.l.b16 %v692
    %v2201 = vunpack.c.h.b16 %v692
    %v2202 = vunpack.c.l.b16 %v693
    %v2203 = vunpack.c.h.b16 %v693
    %v2204 = vunpack.c.l.b16 %v694
    %v2205 = vunpack.c.h.b16 %v694
    %v2206 = vunpack.c.l.b16 %v695
    %v2207 = vunpack.c.h.b16 %v695
    %v2208 = vunpack.c.l.b16 %v696
    %v2209 = vunpack.c.h.b16 %v696
    %v2210 = vunpack.c.l.b16 %v697
    %v2211 = vunpack.c.h.b16 %v697
    %v2212 = vunpack.c.l.b16 %v698
    %v2213 = vunpack.c.h.b16 %v698
    %v2214 = vunpack.c.l.b16 %v699
    %v2215 = vunpack.c.h.b16 %v699
    %v2216 = vunpack.c.l.b16 %v700
    %v2217 = vunpack.c.h.b16 %v700
    %v2218 = vunpack.c.l.b16 %v701
    %v2219 = vunpack.c.h.b16 %v701
    %v2220 = vunpack.c.l.b16 %v702
    %v2221 = vunpack.c.h.b16 %v702
    %v2222 = vunpack.c.l.b16 %v703
    %v2223 = vunpack.c.h.b16 %v703
    %v2224 = vunpack.c.l.b16 %v704
    %v2225 = vunpack.c.h.b16 %v704
    %v2226 = vunpack.c.l.b16 %v705
    %v2227 = vunpack.c.h.b16 %v705
    %v2228 = vunpack.c.l.b16 %v706
    %v2229 = vunpack.c.h.b16 %v706
    %v2230 = vunpack.c.l.b16 %v707
    %v2231 = vunpack.c.h.b16 %v707
    %v2232 = vunpack.c.l.b16 %v708
    %v2233 = vunpack.c.h.b16 %v708
    %v2234 = vunpack.c.l.b16 %v709
    %v2235 = vunpack.c.h.b16 %v709
    %v2236 = vunpack.c.l.b16 %v710
    %v2237 = vunpack.c.h.b16 %v710
    %v2238 = vunpack.c.l.b16 %v711
    %v2239 = vunpack.c.h.b16 %v711
    %v2240 = vunpack.c.l.b16 %v712
    %v2241 = vunpack.c.h.b16 %v712
    %v2242 = vunpack.c.l.b16 %v713
    %v2243 = vunpack.c.h.b16 %v713
    %v2244 = vunpack.c.l.b16 %v714
    %v2245 = vunpack.c.h.b16 %v714
    %v2246 = vunpack.c.l.b16 %v715
    %v2247 = vunpack.c.h.b16 %v715
    %v2248 = vunpack.c.l.b16 %v716
    %v2249 = vunpack.c.h.b16 %v716
    %v2250 = vunpack.c.l.b16 %v717
    %v2251 = vunpack.c.h.b16 %v717
    %v2252 = vunpack.c.l.b16 %v718
    %v2253 = vunpack.c.h.b16 %v718
    %v2254 = vunpack.c.l.b16 %v719
    %v2255 = vunpack.c.h.b16 %v719
    %v2256 = vunpack.c.l.b16 %v720
    %v2257 = vunpack.c.h.b16 %v720
    %v2258 = vunpack.c.l.b16 %v721
    %v2259 = vunpack.c.h.b16 %v721
    %v2260 = vunpack.c.l.b16 %v722
    %v2261 = vunpack.c.h.b16 %v722
    %v2262 = vunpack.c.l.b16 %v723
    %v2263 = vunpack.c.h.b16 %v723
    %v2264 = vunpack.c.l.b16 %v724
    %v2265 = vunpack.c.h.b16 %v724
    %v2266 = vunpack.c.l.b16 %v725
    %v2267 = vunpack.c.h.b16 %v725
    %v2268 = vunpack.c.l.b16 %v726
    %v2269 = vunpack.c.h.b16 %v726
    %v2270 = vunpack.c.l.b16 %v727
    %v2271 = vunpack.c.h.b16 %v727
    %v2272 = vunpack.c.l.b16 %v728
    %v2273 = vunpack.c.h.b16 %v728
    %v2274 = vunpack.c.l.b16 %v729
    %v2275 = vunpack.c.h.b16 %v729
    %v2276 = vunpack.c.l.b16 %v730
    %v2277 = vunpack.c.h.b16 %v730
    %v2278 = vunpack.c.l.b16 %v731
    %v2279 = vunpack.c.h.b16 %v731
    %v2280 = vunpack.c.l.b16 %v732
    %v2281 = vunpack.c.h.b16 %v732
    %v2282 = vunpack.c.l.b16 %v733
    %v2283 = vunpack.c.h.b16 %v733
    %v2284 = vunpack.c.l.b16 %v734
    %v2285 = vunpack.c.h.b16 %v734
    %v2286 = vunpack.c.l.b16 %v735
    %v2287 = vunpack.c.h.b16 %v735
    %v2288 = vunpack.c.l.b16 %v736
    %v2289 = vunpack.c.h.b16 %v736
    %v2290 = vunpack.c.l.b16 %v737
    %v2291 = vunpack.c.h.b16 %v737
    %v2292 = vunpack.c.l.b16 %v738
    %v2293 = vunpack.c.h.b16 %v738
    %v2294 = vunpack.c.l.b16 %v739
    %v2295 = vunpack.c.h.b16 %v739
    %v2296 = vunpack.c.l.b16 %v740
    %v2297 = vunpack.c.h.b16 %v740
    %v2298 = vunpack.c.l.b16 %v741
    %v2299 = vunpack.c.h.b16 %v741
    %v2300 = vunpack.c.l.b16 %v742
    %v2301 = vunpack.c.h.b16 %v742
    %v2302 = vunpack.c.l.b16 %v743
    %v2303 = vunpack.c.h.b16 %v743
    %v2304 = vunpack.c.l.b16 %v744
    %v2305 = vunpack.c.h.b16 %v744
    %v2306 = vunpack.c.l.b16 %v745
    %v2307 = vunpack.c.h.b16 %v745
    %v2308 = vunpack.c.l.b16 %v746
    %v2309 = vunpack.c.h.b16 %v746
    %v2310 = vunpack.c.l.b16 %v747
    %v2311 = vunpack.c.h.b16 %v747
    %v2312 = vunpack.c.l.b16 %v748
    %v2313 = vunpack.c.h.b16 %v748
    %v2314 = vunpack.c.l.b16 %v749
    %v2315 = vunpack.c.h.b16 %v749
    %v2316 = vunpack.c.l.b16 %v750
    %v2317 = vunpack.c.h.b16 %v750
    %v2318 = vunpack.c.l.b16 %v751
    %v2319 = vunpack.c.h.b16 %v751
    %v2320 = vunpack.c.l.b16 %v752
    %v2321 = vunpack.c.h.b16 %v752
    %v2322 = vunpack.c.l.b16 %v753
    %v2323 = vunpack.c.h.b16 %v753
    %v2324 = vunpack.c.l.b16 %v754
    %v2325 = vunpack.c.h.b16 %v754
    %v2326 = vunpack.c.l.b16 %v755
    %v2327 = vunpack.c.h.b16 %v755
    %v2328 = vunpack.c.l.b16 %v756
    %v2329 = vunpack.c.h.b16 %v756
    %v2330 = vunpack.c.l.b16 %v757
    %v2331 = vunpack.c.h.b16 %v757
    %v2332 = vunpack.c.l.b16 %v758
    %v2333 = vunpack.c.h.b16 %v758
    %v2334 = vunpack.c.l.b16 %v759
    %v2335 = vunpack.c.h.b16 %v759
    %v2336 = vunpack.c.l.b16 %v760
    %v2337 = vunpack.c.h.b16 %v760
    %v2338 = vunpack.c.l.b16 %v761
    %v2339 = vunpack.c.h.b16 %v761
    %v2340 = vpack.c.b16 %v1324, %v1316
    %v2341 = vpack.c.b16 %v1325, %v1317
    %v2342 = vpack.c.b16 %v1326, %v1318
    %v2343 = vpack.c.b16 %v1327, %v1319
    %v2344 = vpack.c.b16 %v1328, %v1320
    %v2345 = vpack.c.b16 %v1329, %v1321
    %v2346 = vpack.c.b16 %v1330, %v1322
    %v2347 = vpack.c.b16 %v1331, %v1323
    %v2348 = vpack.c.b16 %v1340, %v1332
    %v2349 = vpack.c.b16 %v1341, %v1333
    %v2350 = vpack.c.b16 %v1342, %v1334
    %v2351 = vpack.c.b16 %v1343, %v1335
    %v2352 = vpack.c.b16 %v1344, %v1336
    %v2353 = vpack.c.b16 %v1345, %v1337
    %v2354 = vpack.c.b16 %v1346, %v1338
    %v2355 = vpack.c.b16 %v1347, %v1339
    %v2356 = vpack.c.b16 %v1356, %v1348
    %v2357 = vpack.c.b16 %v1357, %v1349
    %v2358 = vpack.c.b16 %v1358, %v1350
    %v2359 = vpack.c.b16 %v1359, %v1351
    %v2360 = vpack.c.b16 %v1360, %v1352
    %v2361 = vpack.c.b16 %v1361, %v1353
    %v2362 = vpack.c.b16 %v1362, %v1354
    %v2363 = vpack.c.b16 %v1363, %v1355
    %v2364 = vpack.c.b16 %v1372, %v1364
    %v2365 = vpack.c.b16 %v1373, %v1365
    %v2366 = vpack.c.b16 %v1374, %v1366
    %v2367 = vpack.c.b16 %v1375, %v1367
    %v2368 = vpack.c.b16 %v1376, %v1368
    %v2369 = vpack.c.b16 %v1377, %v1369
    %v2370 = vpack.c.b16 %v1378, %v1370
    %v2371 = vpack.c.b16 %v1379, %v1371
    %v2372 = vpack.c.b16 %v1388, %v1380
    %v2373 = vpack.c.b16 %v1389, %v1381
    %v2374 = vpack.c.b16 %v1390, %v1382
    %v2375 = vpack.c.b16 %v1391, %v1383
    %v2376 = vpack.c.b16 %v1392, %v1384
    %v2377 = vpack.c.b16 %v1393, %v1385
    %v2378 = vpack.c.b16 %v1394, %v1386
    %v2379 = vpack.c.b16 %v1395, %v1387
    %v2380 = vpack.c.b16 %v1404, %v1396
    %v2381 = vpack.c.b16 %v1405, %v1397
    %v2382 = vpack.c.b16 %v1406, %v1398
    %v2383 = vpack.c.b16 %v1407, %v1399
    %v2384 = vpack.c.b16 %v1408, %v1400
    %v2385 = vpack.c.b16 %v1409, %v1401
    %v2386 = vpack.c.b16 %v1410, %v1402
    %v2387 = vpack.c.b16 %v1411, %v1403
    %v2388 = vpack.c.b16 %v1420, %v1412
    %v2389 = vpack.c.b16 %v1421, %v1413
    %v2390 = vpack.c.b16 %v1422, %v1414
    %v2391 = vpack.c.b16 %v1423, %v1415
    %v2392 = vpack.c.b16 %v1424, %v1416
    %v2393 = vpack.c.b16 %v1425, %v1417
    %v2394 = vpack.c.b16 %v1426, %v1418
    %v2395 = vpack.c.b16 %v1427, %v1419
    %v2396 = vpack.c.b16 %v1436, %v1428
    %v2397 = vpack.c.b16 %v1437, %v1429
    %v2398 = vpack.c.b16 %v1438, %v1430
    %v2399 = vpack.c.b16 %v1439, %v1431
    %v2400 = vpack.c.b16 %v1440, %v1432
    %v2401 = vpack.c.b16 %v1441, %v1433
    %v2402 = vpack.c.b16 %v1442, %v1434
    %v2403 = vpack.c.b16 %v1443, %v1435
    %v2404 = vpack.c.b16 %v1452, %v1444
    %v2405 = vpack.c.b16 %v1453, %v1445
    %v2406 = vpack.c.b16 %v1454, %v1446
    %v2407 = vpack.c.b16 %v1455, %v1447
    %v2408 = vpack.c.b16 %v1456, %v1448
    %v2409 = vpack.c.b16 %v1457, %v1449
    %v2410 = vpack.c.b16 %v1458, %v1450
    %v2411 = vpack.c.b16 %v1459, %v1451
    %v2412 = vpack.c.b16 %v1468, %v1460
    %v2413 = vpack.c.b16 %v1469, %v1461
    %v2414 = vpack.c.b16 %v1470, %v1462
    %v2415 = vpack.c.b16 %v1471, %v1463
    %v2416 = vpack.c.b16 %v1472, %v1464
    %v2417 = vpack.c.b16 %v1473, %v1465
    %v2418 = vpack.c.b16 %v1474, %v1466
    %v2419 = vpack.c.b16 %v1475, %v1467
    %v2420 = vpack.c.b16 %v1484, %v1476
    %v2421 = vpack.c.b16 %v1485, %v1477
    %v2422 = vpack.c.b16 %v1486, %v1478
    %v2423 = vpack.c.b16 %v1487, %v1479
    %v2424 = vpack.c.b16 %v1488, %v1480
    %v2425 = vpack.c.b16 %v1489, %v1481
    %v2426 = vpack.c.b16 %v1490, %v1482
    %v2427 = vpack.c.b16 %v1491, %v1483
    %v2428 = vpack.c.b16 %v1500, %v1492
    %v2429 = vpack.c.b16 %v1501, %v1493
    %v2430 = vpack.c.b16 %v1502, %v1494
    %v2431 = vpack.c.b16 %v1503, %v1495
    %v2432 = vpack.c.b16 %v1504, %v1496
    %v2433 = vpack.c.b16 %v1505, %v1497
    %v2434 = vpack.c.b16 %v1506, %v1498
    %v2435 = vpack.c.b16 %v1507, %v1499
    %v2436 = vpack.c.b16 %v1516, %v1508
    %v2437 = vpack.c.b16 %v1517, %v1509
    %v2438 = vpack.c.b16 %v1518, %v1510
    %v2439 = vpack.c.b16 %v1519, %v1511
    %v2440 = vpack.c.b16 %v1520, %v1512
    %v2441 = vpack.c.b16 %v1521, %v1513
    %v2442 = vpack.c.b16 %v1522, %v1514
    %v2443 = vpack.c.b16 %v1523, %v1515
    %v2444 = vpack.c.b16 %v1532, %v1524
    %v2445 = vpack.c.b16 %v1533, %v1525
    %v2446 = vpack.c.b16 %v1534, %v1526
    %v2447 = vpack.c.b16 %v1535, %v1527
    %v2448 = vpack.c.b16 %v1536, %v1528
    %v2449 = vpack.c.b16 %v1537, %v1529
    %v2450 = vpack.c.b16 %v1538, %v1530
    %v2451 = vpack.c.b16 %v1539, %v1531
    %v2452 = vpack.c.b16 %v1548, %v1540
    %v2453 = vpack.c.b16 %v1549, %v1541
    %v2454 = vpack.c.b16 %v1550, %v1542
    %v2455 = vpack.c.b16 %v1551, %v1543
    %v2456 = vpack.c.b16 %v1552, %v1544
    %v2457 = vpack.c.b16 %v1553, %v1545
    %v2458 = vpack.c.b16 %v1554, %v1546
    %v2459 = vpack.c.b16 %v1555, %v1547
    %v2460 = vpack.c.b16 %v1564, %v1556
    %v2461 = vpack.c.b16 %v1565, %v1557
    %v2462 = vpack.c.b16 %v1566, %v1558
    %v2463 = vpack.c.b16 %v1567, %v1559
    %v2464 = vpack.c.b16 %v1568, %v1560
    %v2465 = vpack.c.b16 %v1569, %v1561
    %v2466 = vpack.c.b16 %v1570, %v1562
    %v2467 = vpack.c.b16 %v1571, %v1563
    %v2468 = vpack.c.b16 %v1580, %v1572
    %v2469 = vpack.c.b16 %v1581, %v1573
    %v2470 = vpack.c.b16 %v1582, %v1574
    %v2471 = vpack.c.b16 %v1583, %v1575
    %v2472 = vpack.c.b16 %v1584, %v1576
    %v2473 = vpack.c.b16 %v1585, %v1577
    %v2474 = vpack.c.b16 %v1586, %v1578
    %v2475 = vpack.c.b16 %v1587, %v1579
    %v2476 = vpack.c.b16 %v1596, %v1588
    %v2477 = vpack.c.b16 %v1597, %v1589
    %v2478 = vpack.c.b16 %v1598, %v1590
    %v2479 = vpack.c.b16 %v1599, %v1591
    %v2480 = vpack.c.b16 %v1600, %v1592
    %v2481 = vpack.c.b16 %v1601, %v1593
    %v2482 = vpack.c.b16 %v1602, %v1594
    %v2483 = vpack.c.b16 %v1603, %v1595
    %v2484 = vpack.c.b16 %v1612, %v1604
    %v2485 = vpack.c.b16 %v1613, %v1605
    %v2486 = vpack.c.b16 %v1614, %v1606
    %v2487 = vpack.c.b16 %v1615, %v1607
    %v2488 = vpack.c.b16 %v1616, %v1608
    %v2489 = vpack.c.b16 %v1617, %v1609
    %v2490 = vpack.c.b16 %v1618, %v1610
    %v2491 = vpack.c.b16 %v1619, %v1611
    %v2492 = vpack.c.b16 %v1628, %v1620
    %v2493 = vpack.c.b16 %v1629, %v1621
    %v2494 = vpack.c.b16 %v1630, %v1622
    %v2495 = vpack.c.b16 %v1631, %v1623
    %v2496 = vpack.c.b16 %v1632, %v1624
    %v2497 = vpack.c.b16 %v1633, %v1625
    %v2498 = vpack.c.b16 %v1634, %v1626
    %v2499 = vpack.c.b16 %v1635, %v1627
    %v2500 = vpack.c.b16 %v1644, %v1636
    %v2501 = vpack.c.b16 %v1645, %v1637
    %v2502 = vpack.c.b16 %v1646, %v1638
    %v2503 = vpack.c.b16 %v1647, %v1639
    %v2504 = vpack.c.b16 %v1648, %v1640
    %v2505 = vpack.c.b16 %v1649, %v1641
    %v2506 = vpack.c.b16 %v1650, %v1642
    %v2507 = vpack.c.b16 %v1651, %v1643
    %v2508 = vpack.c.b16 %v1660, %v1652
    %v2509 = vpack.c.b16 %v1661, %v1653
    %v2510 = vpack.c.b16 %v1662, %v1654
    %v2511 = vpack.c.b16 %v1663, %v1655
    %v2512 = vpack.c.b16 %v1664, %v1656
    %v2513 = vpack.c.b16 %v1665, %v1657
    %v2514 = vpack.c.b16 %v1666, %v1658
    %v2515 = vpack.c.b16 %v1667, %v1659
    %v2516 = vpack.c.b16 %v1676, %v1668
    %v2517 = vpack.c.b16 %v1677, %v1669
    %v2518 = vpack.c.b16 %v1678, %v1670
    %v2519 = vpack.c.b16 %v1679, %v1671
    %v2520 = vpack.c.b16 %v1680, %v1672
    %v2521 = vpack.c.b16 %v1681, %v1673
    %v2522 = vpack.c.b16 %v1682, %v1674
    %v2523 = vpack.c.b16 %v1683, %v1675
    %v2524 = vpack.c.b16 %v1692, %v1684
    %v2525 = vpack.c.b16 %v1693, %v1685
    %v2526 = vpack.c.b16 %v1694, %v1686
    %v2527 = vpack.c.b16 %v1695, %v1687
    %v2528 = vpack.c.b16 %v1696, %v1688
    %v2529 = vpack.c.b16 %v1697, %v1689
    %v2530 = vpack.c.b16 %v1698, %v1690
    %v2531 = vpack.c.b16 %v1699, %v1691
    %v2532 = vpack.c.b16 %v1708, %v1700
    %v2533 = vpack.c.b16 %v1709, %v1701
    %v2534 = vpack.c.b16 %v1710, %v1702
    %v2535 = vpack.c.b16 %v1711, %v1703
    %v2536 = vpack.c.b16 %v1712, %v1704
    %v2537 = vpack.c.b16 %v1713, %v1705
    %v2538 = vpack.c.b16 %v1714, %v1706
    %v2539 = vpack.c.b16 %v1715, %v1707
    %v2540 = vpack.c.b16 %v1724, %v1716
    %v2541 = vpack.c.b16 %v1725, %v1717
    %v2542 = vpack.c.b16 %v1726, %v1718
    %v2543 = vpack.c.b16 %v1727, %v1719
    %v2544 = vpack.c.b16 %v1728, %v1720
    %v2545 = vpack.c.b16 %v1729, %v1721
    %v2546 = vpack.c.b16 %v1730, %v1722
    %v2547 = vpack.c.b16 %v1731, %v1723
    %v2548 = vpack.c.b16 %v1740, %v1732
    %v2549 = vpack.c.b16 %v1741, %v1733
    %v2550 = vpack.c.b16 %v1742, %v1734
    %v2551 = vpack.c.b16 %v1743, %v1735
    %v2552 = vpack.c.b16 %v1744, %v1736
    %v2553 = vpack.c.b16 %v1745, %v1737
    %v2554 = vpack.c.b16 %v1746, %v1738
    %v2555 = vpack.c.b16 %v1747, %v1739
    %v2556 = vpack.c.b16 %v1756, %v1748
    %v2557 = vpack.c.b16 %v1757, %v1749
    %v2558 = vpack.c.b16 %v1758, %v1750
    %v2559 = vpack.c.b16 %v1759, %v1751
    %v2560 = vpack.c.b16 %v1760, %v1752
    %v2561 = vpack.c.b16 %v1761, %v1753
    %v2562 = vpack.c.b16 %v1762, %v1754
    %v2563 = vpack.c.b16 %v1763, %v1755
    %v2564 = vpack.c.b16 %v1772, %v1764
    %v2565 = vpack.c.b16 %v1773, %v1765
    %v2566 = vpack.c.b16 %v1774, %v1766
    %v2567 = vpack.c.b16 %v1775, %v1767
    %v2568 = vpack.c.b16 %v1776, %v1768
    %v2569 = vpack.c.b16 %v1777, %v1769
    %v2570 = vpack.c.b16 %v1778, %v1770
    %v2571 = vpack.c.b16 %v1779, %v1771
    %v2572 = vpack.c.b16 %v1788, %v1780
    %v2573 = vpack.c.b16 %v1789, %v1781
    %v2574 = vpack.c.b16 %v1790, %v1782
    %v2575 = vpack.c.b16 %v1791, %v1783
    %v2576 = vpack.c.b16 %v1792, %v1784
    %v2577 = vpack.c.b16 %v1793, %v1785
    %v2578 = vpack.c.b16 %v1794, %v1786
    %v2579 = vpack.c.b16 %v1795, %v1787
    %v2580 = vpack.c.b16 %v1804, %v1796
    %v2581 = vpack.c.b16 %v1805, %v1797
    %v2582 = vpack.c.b16 %v1806, %v1798
    %v2583 = vpack.c.b16 %v1807, %v1799
    %v2584 = vpack.c.b16 %v1808, %v1800
    %v2585 = vpack.c.b16 %v1809, %v1801
    %v2586 = vpack.c.b16 %v1810, %v1802
    %v2587 = vpack.c.b16 %v1811, %v1803
    %v2588 = vpack.c.b16 %v1820, %v1812
    %v2589 = vpack.c.b16 %v1821, %v1813
    %v2590 = vpack.c.b16 %v1822, %v1814
    %v2591 = vpack.c.b16 %v1823, %v1815
    %v2592 = vpack.c.b16 %v1824, %v1816
    %v2593 = vpack.c.b16 %v1825, %v1817
    %v2594 = vpack.c.b16 %v1826, %v1818
    %v2595 = vpack.c.b16 %v1827, %v1819
    %v2596 = vpack.c.b16 %v1836, %v1828
    %v2597 = vpack.c.b16 %v1837, %v1829
    %v2598 = vpack.c.b16 %v1838, %v1830
    %v2599 = vpack.c.b16 %v1839, %v1831
    %v2600 = vpack.c.b16 %v1840, %v1832
    %v2601 = vpack.c.b16 %v1841, %v1833
    %v2602 = vpack.c.b16 %v1842, %v1834
    %v2603 = vpack.c.b16 %v1843, %v1835
    %v2604 = vpack.c.b16 %v1852, %v1844
    %v2605 = vpack.c.b16 %v1853, %v1845
    %v2606 = vpack.c.b16 %v1854, %v1846
    %v2607 = vpack.c.b16 %v1855, %v1847
    %v2608 = vpack.c.b16 %v1856, %v1848
    %v2609 = vpack.c.b16 %v1857, %v1849
    %v2610 = vpack.c.b16 %v1858, %v1850
    %v2611 = vpack.c.b16 %v1859, %v1851
    %v2612 = vpack.c.b16 %v1868, %v1860
    %v2613 = vpack.c.b16 %v1869, %v1861
    %v2614 = vpack.c.b16 %v1870, %v1862
    %v2615 = vpack.c.b16 %v1871, %v1863
    %v2616 = vpack.c.b16 %v1872, %v1864
    %v2617 = vpack.c.b16 %v1873, %v1865
    %v2618 = vpack.c.b16 %v1874, %v1866
    %v2619 = vpack.c.b16 %v1875, %v1867
    %v2620 = vpack.c.b16 %v1884, %v1876
    %v2621 = vpack.c.b16 %v1885, %v1877
    %v2622 = vpack.c.b16 %v1886, %v1878
    %v2623 = vpack.c.b16 %v1887, %v1879
    %v2624 = vpack.c.b16 %v1888, %v1880
    %v2625 = vpack.c.b16 %v1889, %v1881
    %v2626 = vpack.c.b16 %v1890, %v1882
    %v2627 = vpack.c.b16 %v1891, %v1883
    %v2628 = vpack.c.b16 %v1900, %v1892
    %v2629 = vpack.c.b16 %v1901, %v1893
    %v2630 = vpack.c.b16 %v1902, %v1894
    %v2631 = vpack.c.b16 %v1903, %v1895
    %v2632 = vpack.c.b16 %v1904, %v1896
    %v2633 = vpack.c.b16 %v1905, %v1897
    %v2634 = vpack.c.b16 %v1906, %v1898
    %v2635 = vpack.c.b16 %v1907, %v1899
    %v2636 = vpack.c.b16 %v1916, %v1908
    %v2637 = vpack.c.b16 %v1917, %v1909
    %v2638 = vpack.c.b16 %v1918, %v1910
    %v2639 = vpack.c.b16 %v1919, %v1911
    %v2640 = vpack.c.b16 %v1920, %v1912
    %v2641 = vpack.c.b16 %v1921, %v1913
    %v2642 = vpack.c.b16 %v1922, %v1914
    %v2643 = vpack.c.b16 %v1923, %v1915
    %v2644 = vpack.c.b16 %v1932, %v1924
    %v2645 = vpack.c.b16 %v1933, %v1925
    %v2646 = vpack.c.b16 %v1934, %v1926
    %v2647 = vpack.c.b16 %v1935, %v1927
    %v2648 = vpack.c.b16 %v1936, %v1928
    %v2649 = vpack.c.b16 %v1937, %v1929
    %v2650 = vpack.c.b16 %v1938, %v1930
    %v2651 = vpack.c.b16 %v1939, %v1931
    %v2652 = vpack.c.b16 %v1948, %v1940
    %v2653 = vpack.c.b16 %v1949, %v1941
    %v2654 = vpack.c.b16 %v1950, %v1942
    %v2655 = vpack.c.b16 %v1951, %v1943
    %v2656 = vpack.c.b16 %v1952, %v1944
    %v2657 = vpack.c.b16 %v1953, %v1945
    %v2658 = vpack.c.b16 %v1954, %v1946
    %v2659 = vpack.c.b16 %v1955, %v1947
    %v2660 = vpack.c.b16 %v1964, %v1956
    %v2661 = vpack.c.b16 %v1965, %v1957
    %v2662 = vpack.c.b16 %v1966, %v1958
    %v2663 = vpack.c.b16 %v1967, %v1959
    %v2664 = vpack.c.b16 %v1968, %v1960
    %v2665 = vpack.c.b16 %v1969, %v1961
    %v2666 = vpack.c.b16 %v1970, %v1962
    %v2667 = vpack.c.b16 %v1971, %v1963
    %v2668 = vpack.c.b16 %v1980, %v1972
    %v2669 = vpack.c.b16 %v1981, %v1973
    %v2670 = vpack.c.b16 %v1982, %v1974
    %v2671 = vpack.c.b16 %v1983, %v1975
    %v2672 = vpack.c.b16 %v1984, %v1976
    %v2673 = vpack.c.b16 %v1985, %v1977
    %v2674 = vpack.c.b16 %v1986, %v1978
    %v2675 = vpack.c.b16 %v1987, %v1979
    %v2676 = vpack.c.b16 %v1996, %v1988
    %v2677 = vpack.c.b16 %v1997, %v1989
    %v2678 = vpack.c.b16 %v1998, %v1990
    %v2679 = vpack.c.b16 %v1999, %v1991
    %v2680 = vpack.c.b16 %v2000, %v1992
    %v2681 = vpack.c.b16 %v2001, %v1993
    %v2682 = vpack.c.b16 %v2002, %v1994
    %v2683 = vpack.c.b16 %v2003, %v1995
    %v2684 = vpack.c.b16 %v2012, %v2004
    %v2685 = vpack.c.b16 %v2013, %v2005
    %v2686 = vpack.c.b16 %v2014, %v2006
    %v2687 = vpack.c.b16 %v2015, %v2007
    %v2688 = vpack.c.b16 %v2016, %v2008
    %v2689 = vpack.c.b16 %v2017, %v2009
    %v2690 = vpack.c.b16 %v2018, %v2010
    %v2691 = vpack.c.b16 %v2019, %v2011
    %v2692 = vpack.c.b16 %v2028, %v2020
    %v2693 = vpack.c.b16 %v2029, %v2021
    %v2694 = vpack.c.b16 %v2030, %v2022
    %v2695 = vpack.c.b16 %v2031, %v2023
    %v2696 = vpack.c.b16 %v2032, %v2024
    %v2697 = vpack.c.b16 %v2033, %v2025
    %v2698 = vpack.c.b16 %v2034, %v2026
    %v2699 = vpack.c.b16 %v2035, %v2027
    %v2700 = vpack.c.b16 %v2044, %v2036
    %v2701 = vpack.c.b16 %v2045, %v2037
    %v2702 = vpack.c.b16 %v2046, %v2038
    %v2703 = vpack.c.b16 %v2047, %v2039
    %v2704 = vpack.c.b16 %v2048, %v2040
    %v2705 = vpack.c.b16 %v2049, %v2041
    %v2706 = vpack.c.b16 %v2050, %v2042
    %v2707 = vpack.c.b16 %v2051, %v2043
    %v2708 = vpack.c.b16 %v2060, %v2052
    %v2709 = vpack.c.b16 %v2061, %v2053
    %v2710 = vpack.c.b16 %v2062, %v2054
    %v2711 = vpack.c.b16 %v2063, %v2055
    %v2712 = vpack.c.b16 %v2064, %v2056
    %v2713 = vpack.c.b16 %v2065, %v2057
    %v2714 = vpack.c.b16 %v2066, %v2058
    %v2715 = vpack.c.b16 %v2067, %v2059
    %v2716 = vpack.c.b16 %v2076, %v2068
    %v2717 = vpack.c.b16 %v2077, %v2069
    %v2718 = vpack.c.b16 %v2078, %v2070
    %v2719 = vpack.c.b16 %v2079, %v2071
    %v2720 = vpack.c.b16 %v2080, %v2072
    %v2721 = vpack.c.b16 %v2081, %v2073
    %v2722 = vpack.c.b16 %v2082, %v2074
    %v2723 = vpack.c.b16 %v2083, %v2075
    %v2724 = vpack.c.b16 %v2092, %v2084
    %v2725 = vpack.c.b16 %v2093, %v2085
    %v2726 = vpack.c.b16 %v2094, %v2086
    %v2727 = vpack.c.b16 %v2095, %v2087
    %v2728 = vpack.c.b16 %v2096, %v2088
    %v2729 = vpack.c.b16 %v2097, %v2089
    %v2730 = vpack.c.b16 %v2098, %v2090
    %v2731 = vpack.c.b16 %v2099, %v2091
    %v2732 = vpack.c.b16 %v2108, %v2100
    %v2733 = vpack.c.b16 %v2109, %v2101
    %v2734 = vpack.c.b16 %v2110, %v2102
    %v2735 = vpack.c.b16 %v2111, %v2103
    %v2736 = vpack.c.b16 %v2112, %v2104
    %v2737 = vpack.c.b16 %v2113, %v2105
    %v2738 = vpack.c.b16 %v2114, %v2106
    %v2739 = vpack.c.b16 %v2115, %v2107
    %v2740 = vpack.c.b16 %v2124, %v2116
    %v2741 = vpack.c.b16 %v2125, %v2117
    %v2742 = vpack.c.b16 %v2126, %v2118
    %v2743 = vpack.c.b16 %v2127, %v2119
    %v2744 = vpack.c.b16 %v2128, %v2120
    %v2745 = vpack.c.b16 %v2129, %v2121
    %v2746 = vpack.c.b16 %v2130, %v2122
    %v2747 = vpack.c.b16 %v2131, %v2123
    %v2748 = vpack.c.b16 %v2140, %v2132
    %v2749 = vpack.c.b16 %v2141, %v2133
    %v2750 = vpack.c.b16 %v2142, %v2134
    %v2751 = vpack.c.b16 %v2143, %v2135
    %v2752 = vpack.c.b16 %v2144, %v2136
    %v2753 = vpack.c.b16 %v2145, %v2137
    %v2754 = vpack.c.b16 %v2146, %v2138
    %v2755 = vpack.c.b16 %v2147, %v2139
    %v2756 = vpack.c.b16 %v2156, %v2148
    %v2757 = vpack.c.b16 %v2157, %v2149
    %v2758 = vpack.c.b16 %v2158, %v2150
    %v2759 = vpack.c.b16 %v2159, %v2151
    %v2760 = vpack.c.b16 %v2160, %v2152
    %v2761 = vpack.c.b16 %v2161, %v2153
    %v2762 = vpack.c.b16 %v2162, %v2154
    %v2763 = vpack.c.b16 %v2163, %v2155
    %v2764 = vpack.c.b16 %v2172, %v2164
    %v2765 = vpack.c.b16 %v2173, %v2165
    %v2766 = vpack.c.b16 %v2174, %v2166
    %v2767 = vpack.c.b16 %v2175, %v2167
    %v2768 = vpack.c.b16 %v2176, %v2168
    %v2769 = vpack.c.b16 %v2177, %v2169
    %v2770 = vpack.c.b16 %v2178, %v2170
    %v2771 = vpack.c.b16 %v2179, %v2171
    %v2772 = vpack.c.b16 %v2188, %v2180
    %v2773 = vpack.c.b16 %v2189, %v2181
    %v2774 = vpack.c.b16 %v2190, %v2182
    %v2775 = vpack.c.b16 %v2191, %v2183
    %v2776 = vpack.c.b16 %v2192, %v2184
    %v2777 = vpack.c.b16 %v2193, %v2185
    %v2778 = vpack.c.b16 %v2194, %v2186
    %v2779 = vpack.c.b16 %v2195, %v2187
    %v2780 = vpack.c.b16 %v2204, %v2196
    %v2781 = vpack.c.b16 %v2205, %v2197
    %v2782 = vpack.c.b16 %v2206, %v2198
    %v2783 = vpack.c.b16 %v2207, %v2199
    %v2784 = vpack.c.b16 %v2208, %v2200
    %v2785 = vpack.c.b16 %v2209, %v2201
    %v2786 = vpack.c.b16 %v2210, %v2202
    %v2787 = vpack.c.b16 %v2211, %v2203
    %v2788 = vpack.c.b16 %v2220, %v2212
    %v2789 = vpack.c.b16 %v2221, %v2213
    %v2790 = vpack.c.b16 %v2222, %v2214
    %v2791 = vpack.c.b16 %v2223, %v2215
    %v2792 = vpack.c.b16 %v2224, %v2216
    %v2793 = vpack.c.b16 %v2225, %v2217
    %v2794 = vpack.c.b16 %v2226, %v2218
    %v2795 = vpack.c.b16 %v2227, %v2219
    %v2796 = vpack.c.b16 %v2236, %v2228
    %v2797 = vpack.c.b16 %v2237, %v2229
    %v2798 = vpack.c.b16 %v2238, %v2230
    %v2799 = vpack.c.b16 %v2239, %v2231
    %v2800 = vpack.c.b16 %v2240, %v2232
    %v2801 = vpack.c.b16 %v2241, %v2233
    %v2802 = vpack.c.b16 %v2242, %v2234
    %v2803 = vpack.c.b16 %v2243, %v2235
    %v2804 = vpack.c.b16 %v2252, %v2244
    %v2805 = vpack.c.b16 %v2253, %v2245
    %v2806 = vpack.c.b16 %v2254, %v2246
    %v2807 = vpack.c.b16 %v2255, %v2247
    %v2808 = vpack.c.b16 %v2256, %v2248
    %v2809 = vpack.c.b16 %v2257, %v2249
    %v2810 = vpack.c.b16 %v2258, %v2250
    %v2811 = vpack.c.b16 %v2259, %v2251
    %v2812 = vpack.c.b16 %v2268, %v2260
    %v2813 = vpack.c.b16 %v2269, %v2261
    %v2814 = vpack.c.b16 %v2270, %v2262
    %v2815 = vpack.c.b16 %v2271, %v2263
    %v2816 = vpack.c.b16 %v2272, %v2264
    %v2817 = vpack.c.b16 %v2273, %v2265
    %v2818 = vpack.c.b16 %v2274, %v2266
    %v2819 = vpack.c.b16 %v2275, %v2267
    %v2820 = vpack.c.b16 %v2284, %v2276
    %v2821 = vpack.c.b16 %v2285, %v2277
    %v2822 = vpack.c.b16 %v2286, %v2278
    %v2823 = vpack.c.b16 %v2287, %v2279
    %v2824 = vpack.c.b16 %v2288, %v2280
    %v2825 = vpack.c.b16 %v2289, %v2281
    %v2826 = vpack.c.b16 %v2290, %v2282
    %v2827 = vpack.c.b16 %v2291, %v2283
    %v2828 = vpack.c.b16 %v2300, %v2292
    %v2829 = vpack.c.b16 %v2301, %v2293
    %v2830 = vpack.c.b16 %v2302, %v2294
    %v2831 = vpack.c.b16 %v2303, %v2295
    %v2832 = vpack.c.b16 %v2304, %v2296
    %v2833 = vpack.c.b16 %v2305, %v2297
    %v2834 = vpack.c.b16 %v2306, %v2298
    %v2835 = vpack.c.b16 %v2307, %v2299
    %v2836 = vpack.c.b16 %v2316, %v2308
    %v2837 = vpack.c.b16 %v2317, %v2309
    %v2838 = vpack.c.b16 %v2318, %v2310
    %v2839 = vpack.c.b16 %v2319, %v2311
    %v2840 = vpack.c.b16 %v2320, %v2312
    %v2841 = vpack.c.b16 %v2321, %v2313
    %v2842 = vpack.c.b16 %v2322, %v2314
    %v2843 = vpack.c.b16 %v2323, %v2315
    %v2844 = vpack.c.b16 %v2332, %v2324
    %v2845 = vpack.c.b16 %v2333, %v2325
    %v2846 = vpack.c.b16 %v2334, %v2326
    %v2847 = vpack.c.b16 %v2335, %v2327
    %v2848 = vpack.c.b16 %v2336, %v2328
    %v2849 = vpack.c.b16 %v2337, %v2329
    %v2850 = vpack.c.b16 %v2338, %v2330
    %v2851 = vpack.c.b16 %v2339, %v2331
    %3364 = vmatprep.subr.bf16.mxu0 %v2341
    %3365 = vmatpush1.bf16.msra.mxu0 %v2340
    %3366 = vmatprep.subr.bf16.mxu0 %v2349
    %3367 = vmatpush1.bf16.msra.mxu0 %v2348
    %3368 = vmatprep.subr.bf16.mxu0 %v2357
    %3369 = vmatpush1.bf16.msra.mxu0 %v2356
    %3370 = vmatprep.subr.bf16.mxu0 %v2365
    %3371 = vmatpush1.bf16.msra.mxu0 %v2364
    %3372 = vmatprep.subr.bf16.mxu0 %v2373
    %3373 = vmatpush1.bf16.msra.mxu0 %v2372
    %3374 = vmatprep.subr.bf16.mxu0 %v2381
    %3375 = vmatpush1.bf16.msra.mxu0 %v2380
    %3376 = vmatprep.subr.bf16.mxu0 %v2389
    %3377 = vmatpush1.bf16.msra.mxu0 %v2388
    %3378 = vmatprep.subr.bf16.mxu0 %v2397
    %3379 = vmatpush1.bf16.msra.mxu0 %v2396
    %3380 = vmatprep.subr.bf16.mxu0 %v2405
    %3381 = vmatpush1.bf16.msra.mxu0 %v2404
    %3382 = vmatprep.subr.bf16.mxu0 %v2413
    %3383 = vmatpush1.bf16.msra.mxu0 %v2412
    %3384 = vmatprep.subr.bf16.mxu0 %v2421
    %3385 = vmatpush1.bf16.msra.mxu0 %v2420
    %3386 = vmatprep.subr.bf16.mxu0 %v2429
    %3387 = vmatpush1.bf16.msra.mxu0 %v2428
    %3388 = vmatprep.subr.bf16.mxu0 %v2437
    %3389 = vmatpush1.bf16.msra.mxu0 %v2436
    %3390 = vmatprep.subr.bf16.mxu0 %v2445
    %3391 = vmatpush1.bf16.msra.mxu0 %v2444
    %3392 = vmatprep.subr.bf16.mxu0 %v2453
    %3393 = vmatpush1.bf16.msra.mxu0 %v2452
    %3394 = vmatprep.subr.bf16.mxu0 %v2461
    %3395 = vmatpush1.bf16.msra.mxu0 %v2460
    %3396 = vmatprep.mubr.bf16.mxu0 %v243
    %3397 = vmatmul.mubr.bf16.gmra.mrb[0].mxu0 %v242
    %v3398 = vpop.f32.mrb[0].mxu0
    %v3399 = vadd.f32 %v767, %v3398
    %v3400 = vpop.f32.mrb[0].mxu0
    %v3401 = vadd.f32 %v771, %v3400
    %v3402 = vpop.f32.mrb[0].mxu0
    %v3403 = vadd.f32 %v767, %v3402
    %v3404 = vpop.f32.mrb[0].mxu0
    %v3405 = vadd.f32 %v771, %v3404
    %3406 = vdwg.mxu0
    %3407 = vmatprep.subr.bf16.mxu0 %v2469
    %3408 = vmatpush1.bf16.msra.mxu0 %v2468
    %3409 = vmatprep.subr.bf16.mxu0 %v2477
    %3410 = vmatpush1.bf16.msra.mxu0 %v2476
    %3411 = vmatprep.subr.bf16.mxu0 %v2485
    %3412 = vmatpush1.bf16.msra.mxu0 %v2484
    %3413 = vmatprep.subr.bf16.mxu0 %v2493
    %3414 = vmatpush1.bf16.msra.mxu0 %v2492
    %3415 = vmatprep.subr.bf16.mxu0 %v2501
    %3416 = vmatpush1.bf16.msra.mxu0 %v2500
    %3417 = vmatprep.subr.bf16.mxu0 %v2509
    %3418 = vmatpush1.bf16.msra.mxu0 %v2508
    %3419 = vmatprep.subr.bf16.mxu0 %v2517
    %3420 = vmatpush1.bf16.msra.mxu0 %v2516
    %3421 = vmatprep.subr.bf16.mxu0 %v2525
    %3422 = vmatpush1.bf16.msra.mxu0 %v2524
    %3423 = vmatprep.subr.bf16.mxu0 %v2533
    %3424 = vmatpush1.bf16.msra.mxu0 %v2532
    %3425 = vmatprep.subr.bf16.mxu0 %v2541
    %3426 = vmatpush1.bf16.msra.mxu0 %v2540
    %3427 = vmatprep.subr.bf16.mxu0 %v2549
    %3428 = vmatpush1.bf16.msra.mxu0 %v2548
    %3429 = vmatprep.subr.bf16.mxu0 %v2557
    %3430 = vmatpush1.bf16.msra.mxu0 %v2556
    %3431 = vmatprep.subr.bf16.mxu0 %v2565
    %3432 = vmatpush1.bf16.msra.mxu0 %v2564
    %3433 = vmatprep.subr.bf16.mxu0 %v2573
    %3434 = vmatpush1.bf16.msra.mxu0 %v2572
    %3435 = vmatprep.subr.bf16.mxu0 %v2581
    %3436 = vmatpush1.bf16.msra.mxu0 %v2580
    %3437 = vmatprep.subr.bf16.mxu0 %v2589
    %3438 = vmatpush1.bf16.msra.mxu0 %v2588
    %3439 = vmatprep.mubr.bf16.mxu0 %v245
    %3440 = vmatmul.mubr.bf16.gmra.mrb[0].mxu0 %v244
    %v3441 = vpop.f32.mrb[0].mxu0
    %v3442 = vadd.f32 %v3399, %v3441
    %v3443 = vpop.f32.mrb[0].mxu0
    %v3444 = vadd.f32 %v3401, %v3443
    %v3445 = vpop.f32.mrb[0].mxu0
    %v3446 = vadd.f32 %v3403, %v3445
    %v3447 = vpop.f32.mrb[0].mxu0
    %v3448 = vadd.f32 %v3405, %v3447
    %3449 = vdwg.mxu0
    %3450 = vmatprep.subr.bf16.mxu0 %v2597
    %3451 = vmatpush1.bf16.msra.mxu0 %v2596
    %3452 = vmatprep.subr.bf16.mxu0 %v2605
    %3453 = vmatpush1.bf16.msra.mxu0 %v2604
    %3454 = vmatprep.subr.bf16.mxu0 %v2613
    %3455 = vmatpush1.bf16.msra.mxu0 %v2612
    %3456 = vmatprep.subr.bf16.mxu0 %v2621
    %3457 = vmatpush1.bf16.msra.mxu0 %v2620
    %3458 = vmatprep.subr.bf16.mxu0 %v2629
    %3459 = vmatpush1.bf16.msra.mxu0 %v2628
    %3460 = vmatprep.subr.bf16.mxu0 %v2637
    %3461 = vmatpush1.bf16.msra.mxu0 %v2636
    %3462 = vmatprep.subr.bf16.mxu0 %v2645
    %3463 = vmatpush1.bf16.msra.mxu0 %v2644
    %3464 = vmatprep.subr.bf16.mxu0 %v2653
    %3465 = vmatpush1.bf16.msra.mxu0 %v2652
    %3466 = vmatprep.subr.bf16.mxu0 %v2661
    %3467 = vmatpush1.bf16.msra.mxu0 %v2660
    %3468 = vmatprep.subr.bf16.mxu0 %v2669
    %3469 = vmatpush1.bf16.msra.mxu0 %v2668
    %3470 = vmatprep.subr.bf16.mxu0 %v2677
    %3471 = vmatpush1.bf16.msra.mxu0 %v2676
    %3472 = vmatprep.subr.bf16.mxu0 %v2685
    %3473 = vmatpush1.bf16.msra.mxu0 %v2684
    %3474 = vmatprep.subr.bf16.mxu0 %v2693
    %3475 = vmatpush1.bf16.msra.mxu0 %v2692
    %3476 = vmatprep.subr.bf16.mxu0 %v2701
    %3477 = vmatpush1.bf16.msra.mxu0 %v2700
    %3478 = vmatprep.subr.bf16.mxu0 %v2709
    %3479 = vmatpush1.bf16.msra.mxu0 %v2708
    %3480 = vmatprep.subr.bf16.mxu0 %v2717
    %3481 = vmatpush1.bf16.msra.mxu0 %v2716
    %3482 = vmatprep.mubr.bf16.mxu0 %v247
    %3483 = vmatmul.mubr.bf16.gmra.mrb[0].mxu0 %v246
    %v3484 = vpop.f32.mrb[0].mxu0
    %v3485 = vadd.f32 %v3442, %v3484
    %v3486 = vpop.f32.mrb[0].mxu0
    %v3487 = vadd.f32 %v3444, %v3486
    %v3488 = vpop.f32.mrb[0].mxu0
    %v3489 = vadd.f32 %v3446, %v3488
    %v3490 = vpop.f32.mrb[0].mxu0
    %v3491 = vadd.f32 %v3448, %v3490
    %3492 = vdwg.mxu0
    %3493 = vmatprep.subr.bf16.mxu0 %v2725
    %3494 = vmatpush1.bf16.msra.mxu0 %v2724
    %3495 = vmatprep.subr.bf16.mxu0 %v2733
    %3496 = vmatpush1.bf16.msra.mxu0 %v2732
    %3497 = vmatprep.subr.bf16.mxu0 %v2741
    %3498 = vmatpush1.bf16.msra.mxu0 %v2740
    %3499 = vmatprep.subr.bf16.mxu0 %v2749
    %3500 = vmatpush1.bf16.msra.mxu0 %v2748
    %3501 = vmatprep.subr.bf16.mxu0 %v2757
    %3502 = vmatpush1.bf16.msra.mxu0 %v2756
    %3503 = vmatprep.subr.bf16.mxu0 %v2765
    %3504 = vmatpush1.bf16.msra.mxu0 %v2764
    %3505 = vmatprep.subr.bf16.mxu0 %v2773
    %3506 = vmatpush1.bf16.msra.mxu0 %v2772
    %3507 = vmatprep.subr.bf16.mxu0 %v2781
    %3508 = vmatpush1.bf16.msra.mxu0 %v2780
    %3509 = vmatprep.subr.bf16.mxu0 %v2789
    %3510 = vmatpush1.bf16.msra.mxu0 %v2788
    %3511 = vmatprep.subr.bf16.mxu0 %v2797
    %3512 = vmatpush1.bf16.msra.mxu0 %v2796
    %3513 = vmatprep.subr.bf16.mxu0 %v2805
    %3514 = vmatpush1.bf16.msra.mxu0 %v2804
    %3515 = vmatprep.subr.bf16.mxu0 %v2813
    %3516 = vmatpush1.bf16.msra.mxu0 %v2812
    %3517 = vmatprep.subr.bf16.mxu0 %v2821
    %3518 = vmatpush1.bf16.msra.mxu0 %v2820
    %3519 = vmatprep.subr.bf16.mxu0 %v2829
    %3520 = vmatpush1.bf16.msra.mxu0 %v2828
    %3521 = vmatprep.subr.bf16.mxu0 %v2837
    %3522 = vmatpush1.bf16.msra.mxu0 %v2836
    %3523 = vmatprep.subr.bf16.mxu0 %v2845
    %3524 = vmatpush1.bf16.msra.mxu0 %v2844
    %3525 = vmatprep.mubr.bf16.mxu0 %v249
    %3526 = vmatmul.mubr.bf16.gmra.mrb[0].mxu0 %v248
    %v3527 = vpop.f32.mrb[0].mxu0
    %v3528 = vadd.f32 %v3485, %v3527
    %v3529 = vpop.f32.mrb[0].mxu0
    %v3530 = vadd.f32 %v3487, %v3529
    %v3531 = vpop.f32.mrb[0].mxu0
    %v3532 = vadd.f32 %v3489, %v3531
    %v3533 = vpop.f32.mrb[0].mxu0
    %v3534 = vadd.f32 %v3491, %v3533
    %3535 = vdwg.mxu0
    %3536 = vmatprep.subr.bf16.mxu0 %v2343
    %3537 = vmatpush1.bf16.msra.mxu0 %v2342
    %3538 = vmatprep.subr.bf16.mxu0 %v2351
    %3539 = vmatpush1.bf16.msra.mxu0 %v2350
    %3540 = vmatprep.subr.bf16.mxu0 %v2359
    %3541 = vmatpush1.bf16.msra.mxu0 %v2358
    %3542 = vmatprep.subr.bf16.mxu0 %v2367
    %3543 = vmatpush1.bf16.msra.mxu0 %v2366
    %3544 = vmatprep.subr.bf16.mxu0 %v2375
    %3545 = vmatpush1.bf16.msra.mxu0 %v2374
    %3546 = vmatprep.subr.bf16.mxu0 %v2383
    %3547 = vmatpush1.bf16.msra.mxu0 %v2382
    %3548 = vmatprep.subr.bf16.mxu0 %v2391
    %3549 = vmatpush1.bf16.msra.mxu0 %v2390
    %3550 = vmatprep.subr.bf16.mxu0 %v2399
    %3551 = vmatpush1.bf16.msra.mxu0 %v2398
    %3552 = vmatprep.subr.bf16.mxu0 %v2407
    %3553 = vmatpush1.bf16.msra.mxu0 %v2406
    %3554 = vmatprep.subr.bf16.mxu0 %v2415
    %3555 = vmatpush1.bf16.msra.mxu0 %v2414
    %3556 = vmatprep.subr.bf16.mxu0 %v2423
    %3557 = vmatpush1.bf16.msra.mxu0 %v2422
    %3558 = vmatprep.subr.bf16.mxu0 %v2431
    %3559 = vmatpush1.bf16.msra.mxu0 %v2430
    %3560 = vmatprep.subr.bf16.mxu0 %v2439
    %3561 = vmatpush1.bf16.msra.mxu0 %v2438
    %3562 = vmatprep.subr.bf16.mxu0 %v2447
    %3563 = vmatpush1.bf16.msra.mxu0 %v2446
    %3564 = vmatprep.subr.bf16.mxu0 %v2455
    %3565 = vmatpush1.bf16.msra.mxu0 %v2454
    %3566 = vmatprep.subr.bf16.mxu0 %v2463
    %3567 = vmatpush1.bf16.msra.mxu0 %v2462
    %3568 = vmatprep.mubr.bf16.mxu0 %v243
    %3569 = vmatmul.mubr.bf16.gmra.mrb[0].mxu0 %v242
    %v3570 = vpop.f32.mrb[0].mxu0
    %v3571 = vadd.f32 %v775, %v3570
    %v3572 = vpop.f32.mrb[0].mxu0
    %v3573 = vadd.f32 %v779, %v3572
    %v3574 = vpop.f32.mrb[0].mxu0
    %v3575 = vadd.f32 %v775, %v3574
    %v3576 = vpop.f32.mrb[0].mxu0
    %v3577 = vadd.f32 %v779, %v3576
    %3578 = vdwg.mxu0
    %3579 = vmatprep.subr.bf16.mxu0 %v2471
    %3580 = vmatpush1.bf16.msra.mxu0 %v2470
    %3581 = vmatprep.subr.bf16.mxu0 %v2479
    %3582 = vmatpush1.bf16.msra.mxu0 %v2478
    %3583 = vmatprep.subr.bf16.mxu0 %v2487
    %3584 = vmatpush1.bf16.msra.mxu0 %v2486
    %3585 = vmatprep.subr.bf16.mxu0 %v2495
    %3586 = vmatpush1.bf16.msra.mxu0 %v2494
    %3587 = vmatprep.subr.bf16.mxu0 %v2503
    %3588 = vmatpush1.bf16.msra.mxu0 %v2502
    %3589 = vmatprep.subr.bf16.mxu0 %v2511
    %3590 = vmatpush1.bf16.msra.mxu0 %v2510
    %3591 = vmatprep.subr.bf16.mxu0 %v2519
    %3592 = vmatpush1.bf16.msra.mxu0 %v2518
    %3593 = vmatprep.subr.bf16.mxu0 %v2527
    %3594 = vmatpush1.bf16.msra.mxu0 %v2526
    %3595 = vmatprep.subr.bf16.mxu0 %v2535
    %3596 = vmatpush1.bf16.msra.mxu0 %v2534
    %3597 = vmatprep.subr.bf16.mxu0 %v2543
    %3598 = vmatpush1.bf16.msra.mxu0 %v2542
    %3599 = vmatprep.subr.bf16.mxu0 %v2551
    %3600 = vmatpush1.bf16.msra.mxu0 %v2550
    %3601 = vmatprep.subr.bf16.mxu0 %v2559
    %3602 = vmatpush1.bf16.msra.mxu0 %v2558
    %3603 = vmatprep.subr.bf16.mxu0 %v2567
    %3604 = vmatpush1.bf16.msra.mxu0 %v2566
    %3605 = vmatprep.subr.bf16.mxu0 %v2575
    %3606 = vmatpush1.bf16.msra.mxu0 %v2574
    %3607 = vmatprep.subr.bf16.mxu0 %v2583
    %3608 = vmatpush1.bf16.msra.mxu0 %v2582
    %3609 = vmatprep.subr.bf16.mxu0 %v2591
    %3610 = vmatpush1.bf16.msra.mxu0 %v2590
    %3611 = vmatprep.mubr.bf16.mxu0 %v245
    %3612 = vmatmul.mubr.bf16.gmra.mrb[0].mxu0 %v244
    %v3613 = vpop.f32.mrb[0].mxu0
    %v3614 = vadd.f32 %v3571, %v3613
    %v3615 = vpop.f32.mrb[0].mxu0
    %v3616 = vadd.f32 %v3573, %v3615
    %v3617 = vpop.f32.mrb[0].mxu0
    %v3618 = vadd.f32 %v3575, %v3617
    %v3619 = vpop.f32.mrb[0].mxu0
    %v3620 = vadd.f32 %v3577, %v3619
    %3621 = vdwg.mxu0
    %3622 = vmatprep.subr.bf16.mxu0 %v2599
    %3623 = vmatpush1.bf16.msra.mxu0 %v2598
    %3624 = vmatprep.subr.bf16.mxu0 %v2607
    %3625 = vmatpush1.bf16.msra.mxu0 %v2606
    %3626 = vmatprep.subr.bf16.mxu0 %v2615
    %3627 = vmatpush1.bf16.msra.mxu0 %v2614
    %3628 = vmatprep.subr.bf16.mxu0 %v2623
    %3629 = vmatpush1.bf16.msra.mxu0 %v2622
    %3630 = vmatprep.subr.bf16.mxu0 %v2631
    %3631 = vmatpush1.bf16.msra.mxu0 %v2630
    %3632 = vmatprep.subr.bf16.mxu0 %v2639
    %3633 = vmatpush1.bf16.msra.mxu0 %v2638
    %3634 = vmatprep.subr.bf16.mxu0 %v2647
    %3635 = vmatpush1.bf16.msra.mxu0 %v2646
    %3636 = vmatprep.subr.bf16.mxu0 %v2655
    %3637 = vmatpush1.bf16.msra.mxu0 %v2654
    %3638 = vmatprep.subr.bf16.mxu0 %v2663
    %3639 = vmatpush1.bf16.msra.mxu0 %v2662
    %3640 = vmatprep.subr.bf16.mxu0 %v2671
    %3641 = vmatpush1.bf16.msra.mxu0 %v2670
    %3642 = vmatprep.subr.bf16.mxu0 %v2679
    %3643 = vmatpush1.bf16.msra.mxu0 %v2678
    %3644 = vmatprep.subr.bf16.mxu0 %v2687
    %3645 = vmatpush1.bf16.msra.mxu0 %v2686
    %3646 = vmatprep.subr.bf16.mxu0 %v2695
    %3647 = vmatpush1.bf16.msra.mxu0 %v2694
    %3648 = vmatprep.subr.bf16.mxu0 %v2703
    %3649 = vmatpush1.bf16.msra.mxu0 %v2702
    %3650 = vmatprep.subr.bf16.mxu0 %v2711
    %3651 = vmatpush1.bf16.msra.mxu0 %v2710
    %3652 = vmatprep.subr.bf16.mxu0 %v2719
    %3653 = vmatpush1.bf16.msra.mxu0 %v2718
    %3654 = vmatprep.mubr.bf16.mxu0 %v247
    %3655 = vmatmul.mubr.bf16.gmra.mrb[0].mxu0 %v246
    %v3656 = vpop.f32.mrb[0].mxu0
    %v3657 = vadd.f32 %v3614, %v3656
    %v3658 = vpop.f32.mrb[0].mxu0
    %v3659 = vadd.f32 %v3616, %v3658
    %v3660 = vpop.f32.mrb[0].mxu0
    %v3661 = vadd.f32 %v3618, %v3660
    %v3662 = vpop.f32.mrb[0].mxu0
    %v3663 = vadd.f32 %v3620, %v3662
    %3664 = vdwg.mxu0
    %3665 = vmatprep.subr.bf16.mxu0 %v2727
    %3666 = vmatpush1.bf16.msra.mxu0 %v2726
    %3667 = vmatprep.subr.bf16.mxu0 %v2735
    %3668 = vmatpush1.bf16.msra.mxu0 %v2734
    %3669 = vmatprep.subr.bf16.mxu0 %v2743
    %3670 = vmatpush1.bf16.msra.mxu0 %v2742
    %3671 = vmatprep.subr.bf16.mxu0 %v2751
    %3672 = vmatpush1.bf16.msra.mxu0 %v2750
    %3673 = vmatprep.subr.bf16.mxu0 %v2759
    %3674 = vmatpush1.bf16.msra.mxu0 %v2758
    %3675 = vmatprep.subr.bf16.mxu0 %v2767
    %3676 = vmatpush1.bf16.msra.mxu0 %v2766
    %3677 = vmatprep.subr.bf16.mxu0 %v2775
    %3678 = vmatpush1.bf16.msra.mxu0 %v2774
    %3679 = vmatprep.subr.bf16.mxu0 %v2783
    %3680 = vmatpush1.bf16.msra.mxu0 %v2782
    %3681 = vmatprep.subr.bf16.mxu0 %v2791
    %3682 = vmatpush1.bf16.msra.mxu0 %v2790
    %3683 = vmatprep.subr.bf16.mxu0 %v2799
    %3684 = vmatpush1.bf16.msra.mxu0 %v2798
    %3685 = vmatprep.subr.bf16.mxu0 %v2807
    %3686 = vmatpush1.bf16.msra.mxu0 %v2806
    %3687 = vmatprep.subr.bf16.mxu0 %v2815
    %3688 = vmatpush1.bf16.msra.mxu0 %v2814
    %3689 = vmatprep.subr.bf16.mxu0 %v2823
    %3690 = vmatpush1.bf16.msra.mxu0 %v2822
    %3691 = vmatprep.subr.bf16.mxu0 %v2831
    %3692 = vmatpush1.bf16.msra.mxu0 %v2830
    %3693 = vmatprep.subr.bf16.mxu0 %v2839
    %3694 = vmatpush1.bf16.msra.mxu0 %v2838
    %3695 = vmatprep.subr.bf16.mxu0 %v2847
    %3696 = vmatpush1.bf16.msra.mxu0 %v2846
    %3697 = vmatprep.mubr.bf16.mxu0 %v249
    %3698 = vmatmul.mubr.bf16.gmra.mrb[0].mxu0 %v248
    %v3699 = vpop.f32.mrb[0].mxu0
    %v3700 = vadd.f32 %v3657, %v3699
    %v3701 = vpop.f32.mrb[0].mxu0
    %v3702 = vadd.f32 %v3659, %v3701
    %v3703 = vpop.f32.mrb[0].mxu0
    %v3704 = vadd.f32 %v3661, %v3703
    %v3705 = vpop.f32.mrb[0].mxu0
    %v3706 = vadd.f32 %v3663, %v3705
    %3707 = vdwg.mxu0
    %3708 = vmatprep.subr.bf16.mxu0 %v2345
    %3709 = vmatpush1.bf16.msra.mxu0 %v2344
    %3710 = vmatprep.subr.bf16.mxu0 %v2353
    %3711 = vmatpush1.bf16.msra.mxu0 %v2352
    %3712 = vmatprep.subr.bf16.mxu0 %v2361
    %3713 = vmatpush1.bf16.msra.mxu0 %v2360
    %3714 = vmatprep.subr.bf16.mxu0 %v2369
    %3715 = vmatpush1.bf16.msra.mxu0 %v2368
    %3716 = vmatprep.subr.bf16.mxu0 %v2377
    %3717 = vmatpush1.bf16.msra.mxu0 %v2376
    %3718 = vmatprep.subr.bf16.mxu0 %v2385
    %3719 = vmatpush1.bf16.msra.mxu0 %v2384
    %3720 = vmatprep.subr.bf16.mxu0 %v2393
    %3721 = vmatpush1.bf16.msra.mxu0 %v2392
    %3722 = vmatprep.subr.bf16.mxu0 %v2401
    %3723 = vmatpush1.bf16.msra.mxu0 %v2400
    %3724 = vmatprep.subr.bf16.mxu0 %v2409
    %3725 = vmatpush1.bf16.msra.mxu0 %v2408
    %3726 = vmatprep.subr.bf16.mxu0 %v2417
    %3727 = vmatpush1.bf16.msra.mxu0 %v2416
    %3728 = vmatprep.subr.bf16.mxu0 %v2425
    %3729 = vmatpush1.bf16.msra.mxu0 %v2424
    %3730 = vmatprep.subr.bf16.mxu0 %v2433
    %3731 = vmatpush1.bf16.msra.mxu0 %v2432
    %3732 = vmatprep.subr.bf16.mxu0 %v2441
    %3733 = vmatpush1.bf16.msra.mxu0 %v2440
    %3734 = vmatprep.subr.bf16.mxu0 %v2449
    %3735 = vmatpush1.bf16.msra.mxu0 %v2448
    %3736 = vmatprep.subr.bf16.mxu0 %v2457
    %3737 = vmatpush1.bf16.msra.mxu0 %v2456
    %3738 = vmatprep.subr.bf16.mxu0 %v2465
    %3739 = vmatpush1.bf16.msra.mxu0 %v2464
    %3740 = vmatprep.mubr.bf16.mxu0 %v243
    %3741 = vmatmul.mubr.bf16.gmra.mrb[0].mxu0 %v242
    %v3742 = vpop.f32.mrb[0].mxu0
    %v3743 = vadd.f32 %v783, %v3742
    %v3744 = vpop.f32.mrb[0].mxu0
    %v3745 = vadd.f32 %v787, %v3744
    %v3746 = vpop.f32.mrb[0].mxu0
    %v3747 = vadd.f32 %v783, %v3746
    %v3748 = vpop.f32.mrb[0].mxu0
    %v3749 = vadd.f32 %v787, %v3748
    %3750 = vdwg.mxu0
    %3751 = vmatprep.subr.bf16.mxu0 %v2473
    %3752 = vmatpush1.bf16.msra.mxu0 %v2472
    %3753 = vmatprep.subr.bf16.mxu0 %v2481
    %3754 = vmatpush1.bf16.msra.mxu0 %v2480
    %3755 = vmatprep.subr.bf16.mxu0 %v2489
    %3756 = vmatpush1.bf16.msra.mxu0 %v2488
    %3757 = vmatprep.subr.bf16.mxu0 %v2497
    %3758 = vmatpush1.bf16.msra.mxu0 %v2496
    %3759 = vmatprep.subr.bf16.mxu0 %v2505
    %3760 = vmatpush1.bf16.msra.mxu0 %v2504
    %3761 = vmatprep.subr.bf16.mxu0 %v2513
    %3762 = vmatpush1.bf16.msra.mxu0 %v2512
    %3763 = vmatprep.subr.bf16.mxu0 %v2521
    %3764 = vmatpush1.bf16.msra.mxu0 %v2520
    %3765 = vmatprep.subr.bf16.mxu0 %v2529
    %3766 = vmatpush1.bf16.msra.mxu0 %v2528
    %3767 = vmatprep.subr.bf16.mxu0 %v2537
    %3768 = vmatpush1.bf16.msra.mxu0 %v2536
    %3769 = vmatprep.subr.bf16.mxu0 %v2545
    %3770 = vmatpush1.bf16.msra.mxu0 %v2544
    %3771 = vmatprep.subr.bf16.mxu0 %v2553
    %3772 = vmatpush1.bf16.msra.mxu0 %v2552
    %3773 = vmatprep.subr.bf16.mxu0 %v2561
    %3774 = vmatpush1.bf16.msra.mxu0 %v2560
    %3775 = vmatprep.subr.bf16.mxu0 %v2569
    %3776 = vmatpush1.bf16.msra.mxu0 %v2568
    %3777 = vmatprep.subr.bf16.mxu0 %v2577
    %3778 = vmatpush1.bf16.msra.mxu0 %v2576
    %3779 = vmatprep.subr.bf16.mxu0 %v2585
    %3780 = vmatpush1.bf16.msra.mxu0 %v2584
    %3781 = vmatprep.subr.bf16.mxu0 %v2593
    %3782 = vmatpush1.bf16.msra.mxu0 %v2592
    %3783 = vmatprep.mubr.bf16.mxu0 %v245
    %3784 = vmatmul.mubr.bf16.gmra.mrb[0].mxu0 %v244
    %v3785 = vpop.f32.mrb[0].mxu0
    %v3786 = vadd.f32 %v3743, %v3785
    %v3787 = vpop.f32.mrb[0].mxu0
    %v3788 = vadd.f32 %v3745, %v3787
    %v3789 = vpop.f32.mrb[0].mxu0
    %v3790 = vadd.f32 %v3747, %v3789
    %v3791 = vpop.f32.mrb[0].mxu0
    %v3792 = vadd.f32 %v3749, %v3791
    %3793 = vdwg.mxu0
    %3794 = vmatprep.subr.bf16.mxu0 %v2601
    %3795 = vmatpush1.bf16.msra.mxu0 %v2600
    %3796 = vmatprep.subr.bf16.mxu0 %v2609
    %3797 = vmatpush1.bf16.msra.mxu0 %v2608
    %3798 = vmatprep.subr.bf16.mxu0 %v2617
    %3799 = vmatpush1.bf16.msra.mxu0 %v2616
    %3800 = vmatprep.subr.bf16.mxu0 %v2625
    %3801 = vmatpush1.bf16.msra.mxu0 %v2624
    %3802 = vmatprep.subr.bf16.mxu0 %v2633
    %3803 = vmatpush1.bf16.msra.mxu0 %v2632
    %3804 = vmatprep.subr.bf16.mxu0 %v2641
    %3805 = vmatpush1.bf16.msra.mxu0 %v2640
    %3806 = vmatprep.subr.bf16.mxu0 %v2649
    %3807 = vmatpush1.bf16.msra.mxu0 %v2648
    %3808 = vmatprep.subr.bf16.mxu0 %v2657
    %3809 = vmatpush1.bf16.msra.mxu0 %v2656
    %3810 = vmatprep.subr.bf16.mxu0 %v2665
    %3811 = vmatpush1.bf16.msra.mxu0 %v2664
    %3812 = vmatprep.subr.bf16.mxu0 %v2673
    %3813 = vmatpush1.bf16.msra.mxu0 %v2672
    %3814 = vmatprep.subr.bf16.mxu0 %v2681
    %3815 = vmatpush1.bf16.msra.mxu0 %v2680
    %3816 = vmatprep.subr.bf16.mxu0 %v2689
    %3817 = vmatpush1.bf16.msra.mxu0 %v2688
    %3818 = vmatprep.subr.bf16.mxu0 %v2697
    %3819 = vmatpush1.bf16.msra.mxu0 %v2696
    %3820 = vmatprep.subr.bf16.mxu0 %v2705
    %3821 = vmatpush1.bf16.msra.mxu0 %v2704
    %3822 = vmatprep.subr.bf16.mxu0 %v2713
    %3823 = vmatpush1.bf16.msra.mxu0 %v2712
    %3824 = vmatprep.subr.bf16.mxu0 %v2721
    %3825 = vmatpush1.bf16.msra.mxu0 %v2720
    %3826 = vmatprep.mubr.bf16.mxu0 %v247
    %3827 = vmatmul.mubr.bf16.gmra.mrb[0].mxu0 %v246
    %v3828 = vpop.f32.mrb[0].mxu0
    %v3829 = vadd.f32 %v3786, %v3828
    %v3830 = vpop.f32.mrb[0].mxu0
    %v3831 = vadd.f32 %v3788, %v3830
    %v3832 = vpop.f32.mrb[0].mxu0
    %v3833 = vadd.f32 %v3790, %v3832
    %v3834 = vpop.f32.mrb[0].mxu0
    %v3835 = vadd.f32 %v3792, %v3834
    %3836 = vdwg.mxu0
    %3837 = vmatprep.subr.bf16.mxu0 %v2729
    %3838 = vmatpush1.bf16.msra.mxu0 %v2728
    %3839 = vmatprep.subr.bf16.mxu0 %v2737
    %3840 = vmatpush1.bf16.msra.mxu0 %v2736
    %3841 = vmatprep.subr.bf16.mxu0 %v2745
    %3842 = vmatpush1.bf16.msra.mxu0 %v2744
    %3843 = vmatprep.subr.bf16.mxu0 %v2753
    %3844 = vmatpush1.bf16.msra.mxu0 %v2752
    %3845 = vmatprep.subr.bf16.mxu0 %v2761
    %3846 = vmatpush1.bf16.msra.mxu0 %v2760
    %3847 = vmatprep.subr.bf16.mxu0 %v2769
    %3848 = vmatpush1.bf16.msra.mxu0 %v2768
    %3849 = vmatprep.subr.bf16.mxu0 %v2777
    %3850 = vmatpush1.bf16.msra.mxu0 %v2776
    %3851 = vmatprep.subr.bf16.mxu0 %v2785
    %3852 = vmatpush1.bf16.msra.mxu0 %v2784
    %3853 = vmatprep.subr.bf16.mxu0 %v2793
    %3854 = vmatpush1.bf16.msra.mxu0 %v2792
    %3855 = vmatprep.subr.bf16.mxu0 %v2801
    %3856 = vmatpush1.bf16.msra.mxu0 %v2800
    %3857 = vmatprep.subr.bf16.mxu0 %v2809
    %3858 = vmatpush1.bf16.msra.mxu0 %v2808
    %3859 = vmatprep.subr.bf16.mxu0 %v2817
    %3860 = vmatpush1.bf16.msra.mxu0 %v2816
    %3861 = vmatprep.subr.bf16.mxu0 %v2825
    %3862 = vmatpush1.bf16.msra.mxu0 %v2824
    %3863 = vmatprep.subr.bf16.mxu0 %v2833
    %3864 = vmatpush1.bf16.msra.mxu0 %v2832
    %3865 = vmatprep.subr.bf16.mxu0 %v2841
    %3866 = vmatpush1.bf16.msra.mxu0 %v2840
    %3867 = vmatprep.subr.bf16.mxu0 %v2849
    %3868 = vmatpush1.bf16.msra.mxu0 %v2848
    %3869 = vmatprep.mubr.bf16.mxu0 %v249
    %3870 = vmatmul.mubr.bf16.gmra.mrb[0].mxu0 %v248
    %v3871 = vpop.f32.mrb[0].mxu0
    %v3872 = vadd.f32 %v3829, %v3871
    %v3873 = vpop.f32.mrb[0].mxu0
    %v3874 = vadd.f32 %v3831, %v3873
    %v3875 = vpop.f32.mrb[0].mxu0
    %v3876 = vadd.f32 %v3833, %v3875
    %v3877 = vpop.f32.mrb[0].mxu0
    %v3878 = vadd.f32 %v3835, %v3877
    %3879 = vdwg.mxu0
    %3880 = vmatprep.subr.bf16.mxu0 %v2347
    %3881 = vmatpush1.bf16.msra.mxu0 %v2346
    %3882 = vmatprep.subr.bf16.mxu0 %v2355
    %3883 = vmatpush1.bf16.msra.mxu0 %v2354
    %3884 = vmatprep.subr.bf16.mxu0 %v2363
    %3885 = vmatpush1.bf16.msra.mxu0 %v2362
    %3886 = vmatprep.subr.bf16.mxu0 %v2371
    %3887 = vmatpush1.bf16.msra.mxu0 %v2370
    %3888 = vmatprep.subr.bf16.mxu0 %v2379
    %3889 = vmatpush1.bf16.msra.mxu0 %v2378
    %3890 = vmatprep.subr.bf16.mxu0 %v2387
    %3891 = vmatpush1.bf16.msra.mxu0 %v2386
    %3892 = vmatprep.subr.bf16.mxu0 %v2395
    %3893 = vmatpush1.bf16.msra.mxu0 %v2394
    %3894 = vmatprep.subr.bf16.mxu0 %v2403
    %3895 = vmatpush1.bf16.msra.mxu0 %v2402
    %3896 = vmatprep.subr.bf16.mxu0 %v2411
    %3897 = vmatpush1.bf16.msra.mxu0 %v2410
    %3898 = vmatprep.subr.bf16.mxu0 %v2419
    %3899 = vmatpush1.bf16.msra.mxu0 %v2418
    %3900 = vmatprep.subr.bf16.mxu0 %v2427
    %3901 = vmatpush1.bf16.msra.mxu0 %v2426
    %3902 = vmatprep.subr.bf16.mxu0 %v2435
    %3903 = vmatpush1.bf16.msra.mxu0 %v2434
    %3904 = vmatprep.subr.bf16.mxu0 %v2443
    %3905 = vmatpush1.bf16.msra.mxu0 %v2442
    %3906 = vmatprep.subr.bf16.mxu0 %v2451
    %3907 = vmatpush1.bf16.msra.mxu0 %v2450
    %3908 = vmatprep.subr.bf16.mxu0 %v2459
    %3909 = vmatpush1.bf16.msra.mxu0 %v2458
    %3910 = vmatprep.subr.bf16.mxu0 %v2467
    %3911 = vmatpush1.bf16.msra.mxu0 %v2466
    %3912 = vmatprep.mubr.bf16.mxu0 %v243
    %3913 = vmatmul.mubr.bf16.gmra.mrb[0].mxu0 %v242
    %v3914 = vpop.f32.mrb[0].mxu0
    %v3915 = vadd.f32 %v791, %v3914
    %v3916 = vpop.f32.mrb[0].mxu0
    %v3917 = vadd.f32 %v795, %v3916
    %v3918 = vpop.f32.mrb[0].mxu0
    %v3919 = vadd.f32 %v791, %v3918
    %v3920 = vpop.f32.mrb[0].mxu0
    %v3921 = vadd.f32 %v795, %v3920
    %3922 = vdwg.mxu0
    %3923 = vmatprep.subr.bf16.mxu0 %v2475
    %3924 = vmatpush1.bf16.msra.mxu0 %v2474
    %3925 = vmatprep.subr.bf16.mxu0 %v2483
    %3926 = vmatpush1.bf16.msra.mxu0 %v2482
    %3927 = vmatprep.subr.bf16.mxu0 %v2491
    %3928 = vmatpush1.bf16.msra.mxu0 %v2490
    %3929 = vmatprep.subr.bf16.mxu0 %v2499
    %3930 = vmatpush1.bf16.msra.mxu0 %v2498
    %3931 = vmatprep.subr.bf16.mxu0 %v2507
    %3932 = vmatpush1.bf16.msra.mxu0 %v2506
    %3933 = vmatprep.subr.bf16.mxu0 %v2515
    %3934 = vmatpush1.bf16.msra.mxu0 %v2514
    %3935 = vmatprep.subr.bf16.mxu0 %v2523
    %3936 = vmatpush1.bf16.msra.mxu0 %v2522
    %3937 = vmatprep.subr.bf16.mxu0 %v2531
    %3938 = vmatpush1.bf16.msra.mxu0 %v2530
    %3939 = vmatprep.subr.bf16.mxu0 %v2539
    %3940 = vmatpush1.bf16.msra.mxu0 %v2538
    %3941 = vmatprep.subr.bf16.mxu0 %v2547
    %3942 = vmatpush1.bf16.msra.mxu0 %v2546
    %3943 = vmatprep.subr.bf16.mxu0 %v2555
    %3944 = vmatpush1.bf16.msra.mxu0 %v2554
    %3945 = vmatprep.subr.bf16.mxu0 %v2563
    %3946 = vmatpush1.bf16.msra.mxu0 %v2562
    %3947 = vmatprep.subr.bf16.mxu0 %v2571
    %3948 = vmatpush1.bf16.msra.mxu0 %v2570
    %3949 = vmatprep.subr.bf16.mxu0 %v2579
    %3950 = vmatpush1.bf16.msra.mxu0 %v2578
    %3951 = vmatprep.subr.bf16.mxu0 %v2587
    %3952 = vmatpush1.bf16.msra.mxu0 %v2586
    %3953 = vmatprep.subr.bf16.mxu0 %v2595
    %3954 = vmatpush1.bf16.msra.mxu0 %v2594
    %3955 = vmatprep.mubr.bf16.mxu0 %v245
    %3956 = vmatmul.mubr.bf16.gmra.mrb[0].mxu0 %v244
    %v3957 = vpop.f32.mrb[0].mxu0
    %v3958 = vadd.f32 %v3915, %v3957
    %v3959 = vpop.f32.mrb[0].mxu0
    %v3960 = vadd.f32 %v3917, %v3959
    %v3961 = vpop.f32.mrb[0].mxu0
    %v3962 = vadd.f32 %v3919, %v3961
    %v3963 = vpop.f32.mrb[0].mxu0
    %v3964 = vadd.f32 %v3921, %v3963
    %3965 = vdwg.mxu0
    %3966 = vmatprep.subr.bf16.mxu0 %v2603
    %3967 = vmatpush1.bf16.msra.mxu0 %v2602
    %3968 = vmatprep.subr.bf16.mxu0 %v2611
    %3969 = vmatpush1.bf16.msra.mxu0 %v2610
    %3970 = vmatprep.subr.bf16.mxu0 %v2619
    %3971 = vmatpush1.bf16.msra.mxu0 %v2618
    %3972 = vmatprep.subr.bf16.mxu0 %v2627
    %3973 = vmatpush1.bf16.msra.mxu0 %v2626
    %3974 = vmatprep.subr.bf16.mxu0 %v2635
    %3975 = vmatpush1.bf16.msra.mxu0 %v2634
    %3976 = vmatprep.subr.bf16.mxu0 %v2643
    %3977 = vmatpush1.bf16.msra.mxu0 %v2642
    %3978 = vmatprep.subr.bf16.mxu0 %v2651
    %3979 = vmatpush1.bf16.msra.mxu0 %v2650
    %3980 = vmatprep.subr.bf16.mxu0 %v2659
    %3981 = vmatpush1.bf16.msra.mxu0 %v2658
    %3982 = vmatprep.subr.bf16.mxu0 %v2667
    %3983 = vmatpush1.bf16.msra.mxu0 %v2666
    %3984 = vmatprep.subr.bf16.mxu0 %v2675
    %3985 = vmatpush1.bf16.msra.mxu0 %v2674
    %3986 = vmatprep.subr.bf16.mxu0 %v2683
    %3987 = vmatpush1.bf16.msra.mxu0 %v2682
    %3988 = vmatprep.subr.bf16.mxu0 %v2691
    %3989 = vmatpush1.bf16.msra.mxu0 %v2690
    %3990 = vmatprep.subr.bf16.mxu0 %v2699
    %3991 = vmatpush1.bf16.msra.mxu0 %v2698
    %3992 = vmatprep.subr.bf16.mxu0 %v2707
    %3993 = vmatpush1.bf16.msra.mxu0 %v2706
    %3994 = vmatprep.subr.bf16.mxu0 %v2715
    %3995 = vmatpush1.bf16.msra.mxu0 %v2714
    %3996 = vmatprep.subr.bf16.mxu0 %v2723
    %3997 = vmatpush1.bf16.msra.mxu0 %v2722
    %3998 = vmatprep.mubr.bf16.mxu0 %v247
    %3999 = vmatmul.mubr.bf16.gmra.mrb[0].mxu0 %v246
    %v4000 = vpop.f32.mrb[0].mxu0
    %v4001 = vadd.f32 %v3958, %v4000
    %v4002 = vpop.f32.mrb[0].mxu0
    %v4003 = vadd.f32 %v3960, %v4002
    %v4004 = vpop.f32.mrb[0].mxu0
    %v4005 = vadd.f32 %v3962, %v4004
    %v4006 = vpop.f32.mrb[0].mxu0
    %v4007 = vadd.f32 %v3964, %v4006
    %4008 = vdwg.mxu0
    %4009 = vmatprep.subr.bf16.mxu0 %v2731
    %4010 = vmatpush1.bf16.msra.mxu0 %v2730
    %4011 = vmatprep.subr.bf16.mxu0 %v2739
    %4012 = vmatpush1.bf16.msra.mxu0 %v2738
    %4013 = vmatprep.subr.bf16.mxu0 %v2747
    %4014 = vmatpush1.bf16.msra.mxu0 %v2746
    %4015 = vmatprep.subr.bf16.mxu0 %v2755
    %4016 = vmatpush1.bf16.msra.mxu0 %v2754
    %4017 = vmatprep.subr.bf16.mxu0 %v2763
    %4018 = vmatpush1.bf16.msra.mxu0 %v2762
    %4019 = vmatprep.subr.bf16.mxu0 %v2771
    %4020 = vmatpush1.bf16.msra.mxu0 %v2770
    %4021 = vmatprep.subr.bf16.mxu0 %v2779
    %4022 = vmatpush1.bf16.msra.mxu0 %v2778
    %4023 = vmatprep.subr.bf16.mxu0 %v2787
    %4024 = vmatpush1.bf16.msra.mxu0 %v2786
    %4025 = vmatprep.subr.bf16.mxu0 %v2795
    %4026 = vmatpush1.bf16.msra.mxu0 %v2794
    %4027 = vmatprep.subr.bf16.mxu0 %v2803
    %4028 = vmatpush1.bf16.msra.mxu0 %v2802
    %4029 = vmatprep.subr.bf16.mxu0 %v2811
    %4030 = vmatpush1.bf16.msra.mxu0 %v2810
    %4031 = vmatprep.subr.bf16.mxu0 %v2819
    %4032 = vmatpush1.bf16.msra.mxu0 %v2818
    %4033 = vmatprep.subr.bf16.mxu0 %v2827
    %4034 = vmatpush1.bf16.msra.mxu0 %v2826
    %4035 = vmatprep.subr.bf16.mxu0 %v2835
    %4036 = vmatpush1.bf16.msra.mxu0 %v2834
    %4037 = vmatprep.subr.bf16.mxu0 %v2843
    %4038 = vmatpush1.bf16.msra.mxu0 %v2842
    %4039 = vmatprep.subr.bf16.mxu0 %v2851
    %4040 = vmatpush1.bf16.msra.mxu0 %v2850
    %4041 = vmatprep.mubr.bf16.mxu0 %v249
    %4042 = vmatmul.mubr.bf16.gmra.mrb[0].mxu0 %v248
    %v4043 = vpop.f32.mrb[0].mxu0
    %v4044 = vadd.f32 %v4001, %v4043
    %v4045 = vpop.f32.mrb[0].mxu0
    %v4046 = vadd.f32 %v4003, %v4045
    %v4047 = vpop.f32.mrb[0].mxu0
    %v4048 = vadd.f32 %v4005, %v4047
    %v4049 = vpop.f32.mrb[0].mxu0
    %v4050 = vadd.f32 %v4007, %v4049
    %4051 = vdwg.mxu0
    %v4052 = vpack.c.bf16 %v3532, %v3528
    %v4053 = vpack.c.bf16 %v3534, %v3530
    %v4054 = vpack.c.bf16 %v3704, %v3700
    %v4055 = vpack.c.bf16 %v3706, %v3702
    %v4056 = vpack.c.bf16 %v3876, %v3872
    %v4057 = vpack.c.bf16 %v3878, %v3874
    %v4058 = vpack.c.bf16 %v4048, %v4044
    %v4059 = vpack.c.bf16 %v4050, %v4046
    %v4060 = vld [vmem:[%s5] sm:$0xff]
    %v4061 = vld [vmem:[%s5 + $0x8] sm:$0xff]
    %v4062 = vld [vmem:[%s5 + $0x10] sm:$0xff]
    %v4063 = vld [vmem:[%s5 + $0x18] sm:$0xf]
    %v4064 = vld [vmem:[%s5 + $0x1c] sm:$0xff]
    %v4065 = vld [vmem:[%s5 + $0x24] sm:$0xff]
    %v4066 = vld [vmem:[%s5 + $0x2c] sm:$0xff]
    %v4067 = vld [vmem:[%s5 + $0x34] sm:$0xf]
    %v4068 = vld [vmem:[%s5 + $0x38] sm:$0xff]
    %v4069 = vld [vmem:[%s5 + $0x40] sm:$0xff]
    %v4070 = vld [vmem:[%s5 + $0x48] sm:$0xff]
    %v4071 = vld [vmem:[%s5 + $0x50] sm:$0xf]
    %v4072 = vld [vmem:[%s5 + $0x54] sm:$0xff]
    %v4073 = vld [vmem:[%s5 + $0x5c] sm:$0xff]
    %v4074 = vld [vmem:[%s5 + $0x64] sm:$0xff]
    %v4075 = vld [vmem:[%s5 + $0x6c] sm:$0xf]
    %v4076 = vld [vmem:[%s5 + $0x70] sm:$0xff]
    %v4077 = vld [vmem:[%s5 + $0x78] sm:$0xff]
    %v4078 = vld [vmem:[%s5 + $0x80] sm:$0xff]
    %v4079 = vld [vmem:[%s5 + $0x88] sm:$0xf]
    %v4080 = vld [vmem:[%s5 + $0x8c] sm:$0xff]
    %v4081 = vld [vmem:[%s5 + $0x94] sm:$0xff]
    %v4082 = vld [vmem:[%s5 + $0x9c] sm:$0xff]
    %v4083 = vld [vmem:[%s5 + $0xa4] sm:$0xf]
    %v4084 = vld [vmem:[%s5 + $0xa8] sm:$0xff]
    %v4085 = vld [vmem:[%s5 + $0xb0] sm:$0xff]
    %v4086 = vld [vmem:[%s5 + $0xb8] sm:$0xff]
    %v4087 = vld [vmem:[%s5 + $0xc0] sm:$0xf]
    %v4088 = vld [vmem:[%s5 + $0xc4] sm:$0xff]
    %v4089 = vld [vmem:[%s5 + $0xcc] sm:$0xff]
    %v4090 = vld [vmem:[%s5 + $0xd4] sm:$0xff]
    %v4091 = vld [vmem:[%s5 + $0xdc] sm:$0xf]
    %v4092 = vld [vmem:[%s5 + $0xe0] sm:$0xff]
    %v4093 = vld [vmem:[%s5 + $0xe8] sm:$0xff]
    %v4094 = vld [vmem:[%s5 + $0xf0] sm:$0xff]
    %v4095 = vld [vmem:[%s5 + $0xf8] sm:$0xf]
    %v4096 = vld [vmem:[%s5 + $0xfc] sm:$0xff]
    %v4097 = vld [vmem:[%s5 + $0x104] sm:$0xff]
    %v4098 = vld [vmem:[%s5 + $0x10c] sm:$0xff]
    %v4099 = vld [vmem:[%s5 + $0x114] sm:$0xf]
    %v4100 = vld [vmem:[%s5 + $0x118] sm:$0xff]
    %v4101 = vld [vmem:[%s5 + $0x120] sm:$0xff]
    %v4102 = vld [vmem:[%s5 + $0x128] sm:$0xff]
    %v4103 = vld [vmem:[%s5 + $0x130] sm:$0xf]
    %v4104 = vld [vmem:[%s5 + $0x134] sm:$0xff]
    %v4105 = vld [vmem:[%s5 + $0x13c] sm:$0xff]
    %v4106 = vld [vmem:[%s5 + $0x144] sm:$0xff]
    %v4107 = vld [vmem:[%s5 + $0x14c] sm:$0xf]
    %v4108 = vld [vmem:[%s5 + $0x150] sm:$0xff]
    %v4109 = vld [vmem:[%s5 + $0x158] sm:$0xff]
    %v4110 = vld [vmem:[%s5 + $0x160] sm:$0xff]
    %v4111 = vld [vmem:[%s5 + $0x168] sm:$0xf]
    %v4112 = vld [vmem:[%s5 + $0x16c] sm:$0xff]
    %v4113 = vld [vmem:[%s5 + $0x174] sm:$0xff]
    %v4114 = vld [vmem:[%s5 + $0x17c] sm:$0xff]
    %v4115 = vld [vmem:[%s5 + $0x184] sm:$0xf]
    %v4116 = vld [vmem:[%s5 + $0x188] sm:$0xff]
    %v4117 = vld [vmem:[%s5 + $0x190] sm:$0xff]
    %v4118 = vld [vmem:[%s5 + $0x198] sm:$0xff]
    %v4119 = vld [vmem:[%s5 + $0x1a0] sm:$0xf]
    %v4120 = vld [vmem:[%s5 + $0x1a4] sm:$0xff]
    %v4121 = vld [vmem:[%s5 + $0x1ac] sm:$0xff]
    %v4122 = vld [vmem:[%s5 + $0x1b4] sm:$0xff]
    %v4123 = vld [vmem:[%s5 + $0x1bc] sm:$0xf]
    %v4124 = vld [vmem:[%s5 + $0x1c0] sm:$0xff]
    %v4125 = vld [vmem:[%s5 + $0x1c8] sm:$0xff]
    %v4126 = vld [vmem:[%s5 + $0x1d0] sm:$0xff]
    %v4127 = vld [vmem:[%s5 + $0x1d8] sm:$0xf]
    %v4128 = vld [vmem:[%s5 + $0x1dc] sm:$0xff]
    %v4129 = vld [vmem:[%s5 + $0x1e4] sm:$0xff]
    %v4130 = vld [vmem:[%s5 + $0x1ec] sm:$0xff]
    %v4131 = vld [vmem:[%s5 + $0x1f4] sm:$0xf]
    %v4132 = vld [vmem:[%s5 + $0x1f8] sm:$0xff]
    %v4133 = vld [vmem:[%s5 + $0x200] sm:$0xff]
    %v4134 = vld [vmem:[%s5 + $0x208] sm:$0xff]
    %v4135 = vld [vmem:[%s5 + $0x210] sm:$0xf]
    %v4136 = vld [vmem:[%s5 + $0x214] sm:$0xff]
    %v4137 = vld [vmem:[%s5 + $0x21c] sm:$0xff]
    %v4138 = vld [vmem:[%s5 + $0x224] sm:$0xff]
    %v4139 = vld [vmem:[%s5 + $0x22c] sm:$0xf]
    %v4140 = vld [vmem:[%s5 + $0x230] sm:$0xff]
    %v4141 = vld [vmem:[%s5 + $0x238] sm:$0xff]
    %v4142 = vld [vmem:[%s5 + $0x240] sm:$0xff]
    %v4143 = vld [vmem:[%s5 + $0x248] sm:$0xf]
    %v4144 = vld [vmem:[%s5 + $0x24c] sm:$0xff]
    %v4145 = vld [vmem:[%s5 + $0x254] sm:$0xff]
    %v4146 = vld [vmem:[%s5 + $0x25c] sm:$0xff]
    %v4147 = vld [vmem:[%s5 + $0x264] sm:$0xf]
    %v4148 = vld [vmem:[%s5 + $0x268] sm:$0xff]
    %v4149 = vld [vmem:[%s5 + $0x270] sm:$0xff]
    %v4150 = vld [vmem:[%s5 + $0x278] sm:$0xff]
    %v4151 = vld [vmem:[%s5 + $0x280] sm:$0xf]
    %v4152 = vld [vmem:[%s5 + $0x284] sm:$0xff]
    %v4153 = vld [vmem:[%s5 + $0x28c] sm:$0xff]
    %v4154 = vld [vmem:[%s5 + $0x294] sm:$0xff]
    %v4155 = vld [vmem:[%s5 + $0x29c] sm:$0xf]
    %v4156 = vld [vmem:[%s5 + $0x2a0] sm:$0xff]
    %v4157 = vld [vmem:[%s5 + $0x2a8] sm:$0xff]
    %v4158 = vld [vmem:[%s5 + $0x2b0] sm:$0xff]
    %v4159 = vld [vmem:[%s5 + $0x2b8] sm:$0xf]
    %v4160 = vld [vmem:[%s5 + $0x2bc] sm:$0xff]
    %v4161 = vld [vmem:[%s5 + $0x2c4] sm:$0xff]
    %v4162 = vld [vmem:[%s5 + $0x2cc] sm:$0xff]
    %v4163 = vld [vmem:[%s5 + $0x2d4] sm:$0xf]
    %v4164 = vld [vmem:[%s5 + $0x2d8] sm:$0xff]
    %v4165 = vld [vmem:[%s5 + $0x2e0] sm:$0xff]
    %v4166 = vld [vmem:[%s5 + $0x2e8] sm:$0xff]
    %v4167 = vld [vmem:[%s5 + $0x2f0] sm:$0xf]
    %v4168 = vld [vmem:[%s5 + $0x2f4] sm:$0xff]
    %v4169 = vld [vmem:[%s5 + $0x2fc] sm:$0xff]
    %v4170 = vld [vmem:[%s5 + $0x304] sm:$0xff]
    %v4171 = vld [vmem:[%s5 + $0x30c] sm:$0xf]
    %v4172 = vld [vmem:[%s5 + $0x310] sm:$0xff]
    %v4173 = vld [vmem:[%s5 + $0x318] sm:$0xff]
    %v4174 = vld [vmem:[%s5 + $0x320] sm:$0xff]
    %v4175 = vld [vmem:[%s5 + $0x328] sm:$0xf]
    %v4176 = vld [vmem:[%s5 + $0x32c] sm:$0xff]
    %v4177 = vld [vmem:[%s5 + $0x334] sm:$0xff]
    %v4178 = vld [vmem:[%s5 + $0x33c] sm:$0xff]
    %v4179 = vld [vmem:[%s5 + $0x344] sm:$0xf]
    %v4180 = vld [vmem:[%s5 + $0x348] sm:$0xff]
    %v4181 = vld [vmem:[%s5 + $0x350] sm:$0xff]
    %v4182 = vld [vmem:[%s5 + $0x358] sm:$0xff]
    %v4183 = vld [vmem:[%s5 + $0x360] sm:$0xf]
    %v4184 = vld [vmem:[%s5 + $0x364] sm:$0xff]
    %v4185 = vld [vmem:[%s5 + $0x36c] sm:$0xff]
    %v4186 = vld [vmem:[%s5 + $0x374] sm:$0xff]
    %v4187 = vld [vmem:[%s5 + $0x37c] sm:$0xf]
    %v4188 = vld [vmem:[%s5 + $0x380] sm:$0xff]
    %v4189 = vld [vmem:[%s5 + $0x388] sm:$0xff]
    %v4190 = vld [vmem:[%s5 + $0x390] sm:$0xff]
    %v4191 = vld [vmem:[%s5 + $0x398] sm:$0xf]
    %v4192 = vld [vmem:[%s5 + $0x39c] sm:$0xff]
    %v4193 = vld [vmem:[%s5 + $0x3a4] sm:$0xff]
    %v4194 = vld [vmem:[%s5 + $0x3ac] sm:$0xff]
    %v4195 = vld [vmem:[%s5 + $0x3b4] sm:$0xf]
    %v4196 = vld [vmem:[%s5 + $0x3b8] sm:$0xff]
    %v4197 = vld [vmem:[%s5 + $0x3c0] sm:$0xff]
    %v4198 = vld [vmem:[%s5 + $0x3c8] sm:$0xff]
    %v4199 = vld [vmem:[%s5 + $0x3d0] sm:$0xf]
    %v4200 = vld [vmem:[%s5 + $0x3d4] sm:$0xff]
    %v4201 = vld [vmem:[%s5 + $0x3dc] sm:$0xff]
    %v4202 = vld [vmem:[%s5 + $0x3e4] sm:$0xff]
    %v4203 = vld [vmem:[%s5 + $0x3ec] sm:$0xf]
    %v4204 = vld [vmem:[%s5 + $0x3f0] sm:$0xff]
    %v4205 = vld [vmem:[%s5 + $0x3f8] sm:$0xff]
    %v4206 = vld [vmem:[%s5 + $0x400] sm:$0xff]
    %v4207 = vld [vmem:[%s5 + $0x408] sm:$0xf]
    %v4208 = vld [vmem:[%s5 + $0x40c] sm:$0xff]
    %v4209 = vld [vmem:[%s5 + $0x414] sm:$0xff]
    %v4210 = vld [vmem:[%s5 + $0x41c] sm:$0xff]
    %v4211 = vld [vmem:[%s5 + $0x424] sm:$0xf]
    %v4212 = vld [vmem:[%s5 + $0x428] sm:$0xff]
    %v4213 = vld [vmem:[%s5 + $0x430] sm:$0xff]
    %v4214 = vld [vmem:[%s5 + $0x438] sm:$0xff]
    %v4215 = vld [vmem:[%s5 + $0x440] sm:$0xf]
    %v4216 = vld [vmem:[%s5 + $0x444] sm:$0xff]
    %v4217 = vld [vmem:[%s5 + $0x44c] sm:$0xff]
    %v4218 = vld [vmem:[%s5 + $0x454] sm:$0xff]
    %v4219 = vld [vmem:[%s5 + $0x45c] sm:$0xf]
    %v4220 = vld [vmem:[%s5 + $0x460] sm:$0xff]
    %v4221 = vld [vmem:[%s5 + $0x468] sm:$0xff]
    %v4222 = vld [vmem:[%s5 + $0x470] sm:$0xff]
    %v4223 = vld [vmem:[%s5 + $0x478] sm:$0xf]
    %v4224 = vld [vmem:[%s5 + $0x47c] sm:$0xff]
    %v4225 = vld [vmem:[%s5 + $0x484] sm:$0xff]
    %v4226 = vld [vmem:[%s5 + $0x48c] sm:$0xff]
    %v4227 = vld [vmem:[%s5 + $0x494] sm:$0xf]
    %v4228 = vld [vmem:[%s5 + $0x498] sm:$0xff]
    %v4229 = vld [vmem:[%s5 + $0x4a0] sm:$0xff]
    %v4230 = vld [vmem:[%s5 + $0x4a8] sm:$0xff]
    %v4231 = vld [vmem:[%s5 + $0x4b0] sm:$0xf]
    %v4232 = vld [vmem:[%s5 + $0x4b4] sm:$0xff]
    %v4233 = vld [vmem:[%s5 + $0x4bc] sm:$0xff]
    %v4234 = vld [vmem:[%s5 + $0x4c4] sm:$0xff]
    %v4235 = vld [vmem:[%s5 + $0x4cc] sm:$0xf]
    %v4236 = vld [vmem:[%s5 + $0x4d0] sm:$0xff]
    %v4237 = vld [vmem:[%s5 + $0x4d8] sm:$0xff]
    %v4238 = vld [vmem:[%s5 + $0x4e0] sm:$0xff]
    %v4239 = vld [vmem:[%s5 + $0x4e8] sm:$0xf]
    %v4240 = vld [vmem:[%s5 + $0x4ec] sm:$0xff]
    %v4241 = vld [vmem:[%s5 + $0x4f4] sm:$0xff]
    %v4242 = vld [vmem:[%s5 + $0x4fc] sm:$0xff]
    %v4243 = vld [vmem:[%s5 + $0x504] sm:$0xf]
    %v4244 = vld [vmem:[%s5 + $0x508] sm:$0xff]
    %v4245 = vld [vmem:[%s5 + $0x510] sm:$0xff]
    %v4246 = vld [vmem:[%s5 + $0x518] sm:$0xff]
    %v4247 = vld [vmem:[%s5 + $0x520] sm:$0xf]
    %v4248 = vld [vmem:[%s5 + $0x524] sm:$0xff]
    %v4249 = vld [vmem:[%s5 + $0x52c] sm:$0xff]
    %v4250 = vld [vmem:[%s5 + $0x534] sm:$0xff]
    %v4251 = vld [vmem:[%s5 + $0x53c] sm:$0xf]
    %v4252 = vld [vmem:[%s5 + $0x540] sm:$0xff]
    %v4253 = vld [vmem:[%s5 + $0x548] sm:$0xff]
    %v4254 = vld [vmem:[%s5 + $0x550] sm:$0xff]
    %v4255 = vld [vmem:[%s5 + $0x558] sm:$0xf]
    %v4256 = vld [vmem:[%s5 + $0x55c] sm:$0xff]
    %v4257 = vld [vmem:[%s5 + $0x564] sm:$0xff]
    %v4258 = vld [vmem:[%s5 + $0x56c] sm:$0xff]
    %v4259 = vld [vmem:[%s5 + $0x574] sm:$0xf]
    %v4260 = vld [vmem:[%s5 + $0x578] sm:$0xff]
    %v4261 = vld [vmem:[%s5 + $0x580] sm:$0xff]
    %v4262 = vld [vmem:[%s5 + $0x588] sm:$0xff]
    %v4263 = vld [vmem:[%s5 + $0x590] sm:$0xf]
    %v4264 = vld [vmem:[%s5 + $0x594] sm:$0xff]
    %v4265 = vld [vmem:[%s5 + $0x59c] sm:$0xff]
    %v4266 = vld [vmem:[%s5 + $0x5a4] sm:$0xff]
    %v4267 = vld [vmem:[%s5 + $0x5ac] sm:$0xf]
    %v4268 = vld [vmem:[%s5 + $0x5b0] sm:$0xff]
    %v4269 = vld [vmem:[%s5 + $0x5b8] sm:$0xff]
    %v4270 = vld [vmem:[%s5 + $0x5c0] sm:$0xff]
    %v4271 = vld [vmem:[%s5 + $0x5c8] sm:$0xf]
    %v4272 = vld [vmem:[%s5 + $0x5cc] sm:$0xff]
    %v4273 = vld [vmem:[%s5 + $0x5d4] sm:$0xff]
    %v4274 = vld [vmem:[%s5 + $0x5dc] sm:$0xff]
    %v4275 = vld [vmem:[%s5 + $0x5e4] sm:$0xf]
    %v4276 = vld [vmem:[%s5 + $0x5e8] sm:$0xff]
    %v4277 = vld [vmem:[%s5 + $0x5f0] sm:$0xff]
    %v4278 = vld [vmem:[%s5 + $0x5f8] sm:$0xff]
    %v4279 = vld [vmem:[%s5 + $0x600] sm:$0xf]
    %v4280 = vld [vmem:[%s5 + $0x604] sm:$0xff]
    %v4281 = vld [vmem:[%s5 + $0x60c] sm:$0xff]
    %v4282 = vld [vmem:[%s5 + $0x614] sm:$0xff]
    %v4283 = vld [vmem:[%s5 + $0x61c] sm:$0xf]
    %v4284 = vld [vmem:[%s5 + $0x620] sm:$0xff]
    %v4285 = vld [vmem:[%s5 + $0x628] sm:$0xff]
    %v4286 = vld [vmem:[%s5 + $0x630] sm:$0xff]
    %v4287 = vld [vmem:[%s5 + $0x638] sm:$0xf]
    %v4288 = vld [vmem:[%s5 + $0x63c] sm:$0xff]
    %v4289 = vld [vmem:[%s5 + $0x644] sm:$0xff]
    %v4290 = vld [vmem:[%s5 + $0x64c] sm:$0xff]
    %v4291 = vld [vmem:[%s5 + $0x654] sm:$0xf]
    %v4292 = vld [vmem:[%s5 + $0x658] sm:$0xff]
    %v4293 = vld [vmem:[%s5 + $0x660] sm:$0xff]
    %v4294 = vld [vmem:[%s5 + $0x668] sm:$0xff]
    %v4295 = vld [vmem:[%s5 + $0x670] sm:$0xf]
    %v4296 = vld [vmem:[%s5 + $0x674] sm:$0xff]
    %v4297 = vld [vmem:[%s5 + $0x67c] sm:$0xff]
    %v4298 = vld [vmem:[%s5 + $0x684] sm:$0xff]
    %v4299 = vld [vmem:[%s5 + $0x68c] sm:$0xf]
    %v4300 = vld [vmem:[%s5 + $0x690] sm:$0xff]
    %v4301 = vld [vmem:[%s5 + $0x698] sm:$0xff]
    %v4302 = vld [vmem:[%s5 + $0x6a0] sm:$0xff]
    %v4303 = vld [vmem:[%s5 + $0x6a8] sm:$0xf]
    %v4304 = vld [vmem:[%s5 + $0x6ac] sm:$0xff]
    %v4305 = vld [vmem:[%s5 + $0x6b4] sm:$0xff]
    %v4306 = vld [vmem:[%s5 + $0x6bc] sm:$0xff]
    %v4307 = vld [vmem:[%s5 + $0x6c4] sm:$0xf]
    %v4308 = vld [vmem:[%s5 + $0x6c8] sm:$0xff]
    %v4309 = vld [vmem:[%s5 + $0x6d0] sm:$0xff]
    %v4310 = vld [vmem:[%s5 + $0x6d8] sm:$0xff]
    %v4311 = vld [vmem:[%s5 + $0x6e0] sm:$0xf]
    %v4312 = vld [vmem:[%s5 + $0x6e4] sm:$0xff]
    %v4313 = vld [vmem:[%s5 + $0x6ec] sm:$0xff]
    %v4314 = vld [vmem:[%s5 + $0x6f4] sm:$0xff]
    %v4315 = vld [vmem:[%s5 + $0x6fc] sm:$0xf]
    %v4316 = vld [vmem:[%s5 + $0x700] sm:$0xff]
    %v4317 = vld [vmem:[%s5 + $0x708] sm:$0xff]
    %v4318 = vld [vmem:[%s5 + $0x710] sm:$0xff]
    %v4319 = vld [vmem:[%s5 + $0x718] sm:$0xf]
    %v4320 = vld [vmem:[%s5 + $0x71c] sm:$0xff]
    %v4321 = vld [vmem:[%s5 + $0x724] sm:$0xff]
    %v4322 = vld [vmem:[%s5 + $0x72c] sm:$0xff]
    %v4323 = vld [vmem:[%s5 + $0x734] sm:$0xf]
    %v4324 = vld [vmem:[%s5 + $0x738] sm:$0xff]
    %v4325 = vld [vmem:[%s5 + $0x740] sm:$0xff]
    %v4326 = vld [vmem:[%s5 + $0x748] sm:$0xff]
    %v4327 = vld [vmem:[%s5 + $0x750] sm:$0xf]
    %v4328 = vld [vmem:[%s5 + $0x754] sm:$0xff]
    %v4329 = vld [vmem:[%s5 + $0x75c] sm:$0xff]
    %v4330 = vld [vmem:[%s5 + $0x764] sm:$0xff]
    %v4331 = vld [vmem:[%s5 + $0x76c] sm:$0xf]
    %v4332 = vld [vmem:[%s5 + $0x770] sm:$0xff]
    %v4333 = vld [vmem:[%s5 + $0x778] sm:$0xff]
    %v4334 = vld [vmem:[%s5 + $0x780] sm:$0xff]
    %v4335 = vld [vmem:[%s5 + $0x788] sm:$0xf]
    %v4336 = vld [vmem:[%s5 + $0x78c] sm:$0xff]
    %v4337 = vld [vmem:[%s5 + $0x794] sm:$0xff]
    %v4338 = vld [vmem:[%s5 + $0x79c] sm:$0xff]
    %v4339 = vld [vmem:[%s5 + $0x7a4] sm:$0xf]
    %v4340 = vld [vmem:[%s5 + $0x7a8] sm:$0xff]
    %v4341 = vld [vmem:[%s5 + $0x7b0] sm:$0xff]
    %v4342 = vld [vmem:[%s5 + $0x7b8] sm:$0xff]
    %v4343 = vld [vmem:[%s5 + $0x7c0] sm:$0xf]
    %v4344 = vld [vmem:[%s5 + $0x7c4] sm:$0xff]
    %v4345 = vld [vmem:[%s5 + $0x7cc] sm:$0xff]
    %v4346 = vld [vmem:[%s5 + $0x7d4] sm:$0xff]
    %v4347 = vld [vmem:[%s5 + $0x7dc] sm:$0xf]
    %v4348 = vld [vmem:[%s5 + $0x7e0] sm:$0xff]
    %v4349 = vld [vmem:[%s5 + $0x7e8] sm:$0xff]
    %v4350 = vld [vmem:[%s5 + $0x7f0] sm:$0xff]
    %v4351 = vld [vmem:[%s5 + $0x7f8] sm:$0xf]
    %v4352 = vld [vmem:[%s5 + $0x7fc] sm:$0xff]
    %v4353 = vld [vmem:[%s5 + $0x804] sm:$0xff]
    %v4354 = vld [vmem:[%s5 + $0x80c] sm:$0xff]
    %v4355 = vld [vmem:[%s5 + $0x814] sm:$0xf]
    %v4356 = vld [vmem:[%s5 + $0x818] sm:$0xff]
    %v4357 = vld [vmem:[%s5 + $0x820] sm:$0xff]
    %v4358 = vld [vmem:[%s5 + $0x828] sm:$0xff]
    %v4359 = vld [vmem:[%s5 + $0x830] sm:$0xf]
    %v4360 = vld [vmem:[%s5 + $0x834] sm:$0xff]
    %v4361 = vld [vmem:[%s5 + $0x83c] sm:$0xff]
    %v4362 = vld [vmem:[%s5 + $0x844] sm:$0xff]
    %v4363 = vld [vmem:[%s5 + $0x84c] sm:$0xf]
    %v4364 = vld [vmem:[%s5 + $0x850] sm:$0xff]
    %v4365 = vld [vmem:[%s5 + $0x858] sm:$0xff]
    %v4366 = vld [vmem:[%s5 + $0x860] sm:$0xff]
    %v4367 = vld [vmem:[%s5 + $0x868] sm:$0xf]
    %v4368 = vld [vmem:[%s5 + $0x86c] sm:$0xff]
    %v4369 = vld [vmem:[%s5 + $0x874] sm:$0xff]
    %v4370 = vld [vmem:[%s5 + $0x87c] sm:$0xff]
    %v4371 = vld [vmem:[%s5 + $0x884] sm:$0xf]
    %v4372 = vld [vmem:[%s5 + $0x888] sm:$0xff]
    %v4373 = vld [vmem:[%s5 + $0x890] sm:$0xff]
    %v4374 = vld [vmem:[%s5 + $0x898] sm:$0xff]
    %v4375 = vld [vmem:[%s5 + $0x8a0] sm:$0xf]
    %v4376 = vld [vmem:[%s5 + $0x8a4] sm:$0xff]
    %v4377 = vld [vmem:[%s5 + $0x8ac] sm:$0xff]
    %v4378 = vld [vmem:[%s5 + $0x8b4] sm:$0xff]
    %v4379 = vld [vmem:[%s5 + $0x8bc] sm:$0xf]
    %v4380 = vld [vmem:[%s5 + $0x8c0] sm:$0xff]
    %v4381 = vld [vmem:[%s5 + $0x8c8] sm:$0xff]
    %v4382 = vld [vmem:[%s5 + $0x8d0] sm:$0xff]
    %v4383 = vld [vmem:[%s5 + $0x8d8] sm:$0xf]
    %v4384 = vld [vmem:[%s5 + $0x8dc] sm:$0xff]
    %v4385 = vld [vmem:[%s5 + $0x8e4] sm:$0xff]
    %v4386 = vld [vmem:[%s5 + $0x8ec] sm:$0xff]
    %v4387 = vld [vmem:[%s5 + $0x8f4] sm:$0xf]
    %v4388 = vld [vmem:[%s5 + $0x8f8] sm:$0xff]
    %v4389 = vld [vmem:[%s5 + $0x900] sm:$0xff]
    %v4390 = vld [vmem:[%s5 + $0x908] sm:$0xff]
    %v4391 = vld [vmem:[%s5 + $0x910] sm:$0xf]
    %v4392 = vld [vmem:[%s5 + $0x914] sm:$0xff]
    %v4393 = vld [vmem:[%s5 + $0x91c] sm:$0xff]
    %v4394 = vld [vmem:[%s5 + $0x924] sm:$0xff]
    %v4395 = vld [vmem:[%s5 + $0x92c] sm:$0xf]
    %v4396 = vld [vmem:[%s5 + $0x930] sm:$0xff]
    %v4397 = vld [vmem:[%s5 + $0x938] sm:$0xff]
    %v4398 = vld [vmem:[%s5 + $0x940] sm:$0xff]
    %v4399 = vld [vmem:[%s5 + $0x948] sm:$0xf]
    %v4400 = vld [vmem:[%s5 + $0x94c] sm:$0xff]
    %v4401 = vld [vmem:[%s5 + $0x954] sm:$0xff]
    %v4402 = vld [vmem:[%s5 + $0x95c] sm:$0xff]
    %v4403 = vld [vmem:[%s5 + $0x964] sm:$0xf]
    %v4404 = vld [vmem:[%s5 + $0x968] sm:$0xff]
    %v4405 = vld [vmem:[%s5 + $0x970] sm:$0xff]
    %v4406 = vld [vmem:[%s5 + $0x978] sm:$0xff]
    %v4407 = vld [vmem:[%s5 + $0x980] sm:$0xf]
    %v4408 = vld [vmem:[%s5 + $0x984] sm:$0xff]
    %v4409 = vld [vmem:[%s5 + $0x98c] sm:$0xff]
    %v4410 = vld [vmem:[%s5 + $0x994] sm:$0xff]
    %v4411 = vld [vmem:[%s5 + $0x99c] sm:$0xf]
    %v4412 = vld [vmem:[%s5 + $0x9a0] sm:$0xff]
    %v4413 = vld [vmem:[%s5 + $0x9a8] sm:$0xff]
    %v4414 = vld [vmem:[%s5 + $0x9b0] sm:$0xff]
    %v4415 = vld [vmem:[%s5 + $0x9b8] sm:$0xf]
    %v4416 = vld [vmem:[%s5 + $0x9bc] sm:$0xff]
    %v4417 = vld [vmem:[%s5 + $0x9c4] sm:$0xff]
    %v4418 = vld [vmem:[%s5 + $0x9cc] sm:$0xff]
    %v4419 = vld [vmem:[%s5 + $0x9d4] sm:$0xf]
    %v4420 = vld [vmem:[%s5 + $0x9d8] sm:$0xff]
    %v4421 = vld [vmem:[%s5 + $0x9e0] sm:$0xff]
    %v4422 = vld [vmem:[%s5 + $0x9e8] sm:$0xff]
    %v4423 = vld [vmem:[%s5 + $0x9f0] sm:$0xf]
    %v4424 = vld [vmem:[%s5 + $0x9f4] sm:$0xff]
    %v4425 = vld [vmem:[%s5 + $0x9fc] sm:$0xff]
    %v4426 = vld [vmem:[%s5 + $0xa04] sm:$0xff]
    %v4427 = vld [vmem:[%s5 + $0xa0c] sm:$0xf]
    %v4428 = vld [vmem:[%s5 + $0xa10] sm:$0xff]
    %v4429 = vld [vmem:[%s5 + $0xa18] sm:$0xff]
    %v4430 = vld [vmem:[%s5 + $0xa20] sm:$0xff]
    %v4431 = vld [vmem:[%s5 + $0xa28] sm:$0xf]
    %v4432 = vld [vmem:[%s5 + $0xa2c] sm:$0xff]
    %v4433 = vld [vmem:[%s5 + $0xa34] sm:$0xff]
    %v4434 = vld [vmem:[%s5 + $0xa3c] sm:$0xff]
    %v4435 = vld [vmem:[%s5 + $0xa44] sm:$0xf]
    %v4436 = vld [vmem:[%s5 + $0xa48] sm:$0xff]
    %v4437 = vld [vmem:[%s5 + $0xa50] sm:$0xff]
    %v4438 = vld [vmem:[%s5 + $0xa58] sm:$0xff]
    %v4439 = vld [vmem:[%s5 + $0xa60] sm:$0xf]
    %v4440 = vld [vmem:[%s5 + $0xa64] sm:$0xff]
    %v4441 = vld [vmem:[%s5 + $0xa6c] sm:$0xff]
    %v4442 = vld [vmem:[%s5 + $0xa74] sm:$0xff]
    %v4443 = vld [vmem:[%s5 + $0xa7c] sm:$0xf]
    %v4444 = vld [vmem:[%s5 + $0xa80] sm:$0xff]
    %v4445 = vld [vmem:[%s5 + $0xa88] sm:$0xff]
    %v4446 = vld [vmem:[%s5 + $0xa90] sm:$0xff]
    %v4447 = vld [vmem:[%s5 + $0xa98] sm:$0xf]
    %v4448 = vld [vmem:[%s5 + $0xa9c] sm:$0xff]
    %v4449 = vld [vmem:[%s5 + $0xaa4] sm:$0xff]
    %v4450 = vld [vmem:[%s5 + $0xaac] sm:$0xff]
    %v4451 = vld [vmem:[%s5 + $0xab4] sm:$0xf]
    %v4452 = vld [vmem:[%s5 + $0xab8] sm:$0xff]
    %v4453 = vld [vmem:[%s5 + $0xac0] sm:$0xff]
    %v4454 = vld [vmem:[%s5 + $0xac8] sm:$0xff]
    %v4455 = vld [vmem:[%s5 + $0xad0] sm:$0xf]
    %v4456 = vld [vmem:[%s5 + $0xad4] sm:$0xff]
    %v4457 = vld [vmem:[%s5 + $0xadc] sm:$0xff]
    %v4458 = vld [vmem:[%s5 + $0xae4] sm:$0xff]
    %v4459 = vld [vmem:[%s5 + $0xaec] sm:$0xf]
    %v4460 = vld [vmem:[%s5 + $0xaf0] sm:$0xff]
    %v4461 = vld [vmem:[%s5 + $0xaf8] sm:$0xff]
    %v4462 = vld [vmem:[%s5 + $0xb00] sm:$0xff]
    %v4463 = vld [vmem:[%s5 + $0xb08] sm:$0xf]
    %v4464 = vld [vmem:[%s5 + $0xb0c] sm:$0xff]
    %v4465 = vld [vmem:[%s5 + $0xb14] sm:$0xff]
    %v4466 = vld [vmem:[%s5 + $0xb1c] sm:$0xff]
    %v4467 = vld [vmem:[%s5 + $0xb24] sm:$0xf]
    %v4468 = vld [vmem:[%s5 + $0xb28] sm:$0xff]
    %v4469 = vld [vmem:[%s5 + $0xb30] sm:$0xff]
    %v4470 = vld [vmem:[%s5 + $0xb38] sm:$0xff]
    %v4471 = vld [vmem:[%s5 + $0xb40] sm:$0xf]
    %v4472 = vld [vmem:[%s5 + $0xb44] sm:$0xff]
    %v4473 = vld [vmem:[%s5 + $0xb4c] sm:$0xff]
    %v4474 = vld [vmem:[%s5 + $0xb54] sm:$0xff]
    %v4475 = vld [vmem:[%s5 + $0xb5c] sm:$0xf]
    %v4476 = vld [vmem:[%s5 + $0xb60] sm:$0xff]
    %v4477 = vld [vmem:[%s5 + $0xb68] sm:$0xff]
    %v4478 = vld [vmem:[%s5 + $0xb70] sm:$0xff]
    %v4479 = vld [vmem:[%s5 + $0xb78] sm:$0xf]
    %v4480 = vld [vmem:[%s5 + $0xb7c] sm:$0xff]
    %v4481 = vld [vmem:[%s5 + $0xb84] sm:$0xff]
    %v4482 = vld [vmem:[%s5 + $0xb8c] sm:$0xff]
    %v4483 = vld [vmem:[%s5 + $0xb94] sm:$0xf]
    %v4484 = vld [vmem:[%s5 + $0xb98] sm:$0xff]
    %v4485 = vld [vmem:[%s5 + $0xba0] sm:$0xff]
    %v4486 = vld [vmem:[%s5 + $0xba8] sm:$0xff]
    %v4487 = vld [vmem:[%s5 + $0xbb0] sm:$0xf]
    %v4488 = vld [vmem:[%s5 + $0xbb4] sm:$0xff]
    %v4489 = vld [vmem:[%s5 + $0xbbc] sm:$0xff]
    %v4490 = vld [vmem:[%s5 + $0xbc4] sm:$0xff]
    %v4491 = vld [vmem:[%s5 + $0xbcc] sm:$0xf]
    %v4492 = vld [vmem:[%s5 + $0xbd0] sm:$0xff]
    %v4493 = vld [vmem:[%s5 + $0xbd8] sm:$0xff]
    %v4494 = vld [vmem:[%s5 + $0xbe0] sm:$0xff]
    %v4495 = vld [vmem:[%s5 + $0xbe8] sm:$0xf]
    %v4496 = vld [vmem:[%s5 + $0xbec] sm:$0xff]
    %v4497 = vld [vmem:[%s5 + $0xbf4] sm:$0xff]
    %v4498 = vld [vmem:[%s5 + $0xbfc] sm:$0xff]
    %v4499 = vld [vmem:[%s5 + $0xc04] sm:$0xf]
    %v4500 = vld [vmem:[%s5 + $0xc08] sm:$0xff]
    %v4501 = vld [vmem:[%s5 + $0xc10] sm:$0xff]
    %v4502 = vld [vmem:[%s5 + $0xc18] sm:$0xff]
    %v4503 = vld [vmem:[%s5 + $0xc20] sm:$0xf]
    %v4504 = vld [vmem:[%s5 + $0xc24] sm:$0xff]
    %v4505 = vld [vmem:[%s5 + $0xc2c] sm:$0xff]
    %v4506 = vld [vmem:[%s5 + $0xc34] sm:$0xff]
    %v4507 = vld [vmem:[%s5 + $0xc3c] sm:$0xf]
    %v4508 = vld [vmem:[%s5 + $0xc40] sm:$0xff]
    %v4509 = vld [vmem:[%s5 + $0xc48] sm:$0xff]
    %v4510 = vld [vmem:[%s5 + $0xc50] sm:$0xff]
    %v4511 = vld [vmem:[%s5 + $0xc58] sm:$0xf]
    %v4512 = vld [vmem:[%s5 + $0xc5c] sm:$0xff]
    %v4513 = vld [vmem:[%s5 + $0xc64] sm:$0xff]
    %v4514 = vld [vmem:[%s5 + $0xc6c] sm:$0xff]
    %v4515 = vld [vmem:[%s5 + $0xc74] sm:$0xf]
    %v4516 = vld [vmem:[%s5 + $0xc78] sm:$0xff]
    %v4517 = vld [vmem:[%s5 + $0xc80] sm:$0xff]
    %v4518 = vld [vmem:[%s5 + $0xc88] sm:$0xff]
    %v4519 = vld [vmem:[%s5 + $0xc90] sm:$0xf]
    %v4520 = vld [vmem:[%s5 + $0xc94] sm:$0xff]
    %v4521 = vld [vmem:[%s5 + $0xc9c] sm:$0xff]
    %v4522 = vld [vmem:[%s5 + $0xca4] sm:$0xff]
    %v4523 = vld [vmem:[%s5 + $0xcac] sm:$0xf]
    %v4524 = vld [vmem:[%s5 + $0xcb0] sm:$0xff]
    %v4525 = vld [vmem:[%s5 + $0xcb8] sm:$0xff]
    %v4526 = vld [vmem:[%s5 + $0xcc0] sm:$0xff]
    %v4527 = vld [vmem:[%s5 + $0xcc8] sm:$0xf]
    %v4528 = vld [vmem:[%s5 + $0xccc] sm:$0xff]
    %v4529 = vld [vmem:[%s5 + $0xcd4] sm:$0xff]
    %v4530 = vld [vmem:[%s5 + $0xcdc] sm:$0xff]
    %v4531 = vld [vmem:[%s5 + $0xce4] sm:$0xf]
    %v4532 = vld [vmem:[%s5 + $0xce8] sm:$0xff]
    %v4533 = vld [vmem:[%s5 + $0xcf0] sm:$0xff]
    %v4534 = vld [vmem:[%s5 + $0xcf8] sm:$0xff]
    %v4535 = vld [vmem:[%s5 + $0xd00] sm:$0xf]
    %v4536 = vld [vmem:[%s5 + $0xd04] sm:$0xff]
    %v4537 = vld [vmem:[%s5 + $0xd0c] sm:$0xff]
    %v4538 = vld [vmem:[%s5 + $0xd14] sm:$0xff]
    %v4539 = vld [vmem:[%s5 + $0xd1c] sm:$0xf]
    %v4540 = vld [vmem:[%s5 + $0xd20] sm:$0xff]
    %v4541 = vld [vmem:[%s5 + $0xd28] sm:$0xff]
    %v4542 = vld [vmem:[%s5 + $0xd30] sm:$0xff]
    %v4543 = vld [vmem:[%s5 + $0xd38] sm:$0xf]
    %v4544 = vld [vmem:[%s5 + $0xd3c] sm:$0xff]
    %v4545 = vld [vmem:[%s5 + $0xd44] sm:$0xff]
    %v4546 = vld [vmem:[%s5 + $0xd4c] sm:$0xff]
    %v4547 = vld [vmem:[%s5 + $0xd54] sm:$0xf]
    %v4548 = vld [vmem:[%s5 + $0xd58] sm:$0xff]
    %v4549 = vld [vmem:[%s5 + $0xd60] sm:$0xff]
    %v4550 = vld [vmem:[%s5 + $0xd68] sm:$0xff]
    %v4551 = vld [vmem:[%s5 + $0xd70] sm:$0xf]
    %v4552 = vld [vmem:[%s5 + $0xd74] sm:$0xff]
    %v4553 = vld [vmem:[%s5 + $0xd7c] sm:$0xff]
    %v4554 = vld [vmem:[%s5 + $0xd84] sm:$0xff]
    %v4555 = vld [vmem:[%s5 + $0xd8c] sm:$0xf]
    %v4556 = vld [vmem:[%s5 + $0xd90] sm:$0xff]
    %v4557 = vld [vmem:[%s5 + $0xd98] sm:$0xff]
    %v4558 = vld [vmem:[%s5 + $0xda0] sm:$0xff]
    %v4559 = vld [vmem:[%s5 + $0xda8] sm:$0xf]
    %v4560 = vld [vmem:[%s5 + $0xdac] sm:$0xff]
    %v4561 = vld [vmem:[%s5 + $0xdb4] sm:$0xff]
    %v4562 = vld [vmem:[%s5 + $0xdbc] sm:$0xff]
    %v4563 = vld [vmem:[%s5 + $0xdc4] sm:$0xf]
    %v4564 = vld [vmem:[%s5 + $0xdc8] sm:$0xff]
    %v4565 = vld [vmem:[%s5 + $0xdd0] sm:$0xff]
    %v4566 = vld [vmem:[%s5 + $0xdd8] sm:$0xff]
    %v4567 = vld [vmem:[%s5 + $0xde0] sm:$0xf]
    %v4568 = vld [vmem:[%s5 + $0xde4] sm:$0xff]
    %v4569 = vld [vmem:[%s5 + $0xdec] sm:$0xff]
    %v4570 = vld [vmem:[%s5 + $0xdf4] sm:$0xff]
    %v4571 = vld [vmem:[%s5 + $0xdfc] sm:$0xf]
    %v4572 = vld [vmem:[%s6] sm:$0x7f]
    %v4574 = vlaneseq
    %v4575 = vshrl.u32 %v4574, 7
    %v4576 = vsub.s32 0, %v4575
    %v4577 = vrot.slane %v4572, %v4576
    %v4578 = vlaneseq
    %v4579 = vshrl.u32 %v4578, 7
    %v4580 = vsub.s32 1, %v4579
    %v4581 = vrot.slane %v4572, %v4580
    %v4582 = vlaneseq
    %v4583 = vshrl.u32 %v4582, 7
    %v4584 = vsub.s32 2, %v4583
    %v4585 = vrot.slane %v4572, %v4584
    %v4586 = vlaneseq
    %v4587 = vshrl.u32 %v4586, 7
    %v4588 = vsub.s32 3, %v4587
    %v4589 = vrot.slane %v4572, %v4588
    %v4590 = vlaneseq
    %v4591 = vshrl.u32 %v4590, 7
    %v4592 = vsub.s32 4, %v4591
    %v4593 = vrot.slane %v4572, %v4592
    %v4594 = vlaneseq
    %v4595 = vshrl.u32 %v4594, 7
    %v4596 = vsub.s32 5, %v4595
    %v4597 = vrot.slane %v4572, %v4596
    %v4598 = vlaneseq
    %v4599 = vshrl.u32 %v4598, 7
    %v4600 = vsub.s32 6, %v4599
    %v4601 = vrot.slane %v4572, %v4600
    %v5121 = vunpack.c.l.b16 %v4060
    %v5122 = vunpack.c.h.b16 %v4060
    %v5123 = vunpack.c.l.b16 %v4061
    %v5124 = vunpack.c.h.b16 %v4061
    %v5125 = vunpack.c.l.b16 %v4062
    %v5126 = vunpack.c.h.b16 %v4062
    %v5127 = vunpack.c.l.b16 %v4063
    %v5128 = vunpack.c.l.b16 %v4064
    %v5129 = vunpack.c.h.b16 %v4064
    %v5130 = vunpack.c.l.b16 %v4065
    %v5131 = vunpack.c.h.b16 %v4065
    %v5132 = vunpack.c.l.b16 %v4066
    %v5133 = vunpack.c.h.b16 %v4066
    %v5134 = vunpack.c.l.b16 %v4067
    %v5135 = vunpack.c.l.b16 %v4068
    %v5136 = vunpack.c.h.b16 %v4068
    %v5137 = vunpack.c.l.b16 %v4069
    %v5138 = vunpack.c.h.b16 %v4069
    %v5139 = vunpack.c.l.b16 %v4070
    %v5140 = vunpack.c.h.b16 %v4070
    %v5141 = vunpack.c.l.b16 %v4071
    %v5142 = vunpack.c.l.b16 %v4072
    %v5143 = vunpack.c.h.b16 %v4072
    %v5144 = vunpack.c.l.b16 %v4073
    %v5145 = vunpack.c.h.b16 %v4073
    %v5146 = vunpack.c.l.b16 %v4074
    %v5147 = vunpack.c.h.b16 %v4074
    %v5148 = vunpack.c.l.b16 %v4075
    %v5149 = vunpack.c.l.b16 %v4076
    %v5150 = vunpack.c.h.b16 %v4076
    %v5151 = vunpack.c.l.b16 %v4077
    %v5152 = vunpack.c.h.b16 %v4077
    %v5153 = vunpack.c.l.b16 %v4078
    %v5154 = vunpack.c.h.b16 %v4078
    %v5155 = vunpack.c.l.b16 %v4079
    %v5156 = vunpack.c.l.b16 %v4080
    %v5157 = vunpack.c.h.b16 %v4080
    %v5158 = vunpack.c.l.b16 %v4081
    %v5159 = vunpack.c.h.b16 %v4081
    %v5160 = vunpack.c.l.b16 %v4082
    %v5161 = vunpack.c.h.b16 %v4082
    %v5162 = vunpack.c.l.b16 %v4083
    %v5163 = vunpack.c.l.b16 %v4084
    %v5164 = vunpack.c.h.b16 %v4084
    %v5165 = vunpack.c.l.b16 %v4085
    %v5166 = vunpack.c.h.b16 %v4085
    %v5167 = vunpack.c.l.b16 %v4086
    %v5168 = vunpack.c.h.b16 %v4086
    %v5169 = vunpack.c.l.b16 %v4087
    %v5170 = vunpack.c.l.b16 %v4088
    %v5171 = vunpack.c.h.b16 %v4088
    %v5172 = vunpack.c.l.b16 %v4089
    %v5173 = vunpack.c.h.b16 %v4089
    %v5174 = vunpack.c.l.b16 %v4090
    %v5175 = vunpack.c.h.b16 %v4090
    %v5176 = vunpack.c.l.b16 %v4091
    %v5177 = vunpack.c.l.b16 %v4092
    %v5178 = vunpack.c.h.b16 %v4092
    %v5179 = vunpack.c.l.b16 %v4093
    %v5180 = vunpack.c.h.b16 %v4093
    %v5181 = vunpack.c.l.b16 %v4094
    %v5182 = vunpack.c.h.b16 %v4094
    %v5183 = vunpack.c.l.b16 %v4095
    %v5184 = vunpack.c.l.b16 %v4096
    %v5185 = vunpack.c.h.b16 %v4096
    %v5186 = vunpack.c.l.b16 %v4097
    %v5187 = vunpack.c.h.b16 %v4097
    %v5188 = vunpack.c.l.b16 %v4098
    %v5189 = vunpack.c.h.b16 %v4098
    %v5190 = vunpack.c.l.b16 %v4099
    %v5191 = vunpack.c.l.b16 %v4100
    %v5192 = vunpack.c.h.b16 %v4100
    %v5193 = vunpack.c.l.b16 %v4101
    %v5194 = vunpack.c.h.b16 %v4101
    %v5195 = vunpack.c.l.b16 %v4102
    %v5196 = vunpack.c.h.b16 %v4102
    %v5197 = vunpack.c.l.b16 %v4103
    %v5198 = vunpack.c.l.b16 %v4104
    %v5199 = vunpack.c.h.b16 %v4104
    %v5200 = vunpack.c.l.b16 %v4105
    %v5201 = vunpack.c.h.b16 %v4105
    %v5202 = vunpack.c.l.b16 %v4106
    %v5203 = vunpack.c.h.b16 %v4106
    %v5204 = vunpack.c.l.b16 %v4107
    %v5205 = vunpack.c.l.b16 %v4108
    %v5206 = vunpack.c.h.b16 %v4108
    %v5207 = vunpack.c.l.b16 %v4109
    %v5208 = vunpack.c.h.b16 %v4109
    %v5209 = vunpack.c.l.b16 %v4110
    %v5210 = vunpack.c.h.b16 %v4110
    %v5211 = vunpack.c.l.b16 %v4111
    %v5212 = vunpack.c.l.b16 %v4112
    %v5213 = vunpack.c.h.b16 %v4112
    %v5214 = vunpack.c.l.b16 %v4113
    %v5215 = vunpack.c.h.b16 %v4113
    %v5216 = vunpack.c.l.b16 %v4114
    %v5217 = vunpack.c.h.b16 %v4114
    %v5218 = vunpack.c.l.b16 %v4115
    %v5219 = vunpack.c.l.b16 %v4116
    %v5220 = vunpack.c.h.b16 %v4116
    %v5221 = vunpack.c.l.b16 %v4117
    %v5222 = vunpack.c.h.b16 %v4117
    %v5223 = vunpack.c.l.b16 %v4118
    %v5224 = vunpack.c.h.b16 %v4118
    %v5225 = vunpack.c.l.b16 %v4119
    %v5226 = vunpack.c.l.b16 %v4120
    %v5227 = vunpack.c.h.b16 %v4120
    %v5228 = vunpack.c.l.b16 %v4121
    %v5229 = vunpack.c.h.b16 %v4121
    %v5230 = vunpack.c.l.b16 %v4122
    %v5231 = vunpack.c.h.b16 %v4122
    %v5232 = vunpack.c.l.b16 %v4123
    %v5233 = vunpack.c.l.b16 %v4124
    %v5234 = vunpack.c.h.b16 %v4124
    %v5235 = vunpack.c.l.b16 %v4125
    %v5236 = vunpack.c.h.b16 %v4125
    %v5237 = vunpack.c.l.b16 %v4126
    %v5238 = vunpack.c.h.b16 %v4126
    %v5239 = vunpack.c.l.b16 %v4127
    %v5240 = vunpack.c.l.b16 %v4128
    %v5241 = vunpack.c.h.b16 %v4128
    %v5242 = vunpack.c.l.b16 %v4129
    %v5243 = vunpack.c.h.b16 %v4129
    %v5244 = vunpack.c.l.b16 %v4130
    %v5245 = vunpack.c.h.b16 %v4130
    %v5246 = vunpack.c.l.b16 %v4131
    %v5247 = vunpack.c.l.b16 %v4132
    %v5248 = vunpack.c.h.b16 %v4132
    %v5249 = vunpack.c.l.b16 %v4133
    %v5250 = vunpack.c.h.b16 %v4133
    %v5251 = vunpack.c.l.b16 %v4134
    %v5252 = vunpack.c.h.b16 %v4134
    %v5253 = vunpack.c.l.b16 %v4135
    %v5254 = vunpack.c.l.b16 %v4136
    %v5255 = vunpack.c.h.b16 %v4136
    %v5256 = vunpack.c.l.b16 %v4137
    %v5257 = vunpack.c.h.b16 %v4137
    %v5258 = vunpack.c.l.b16 %v4138
    %v5259 = vunpack.c.h.b16 %v4138
    %v5260 = vunpack.c.l.b16 %v4139
    %v5261 = vunpack.c.l.b16 %v4140
    %v5262 = vunpack.c.h.b16 %v4140
    %v5263 = vunpack.c.l.b16 %v4141
    %v5264 = vunpack.c.h.b16 %v4141
    %v5265 = vunpack.c.l.b16 %v4142
    %v5266 = vunpack.c.h.b16 %v4142
    %v5267 = vunpack.c.l.b16 %v4143
    %v5268 = vunpack.c.l.b16 %v4144
    %v5269 = vunpack.c.h.b16 %v4144
    %v5270 = vunpack.c.l.b16 %v4145
    %v5271 = vunpack.c.h.b16 %v4145
    %v5272 = vunpack.c.l.b16 %v4146
    %v5273 = vunpack.c.h.b16 %v4146
    %v5274 = vunpack.c.l.b16 %v4147
    %v5275 = vunpack.c.l.b16 %v4148
    %v5276 = vunpack.c.h.b16 %v4148
    %v5277 = vunpack.c.l.b16 %v4149
    %v5278 = vunpack.c.h.b16 %v4149
    %v5279 = vunpack.c.l.b16 %v4150
    %v5280 = vunpack.c.h.b16 %v4150
    %v5281 = vunpack.c.l.b16 %v4151
    %v5282 = vunpack.c.l.b16 %v4152
    %v5283 = vunpack.c.h.b16 %v4152
    %v5284 = vunpack.c.l.b16 %v4153
    %v5285 = vunpack.c.h.b16 %v4153
    %v5286 = vunpack.c.l.b16 %v4154
    %v5287 = vunpack.c.h.b16 %v4154
    %v5288 = vunpack.c.l.b16 %v4155
    %v5289 = vunpack.c.l.b16 %v4156
    %v5290 = vunpack.c.h.b16 %v4156
    %v5291 = vunpack.c.l.b16 %v4157
    %v5292 = vunpack.c.h.b16 %v4157
    %v5293 = vunpack.c.l.b16 %v4158
    %v5294 = vunpack.c.h.b16 %v4158
    %v5295 = vunpack.c.l.b16 %v4159
    %v5296 = vunpack.c.l.b16 %v4160
    %v5297 = vunpack.c.h.b16 %v4160
    %v5298 = vunpack.c.l.b16 %v4161
    %v5299 = vunpack.c.h.b16 %v4161
    %v5300 = vunpack.c.l.b16 %v4162
    %v5301 = vunpack.c.h.b16 %v4162
    %v5302 = vunpack.c.l.b16 %v4163
    %v5303 = vunpack.c.l.b16 %v4164
    %v5304 = vunpack.c.h.b16 %v4164
    %v5305 = vunpack.c.l.b16 %v4165
    %v5306 = vunpack.c.h.b16 %v4165
    %v5307 = vunpack.c.l.b16 %v4166
    %v5308 = vunpack.c.h.b16 %v4166
    %v5309 = vunpack.c.l.b16 %v4167
    %v5310 = vunpack.c.l.b16 %v4168
    %v5311 = vunpack.c.h.b16 %v4168
    %v5312 = vunpack.c.l.b16 %v4169
    %v5313 = vunpack.c.h.b16 %v4169
    %v5314 = vunpack.c.l.b16 %v4170
    %v5315 = vunpack.c.h.b16 %v4170
    %v5316 = vunpack.c.l.b16 %v4171
    %v5317 = vunpack.c.l.b16 %v4172
    %v5318 = vunpack.c.h.b16 %v4172
    %v5319 = vunpack.c.l.b16 %v4173
    %v5320 = vunpack.c.h.b16 %v4173
    %v5321 = vunpack.c.l.b16 %v4174
    %v5322 = vunpack.c.h.b16 %v4174
    %v5323 = vunpack.c.l.b16 %v4175
    %v5324 = vunpack.c.l.b16 %v4176
    %v5325 = vunpack.c.h.b16 %v4176
    %v5326 = vunpack.c.l.b16 %v4177
    %v5327 = vunpack.c.h.b16 %v4177
    %v5328 = vunpack.c.l.b16 %v4178
    %v5329 = vunpack.c.h.b16 %v4178
    %v5330 = vunpack.c.l.b16 %v4179
    %v5331 = vunpack.c.l.b16 %v4180
    %v5332 = vunpack.c.h.b16 %v4180
    %v5333 = vunpack.c.l.b16 %v4181
    %v5334 = vunpack.c.h.b16 %v4181
    %v5335 = vunpack.c.l.b16 %v4182
    %v5336 = vunpack.c.h.b16 %v4182
    %v5337 = vunpack.c.l.b16 %v4183
    %v5338 = vunpack.c.l.b16 %v4184
    %v5339 = vunpack.c.h.b16 %v4184
    %v5340 = vunpack.c.l.b16 %v4185
    %v5341 = vunpack.c.h.b16 %v4185
    %v5342 = vunpack.c.l.b16 %v4186
    %v5343 = vunpack.c.h.b16 %v4186
    %v5344 = vunpack.c.l.b16 %v4187
    %v5345 = vunpack.c.l.b16 %v4188
    %v5346 = vunpack.c.h.b16 %v4188
    %v5347 = vunpack.c.l.b16 %v4189
    %v5348 = vunpack.c.h.b16 %v4189
    %v5349 = vunpack.c.l.b16 %v4190
    %v5350 = vunpack.c.h.b16 %v4190
    %v5351 = vunpack.c.l.b16 %v4191
    %v5352 = vunpack.c.l.b16 %v4192
    %v5353 = vunpack.c.h.b16 %v4192
    %v5354 = vunpack.c.l.b16 %v4193
    %v5355 = vunpack.c.h.b16 %v4193
    %v5356 = vunpack.c.l.b16 %v4194
    %v5357 = vunpack.c.h.b16 %v4194
    %v5358 = vunpack.c.l.b16 %v4195
    %v5359 = vunpack.c.l.b16 %v4196
    %v5360 = vunpack.c.h.b16 %v4196
    %v5361 = vunpack.c.l.b16 %v4197
    %v5362 = vunpack.c.h.b16 %v4197
    %v5363 = vunpack.c.l.b16 %v4198
    %v5364 = vunpack.c.h.b16 %v4198
    %v5365 = vunpack.c.l.b16 %v4199
    %v5366 = vunpack.c.l.b16 %v4200
    %v5367 = vunpack.c.h.b16 %v4200
    %v5368 = vunpack.c.l.b16 %v4201
    %v5369 = vunpack.c.h.b16 %v4201
    %v5370 = vunpack.c.l.b16 %v4202
    %v5371 = vunpack.c.h.b16 %v4202
    %v5372 = vunpack.c.l.b16 %v4203
    %v5373 = vunpack.c.l.b16 %v4204
    %v5374 = vunpack.c.h.b16 %v4204
    %v5375 = vunpack.c.l.b16 %v4205
    %v5376 = vunpack.c.h.b16 %v4205
    %v5377 = vunpack.c.l.b16 %v4206
    %v5378 = vunpack.c.h.b16 %v4206
    %v5379 = vunpack.c.l.b16 %v4207
    %v5380 = vunpack.c.l.b16 %v4208
    %v5381 = vunpack.c.h.b16 %v4208
    %v5382 = vunpack.c.l.b16 %v4209
    %v5383 = vunpack.c.h.b16 %v4209
    %v5384 = vunpack.c.l.b16 %v4210
    %v5385 = vunpack.c.h.b16 %v4210
    %v5386 = vunpack.c.l.b16 %v4211
    %v5387 = vunpack.c.l.b16 %v4212
    %v5388 = vunpack.c.h.b16 %v4212
    %v5389 = vunpack.c.l.b16 %v4213
    %v5390 = vunpack.c.h.b16 %v4213
    %v5391 = vunpack.c.l.b16 %v4214
    %v5392 = vunpack.c.h.b16 %v4214
    %v5393 = vunpack.c.l.b16 %v4215
    %v5394 = vunpack.c.l.b16 %v4216
    %v5395 = vunpack.c.h.b16 %v4216
    %v5396 = vunpack.c.l.b16 %v4217
    %v5397 = vunpack.c.h.b16 %v4217
    %v5398 = vunpack.c.l.b16 %v4218
    %v5399 = vunpack.c.h.b16 %v4218
    %v5400 = vunpack.c.l.b16 %v4219
    %v5401 = vunpack.c.l.b16 %v4220
    %v5402 = vunpack.c.h.b16 %v4220
    %v5403 = vunpack.c.l.b16 %v4221
    %v5404 = vunpack.c.h.b16 %v4221
    %v5405 = vunpack.c.l.b16 %v4222
    %v5406 = vunpack.c.h.b16 %v4222
    %v5407 = vunpack.c.l.b16 %v4223
    %v5408 = vunpack.c.l.b16 %v4224
    %v5409 = vunpack.c.h.b16 %v4224
    %v5410 = vunpack.c.l.b16 %v4225
    %v5411 = vunpack.c.h.b16 %v4225
    %v5412 = vunpack.c.l.b16 %v4226
    %v5413 = vunpack.c.h.b16 %v4226
    %v5414 = vunpack.c.l.b16 %v4227
    %v5415 = vunpack.c.l.b16 %v4228
    %v5416 = vunpack.c.h.b16 %v4228
    %v5417 = vunpack.c.l.b16 %v4229
    %v5418 = vunpack.c.h.b16 %v4229
    %v5419 = vunpack.c.l.b16 %v4230
    %v5420 = vunpack.c.h.b16 %v4230
    %v5421 = vunpack.c.l.b16 %v4231
    %v5422 = vunpack.c.l.b16 %v4232
    %v5423 = vunpack.c.h.b16 %v4232
    %v5424 = vunpack.c.l.b16 %v4233
    %v5425 = vunpack.c.h.b16 %v4233
    %v5426 = vunpack.c.l.b16 %v4234
    %v5427 = vunpack.c.h.b16 %v4234
    %v5428 = vunpack.c.l.b16 %v4235
    %v5429 = vunpack.c.l.b16 %v4236
    %v5430 = vunpack.c.h.b16 %v4236
    %v5431 = vunpack.c.l.b16 %v4237
    %v5432 = vunpack.c.h.b16 %v4237
    %v5433 = vunpack.c.l.b16 %v4238
    %v5434 = vunpack.c.h.b16 %v4238
    %v5435 = vunpack.c.l.b16 %v4239
    %v5436 = vunpack.c.l.b16 %v4240
    %v5437 = vunpack.c.h.b16 %v4240
    %v5438 = vunpack.c.l.b16 %v4241
    %v5439 = vunpack.c.h.b16 %v4241
    %v5440 = vunpack.c.l.b16 %v4242
    %v5441 = vunpack.c.h.b16 %v4242
    %v5442 = vunpack.c.l.b16 %v4243
    %v5443 = vunpack.c.l.b16 %v4244
    %v5444 = vunpack.c.h.b16 %v4244
    %v5445 = vunpack.c.l.b16 %v4245
    %v5446 = vunpack.c.h.b16 %v4245
    %v5447 = vunpack.c.l.b16 %v4246
    %v5448 = vunpack.c.h.b16 %v4246
    %v5449 = vunpack.c.l.b16 %v4247
    %v5450 = vunpack.c.l.b16 %v4248
    %v5451 = vunpack.c.h.b16 %v4248
    %v5452 = vunpack.c.l.b16 %v4249
    %v5453 = vunpack.c.h.b16 %v4249
    %v5454 = vunpack.c.l.b16 %v4250
    %v5455 = vunpack.c.h.b16 %v4250
    %v5456 = vunpack.c.l.b16 %v4251
    %v5457 = vunpack.c.l.b16 %v4252
    %v5458 = vunpack.c.h.b16 %v4252
    %v5459 = vunpack.c.l.b16 %v4253
    %v5460 = vunpack.c.h.b16 %v4253
    %v5461 = vunpack.c.l.b16 %v4254
    %v5462 = vunpack.c.h.b16 %v4254
    %v5463 = vunpack.c.l.b16 %v4255
    %v5464 = vunpack.c.l.b16 %v4256
    %v5465 = vunpack.c.h.b16 %v4256
    %v5466 = vunpack.c.l.b16 %v4257
    %v5467 = vunpack.c.h.b16 %v4257
    %v5468 = vunpack.c.l.b16 %v4258
    %v5469 = vunpack.c.h.b16 %v4258
    %v5470 = vunpack.c.l.b16 %v4259
    %v5471 = vunpack.c.l.b16 %v4260
    %v5472 = vunpack.c.h.b16 %v4260
    %v5473 = vunpack.c.l.b16 %v4261
    %v5474 = vunpack.c.h.b16 %v4261
    %v5475 = vunpack.c.l.b16 %v4262
    %v5476 = vunpack.c.h.b16 %v4262
    %v5477 = vunpack.c.l.b16 %v4263
    %v5478 = vunpack.c.l.b16 %v4264
    %v5479 = vunpack.c.h.b16 %v4264
    %v5480 = vunpack.c.l.b16 %v4265
    %v5481 = vunpack.c.h.b16 %v4265
    %v5482 = vunpack.c.l.b16 %v4266
    %v5483 = vunpack.c.h.b16 %v4266
    %v5484 = vunpack.c.l.b16 %v4267
    %v5485 = vunpack.c.l.b16 %v4268
    %v5486 = vunpack.c.h.b16 %v4268
    %v5487 = vunpack.c.l.b16 %v4269
    %v5488 = vunpack.c.h.b16 %v4269
    %v5489 = vunpack.c.l.b16 %v4270
    %v5490 = vunpack.c.h.b16 %v4270
    %v5491 = vunpack.c.l.b16 %v4271
    %v5492 = vunpack.c.l.b16 %v4272
    %v5493 = vunpack.c.h.b16 %v4272
    %v5494 = vunpack.c.l.b16 %v4273
    %v5495 = vunpack.c.h.b16 %v4273
    %v5496 = vunpack.c.l.b16 %v4274
    %v5497 = vunpack.c.h.b16 %v4274
    %v5498 = vunpack.c.l.b16 %v4275
    %v5499 = vunpack.c.l.b16 %v4276
    %v5500 = vunpack.c.h.b16 %v4276
    %v5501 = vunpack.c.l.b16 %v4277
    %v5502 = vunpack.c.h.b16 %v4277
    %v5503 = vunpack.c.l.b16 %v4278
    %v5504 = vunpack.c.h.b16 %v4278
    %v5505 = vunpack.c.l.b16 %v4279
    %v5506 = vunpack.c.l.b16 %v4280
    %v5507 = vunpack.c.h.b16 %v4280
    %v5508 = vunpack.c.l.b16 %v4281
    %v5509 = vunpack.c.h.b16 %v4281
    %v5510 = vunpack.c.l.b16 %v4282
    %v5511 = vunpack.c.h.b16 %v4282
    %v5512 = vunpack.c.l.b16 %v4283
    %v5513 = vunpack.c.l.b16 %v4284
    %v5514 = vunpack.c.h.b16 %v4284
    %v5515 = vunpack.c.l.b16 %v4285
    %v5516 = vunpack.c.h.b16 %v4285
    %v5517 = vunpack.c.l.b16 %v4286
    %v5518 = vunpack.c.h.b16 %v4286
    %v5519 = vunpack.c.l.b16 %v4287
    %v5520 = vunpack.c.l.b16 %v4288
    %v5521 = vunpack.c.h.b16 %v4288
    %v5522 = vunpack.c.l.b16 %v4289
    %v5523 = vunpack.c.h.b16 %v4289
    %v5524 = vunpack.c.l.b16 %v4290
    %v5525 = vunpack.c.h.b16 %v4290
    %v5526 = vunpack.c.l.b16 %v4291
    %v5527 = vunpack.c.l.b16 %v4292
    %v5528 = vunpack.c.h.b16 %v4292
    %v5529 = vunpack.c.l.b16 %v4293
    %v5530 = vunpack.c.h.b16 %v4293
    %v5531 = vunpack.c.l.b16 %v4294
    %v5532 = vunpack.c.h.b16 %v4294
    %v5533 = vunpack.c.l.b16 %v4295
    %v5534 = vunpack.c.l.b16 %v4296
    %v5535 = vunpack.c.h.b16 %v4296
    %v5536 = vunpack.c.l.b16 %v4297
    %v5537 = vunpack.c.h.b16 %v4297
    %v5538 = vunpack.c.l.b16 %v4298
    %v5539 = vunpack.c.h.b16 %v4298
    %v5540 = vunpack.c.l.b16 %v4299
    %v5541 = vunpack.c.l.b16 %v4300
    %v5542 = vunpack.c.h.b16 %v4300
    %v5543 = vunpack.c.l.b16 %v4301
    %v5544 = vunpack.c.h.b16 %v4301
    %v5545 = vunpack.c.l.b16 %v4302
    %v5546 = vunpack.c.h.b16 %v4302
    %v5547 = vunpack.c.l.b16 %v4303
    %v5548 = vunpack.c.l.b16 %v4304
    %v5549 = vunpack.c.h.b16 %v4304
    %v5550 = vunpack.c.l.b16 %v4305
    %v5551 = vunpack.c.h.b16 %v4305
    %v5552 = vunpack.c.l.b16 %v4306
    %v5553 = vunpack.c.h.b16 %v4306
    %v5554 = vunpack.c.l.b16 %v4307
    %v5555 = vunpack.c.l.b16 %v4308
    %v5556 = vunpack.c.h.b16 %v4308
    %v5557 = vunpack.c.l.b16 %v4309
    %v5558 = vunpack.c.h.b16 %v4309
    %v5559 = vunpack.c.l.b16 %v4310
    %v5560 = vunpack.c.h.b16 %v4310
    %v5561 = vunpack.c.l.b16 %v4311
    %v5562 = vunpack.c.l.b16 %v4312
    %v5563 = vunpack.c.h.b16 %v4312
    %v5564 = vunpack.c.l.b16 %v4313
    %v5565 = vunpack.c.h.b16 %v4313
    %v5566 = vunpack.c.l.b16 %v4314
    %v5567 = vunpack.c.h.b16 %v4314
    %v5568 = vunpack.c.l.b16 %v4315
    %v5569 = vunpack.c.l.b16 %v4316
    %v5570 = vunpack.c.h.b16 %v4316
    %v5571 = vunpack.c.l.b16 %v4317
    %v5572 = vunpack.c.h.b16 %v4317
    %v5573 = vunpack.c.l.b16 %v4318
    %v5574 = vunpack.c.h.b16 %v4318
    %v5575 = vunpack.c.l.b16 %v4319
    %v5576 = vunpack.c.l.b16 %v4320
    %v5577 = vunpack.c.h.b16 %v4320
    %v5578 = vunpack.c.l.b16 %v4321
    %v5579 = vunpack.c.h.b16 %v4321
    %v5580 = vunpack.c.l.b16 %v4322
    %v5581 = vunpack.c.h.b16 %v4322
    %v5582 = vunpack.c.l.b16 %v4323
    %v5583 = vunpack.c.l.b16 %v4324
    %v5584 = vunpack.c.h.b16 %v4324
    %v5585 = vunpack.c.l.b16 %v4325
    %v5586 = vunpack.c.h.b16 %v4325
    %v5587 = vunpack.c.l.b16 %v4326
    %v5588 = vunpack.c.h.b16 %v4326
    %v5589 = vunpack.c.l.b16 %v4327
    %v5590 = vunpack.c.l.b16 %v4328
    %v5591 = vunpack.c.h.b16 %v4328
    %v5592 = vunpack.c.l.b16 %v4329
    %v5593 = vunpack.c.h.b16 %v4329
    %v5594 = vunpack.c.l.b16 %v4330
    %v5595 = vunpack.c.h.b16 %v4330
    %v5596 = vunpack.c.l.b16 %v4331
    %v5597 = vunpack.c.l.b16 %v4332
    %v5598 = vunpack.c.h.b16 %v4332
    %v5599 = vunpack.c.l.b16 %v4333
    %v5600 = vunpack.c.h.b16 %v4333
    %v5601 = vunpack.c.l.b16 %v4334
    %v5602 = vunpack.c.h.b16 %v4334
    %v5603 = vunpack.c.l.b16 %v4335
    %v5604 = vunpack.c.l.b16 %v4336
    %v5605 = vunpack.c.h.b16 %v4336
    %v5606 = vunpack.c.l.b16 %v4337
    %v5607 = vunpack.c.h.b16 %v4337
    %v5608 = vunpack.c.l.b16 %v4338
    %v5609 = vunpack.c.h.b16 %v4338
    %v5610 = vunpack.c.l.b16 %v4339
    %v5611 = vunpack.c.l.b16 %v4340
    %v5612 = vunpack.c.h.b16 %v4340
    %v5613 = vunpack.c.l.b16 %v4341
    %v5614 = vunpack.c.h.b16 %v4341
    %v5615 = vunpack.c.l.b16 %v4342
    %v5616 = vunpack.c.h.b16 %v4342
    %v5617 = vunpack.c.l.b16 %v4343
    %v5618 = vunpack.c.l.b16 %v4344
    %v5619 = vunpack.c.h.b16 %v4344
    %v5620 = vunpack.c.l.b16 %v4345
    %v5621 = vunpack.c.h.b16 %v4345
    %v5622 = vunpack.c.l.b16 %v4346
    %v5623 = vunpack.c.h.b16 %v4346
    %v5624 = vunpack.c.l.b16 %v4347
    %v5625 = vunpack.c.l.b16 %v4348
    %v5626 = vunpack.c.h.b16 %v4348
    %v5627 = vunpack.c.l.b16 %v4349
    %v5628 = vunpack.c.h.b16 %v4349
    %v5629 = vunpack.c.l.b16 %v4350
    %v5630 = vunpack.c.h.b16 %v4350
    %v5631 = vunpack.c.l.b16 %v4351
    %v5632 = vunpack.c.l.b16 %v4352
    %v5633 = vunpack.c.h.b16 %v4352
    %v5634 = vunpack.c.l.b16 %v4353
    %v5635 = vunpack.c.h.b16 %v4353
    %v5636 = vunpack.c.l.b16 %v4354
    %v5637 = vunpack.c.h.b16 %v4354
    %v5638 = vunpack.c.l.b16 %v4355
    %v5639 = vunpack.c.l.b16 %v4356
    %v5640 = vunpack.c.h.b16 %v4356
    %v5641 = vunpack.c.l.b16 %v4357
    %v5642 = vunpack.c.h.b16 %v4357
    %v5643 = vunpack.c.l.b16 %v4358
    %v5644 = vunpack.c.h.b16 %v4358
    %v5645 = vunpack.c.l.b16 %v4359
    %v5646 = vunpack.c.l.b16 %v4360
    %v5647 = vunpack.c.h.b16 %v4360
    %v5648 = vunpack.c.l.b16 %v4361
    %v5649 = vunpack.c.h.b16 %v4361
    %v5650 = vunpack.c.l.b16 %v4362
    %v5651 = vunpack.c.h.b16 %v4362
    %v5652 = vunpack.c.l.b16 %v4363
    %v5653 = vunpack.c.l.b16 %v4364
    %v5654 = vunpack.c.h.b16 %v4364
    %v5655 = vunpack.c.l.b16 %v4365
    %v5656 = vunpack.c.h.b16 %v4365
    %v5657 = vunpack.c.l.b16 %v4366
    %v5658 = vunpack.c.h.b16 %v4366
    %v5659 = vunpack.c.l.b16 %v4367
    %v5660 = vunpack.c.l.b16 %v4368
    %v5661 = vunpack.c.h.b16 %v4368
    %v5662 = vunpack.c.l.b16 %v4369
    %v5663 = vunpack.c.h.b16 %v4369
    %v5664 = vunpack.c.l.b16 %v4370
    %v5665 = vunpack.c.h.b16 %v4370
    %v5666 = vunpack.c.l.b16 %v4371
    %v5667 = vunpack.c.l.b16 %v4372
    %v5668 = vunpack.c.h.b16 %v4372
    %v5669 = vunpack.c.l.b16 %v4373
    %v5670 = vunpack.c.h.b16 %v4373
    %v5671 = vunpack.c.l.b16 %v4374
    %v5672 = vunpack.c.h.b16 %v4374
    %v5673 = vunpack.c.l.b16 %v4375
    %v5674 = vunpack.c.l.b16 %v4376
    %v5675 = vunpack.c.h.b16 %v4376
    %v5676 = vunpack.c.l.b16 %v4377
    %v5677 = vunpack.c.h.b16 %v4377
    %v5678 = vunpack.c.l.b16 %v4378
    %v5679 = vunpack.c.h.b16 %v4378
    %v5680 = vunpack.c.l.b16 %v4379
    %v5681 = vunpack.c.l.b16 %v4380
    %v5682 = vunpack.c.h.b16 %v4380
    %v5683 = vunpack.c.l.b16 %v4381
    %v5684 = vunpack.c.h.b16 %v4381
    %v5685 = vunpack.c.l.b16 %v4382
    %v5686 = vunpack.c.h.b16 %v4382
    %v5687 = vunpack.c.l.b16 %v4383
    %v5688 = vunpack.c.l.b16 %v4384
    %v5689 = vunpack.c.h.b16 %v4384
    %v5690 = vunpack.c.l.b16 %v4385
    %v5691 = vunpack.c.h.b16 %v4385
    %v5692 = vunpack.c.l.b16 %v4386
    %v5693 = vunpack.c.h.b16 %v4386
    %v5694 = vunpack.c.l.b16 %v4387
    %v5695 = vunpack.c.l.b16 %v4388
    %v5696 = vunpack.c.h.b16 %v4388
    %v5697 = vunpack.c.l.b16 %v4389
    %v5698 = vunpack.c.h.b16 %v4389
    %v5699 = vunpack.c.l.b16 %v4390
    %v5700 = vunpack.c.h.b16 %v4390
    %v5701 = vunpack.c.l.b16 %v4391
    %v5702 = vunpack.c.l.b16 %v4392
    %v5703 = vunpack.c.h.b16 %v4392
    %v5704 = vunpack.c.l.b16 %v4393
    %v5705 = vunpack.c.h.b16 %v4393
    %v5706 = vunpack.c.l.b16 %v4394
    %v5707 = vunpack.c.h.b16 %v4394
    %v5708 = vunpack.c.l.b16 %v4395
    %v5709 = vunpack.c.l.b16 %v4396
    %v5710 = vunpack.c.h.b16 %v4396
    %v5711 = vunpack.c.l.b16 %v4397
    %v5712 = vunpack.c.h.b16 %v4397
    %v5713 = vunpack.c.l.b16 %v4398
    %v5714 = vunpack.c.h.b16 %v4398
    %v5715 = vunpack.c.l.b16 %v4399
    %v5716 = vunpack.c.l.b16 %v4400
    %v5717 = vunpack.c.h.b16 %v4400
    %v5718 = vunpack.c.l.b16 %v4401
    %v5719 = vunpack.c.h.b16 %v4401
    %v5720 = vunpack.c.l.b16 %v4402
    %v5721 = vunpack.c.h.b16 %v4402
    %v5722 = vunpack.c.l.b16 %v4403
    %v5723 = vunpack.c.l.b16 %v4404
    %v5724 = vunpack.c.h.b16 %v4404
    %v5725 = vunpack.c.l.b16 %v4405
    %v5726 = vunpack.c.h.b16 %v4405
    %v5727 = vunpack.c.l.b16 %v4406
    %v5728 = vunpack.c.h.b16 %v4406
    %v5729 = vunpack.c.l.b16 %v4407
    %v5730 = vunpack.c.l.b16 %v4408
    %v5731 = vunpack.c.h.b16 %v4408
    %v5732 = vunpack.c.l.b16 %v4409
    %v5733 = vunpack.c.h.b16 %v4409
    %v5734 = vunpack.c.l.b16 %v4410
    %v5735 = vunpack.c.h.b16 %v4410
    %v5736 = vunpack.c.l.b16 %v4411
    %v5737 = vunpack.c.l.b16 %v4412
    %v5738 = vunpack.c.h.b16 %v4412
    %v5739 = vunpack.c.l.b16 %v4413
    %v5740 = vunpack.c.h.b16 %v4413
    %v5741 = vunpack.c.l.b16 %v4414
    %v5742 = vunpack.c.h.b16 %v4414
    %v5743 = vunpack.c.l.b16 %v4415
    %v5744 = vunpack.c.l.b16 %v4416
    %v5745 = vunpack.c.h.b16 %v4416
    %v5746 = vunpack.c.l.b16 %v4417
    %v5747 = vunpack.c.h.b16 %v4417
    %v5748 = vunpack.c.l.b16 %v4418
    %v5749 = vunpack.c.h.b16 %v4418
    %v5750 = vunpack.c.l.b16 %v4419
    %v5751 = vunpack.c.l.b16 %v4420
    %v5752 = vunpack.c.h.b16 %v4420
    %v5753 = vunpack.c.l.b16 %v4421
    %v5754 = vunpack.c.h.b16 %v4421
    %v5755 = vunpack.c.l.b16 %v4422
    %v5756 = vunpack.c.h.b16 %v4422
    %v5757 = vunpack.c.l.b16 %v4423
    %v5758 = vunpack.c.l.b16 %v4424
    %v5759 = vunpack.c.h.b16 %v4424
    %v5760 = vunpack.c.l.b16 %v4425
    %v5761 = vunpack.c.h.b16 %v4425
    %v5762 = vunpack.c.l.b16 %v4426
    %v5763 = vunpack.c.h.b16 %v4426
    %v5764 = vunpack.c.l.b16 %v4427
    %v5765 = vunpack.c.l.b16 %v4428
    %v5766 = vunpack.c.h.b16 %v4428
    %v5767 = vunpack.c.l.b16 %v4429
    %v5768 = vunpack.c.h.b16 %v4429
    %v5769 = vunpack.c.l.b16 %v4430
    %v5770 = vunpack.c.h.b16 %v4430
    %v5771 = vunpack.c.l.b16 %v4431
    %v5772 = vunpack.c.l.b16 %v4432
    %v5773 = vunpack.c.h.b16 %v4432
    %v5774 = vunpack.c.l.b16 %v4433
    %v5775 = vunpack.c.h.b16 %v4433
    %v5776 = vunpack.c.l.b16 %v4434
    %v5777 = vunpack.c.h.b16 %v4434
    %v5778 = vunpack.c.l.b16 %v4435
    %v5779 = vunpack.c.l.b16 %v4436
    %v5780 = vunpack.c.h.b16 %v4436
    %v5781 = vunpack.c.l.b16 %v4437
    %v5782 = vunpack.c.h.b16 %v4437
    %v5783 = vunpack.c.l.b16 %v4438
    %v5784 = vunpack.c.h.b16 %v4438
    %v5785 = vunpack.c.l.b16 %v4439
    %v5786 = vunpack.c.l.b16 %v4440
    %v5787 = vunpack.c.h.b16 %v4440
    %v5788 = vunpack.c.l.b16 %v4441
    %v5789 = vunpack.c.h.b16 %v4441
    %v5790 = vunpack.c.l.b16 %v4442
    %v5791 = vunpack.c.h.b16 %v4442
    %v5792 = vunpack.c.l.b16 %v4443
    %v5793 = vunpack.c.l.b16 %v4444
    %v5794 = vunpack.c.h.b16 %v4444
    %v5795 = vunpack.c.l.b16 %v4445
    %v5796 = vunpack.c.h.b16 %v4445
    %v5797 = vunpack.c.l.b16 %v4446
    %v5798 = vunpack.c.h.b16 %v4446
    %v5799 = vunpack.c.l.b16 %v4447
    %v5800 = vunpack.c.l.b16 %v4448
    %v5801 = vunpack.c.h.b16 %v4448
    %v5802 = vunpack.c.l.b16 %v4449
    %v5803 = vunpack.c.h.b16 %v4449
    %v5804 = vunpack.c.l.b16 %v4450
    %v5805 = vunpack.c.h.b16 %v4450
    %v5806 = vunpack.c.l.b16 %v4451
    %v5807 = vunpack.c.l.b16 %v4452
    %v5808 = vunpack.c.h.b16 %v4452
    %v5809 = vunpack.c.l.b16 %v4453
    %v5810 = vunpack.c.h.b16 %v4453
    %v5811 = vunpack.c.l.b16 %v4454
    %v5812 = vunpack.c.h.b16 %v4454
    %v5813 = vunpack.c.l.b16 %v4455
    %v5814 = vunpack.c.l.b16 %v4456
    %v5815 = vunpack.c.h.b16 %v4456
    %v5816 = vunpack.c.l.b16 %v4457
    %v5817 = vunpack.c.h.b16 %v4457
    %v5818 = vunpack.c.l.b16 %v4458
    %v5819 = vunpack.c.h.b16 %v4458
    %v5820 = vunpack.c.l.b16 %v4459
    %v5821 = vunpack.c.l.b16 %v4460
    %v5822 = vunpack.c.h.b16 %v4460
    %v5823 = vunpack.c.l.b16 %v4461
    %v5824 = vunpack.c.h.b16 %v4461
    %v5825 = vunpack.c.l.b16 %v4462
    %v5826 = vunpack.c.h.b16 %v4462
    %v5827 = vunpack.c.l.b16 %v4463
    %v5828 = vunpack.c.l.b16 %v4464
    %v5829 = vunpack.c.h.b16 %v4464
    %v5830 = vunpack.c.l.b16 %v4465
    %v5831 = vunpack.c.h.b16 %v4465
    %v5832 = vunpack.c.l.b16 %v4466
    %v5833 = vunpack.c.h.b16 %v4466
    %v5834 = vunpack.c.l.b16 %v4467
    %v5835 = vunpack.c.l.b16 %v4468
    %v5836 = vunpack.c.h.b16 %v4468
    %v5837 = vunpack.c.l.b16 %v4469
    %v5838 = vunpack.c.h.b16 %v4469
    %v5839 = vunpack.c.l.b16 %v4470
    %v5840 = vunpack.c.h.b16 %v4470
    %v5841 = vunpack.c.l.b16 %v4471
    %v5842 = vunpack.c.l.b16 %v4472
    %v5843 = vunpack.c.h.b16 %v4472
    %v5844 = vunpack.c.l.b16 %v4473
    %v5845 = vunpack.c.h.b16 %v4473
    %v5846 = vunpack.c.l.b16 %v4474
    %v5847 = vunpack.c.h.b16 %v4474
    %v5848 = vunpack.c.l.b16 %v4475
    %v5849 = vunpack.c.l.b16 %v4476
    %v5850 = vunpack.c.h.b16 %v4476
    %v5851 = vunpack.c.l.b16 %v4477
    %v5852 = vunpack.c.h.b16 %v4477
    %v5853 = vunpack.c.l.b16 %v4478
    %v5854 = vunpack.c.h.b16 %v4478
    %v5855 = vunpack.c.l.b16 %v4479
    %v5856 = vunpack.c.l.b16 %v4480
    %v5857 = vunpack.c.h.b16 %v4480
    %v5858 = vunpack.c.l.b16 %v4481
    %v5859 = vunpack.c.h.b16 %v4481
    %v5860 = vunpack.c.l.b16 %v4482
    %v5861 = vunpack.c.h.b16 %v4482
    %v5862 = vunpack.c.l.b16 %v4483
    %v5863 = vunpack.c.l.b16 %v4484
    %v5864 = vunpack.c.h.b16 %v4484
    %v5865 = vunpack.c.l.b16 %v4485
    %v5866 = vunpack.c.h.b16 %v4485
    %v5867 = vunpack.c.l.b16 %v4486
    %v5868 = vunpack.c.h.b16 %v4486
    %v5869 = vunpack.c.l.b16 %v4487
    %v5870 = vunpack.c.l.b16 %v4488
    %v5871 = vunpack.c.h.b16 %v4488
    %v5872 = vunpack.c.l.b16 %v4489
    %v5873 = vunpack.c.h.b16 %v4489
    %v5874 = vunpack.c.l.b16 %v4490
    %v5875 = vunpack.c.h.b16 %v4490
    %v5876 = vunpack.c.l.b16 %v4491
    %v5877 = vunpack.c.l.b16 %v4492
    %v5878 = vunpack.c.h.b16 %v4492
    %v5879 = vunpack.c.l.b16 %v4493
    %v5880 = vunpack.c.h.b16 %v4493
    %v5881 = vunpack.c.l.b16 %v4494
    %v5882 = vunpack.c.h.b16 %v4494
    %v5883 = vunpack.c.l.b16 %v4495
    %v5884 = vunpack.c.l.b16 %v4496
    %v5885 = vunpack.c.h.b16 %v4496
    %v5886 = vunpack.c.l.b16 %v4497
    %v5887 = vunpack.c.h.b16 %v4497
    %v5888 = vunpack.c.l.b16 %v4498
    %v5889 = vunpack.c.h.b16 %v4498
    %v5890 = vunpack.c.l.b16 %v4499
    %v5891 = vunpack.c.l.b16 %v4500
    %v5892 = vunpack.c.h.b16 %v4500
    %v5893 = vunpack.c.l.b16 %v4501
    %v5894 = vunpack.c.h.b16 %v4501
    %v5895 = vunpack.c.l.b16 %v4502
    %v5896 = vunpack.c.h.b16 %v4502
    %v5897 = vunpack.c.l.b16 %v4503
    %v5898 = vunpack.c.l.b16 %v4504
    %v5899 = vunpack.c.h.b16 %v4504
    %v5900 = vunpack.c.l.b16 %v4505
    %v5901 = vunpack.c.h.b16 %v4505
    %v5902 = vunpack.c.l.b16 %v4506
    %v5903 = vunpack.c.h.b16 %v4506
    %v5904 = vunpack.c.l.b16 %v4507
    %v5905 = vunpack.c.l.b16 %v4508
    %v5906 = vunpack.c.h.b16 %v4508
    %v5907 = vunpack.c.l.b16 %v4509
    %v5908 = vunpack.c.h.b16 %v4509
    %v5909 = vunpack.c.l.b16 %v4510
    %v5910 = vunpack.c.h.b16 %v4510
    %v5911 = vunpack.c.l.b16 %v4511
    %v5912 = vunpack.c.l.b16 %v4512
    %v5913 = vunpack.c.h.b16 %v4512
    %v5914 = vunpack.c.l.b16 %v4513
    %v5915 = vunpack.c.h.b16 %v4513
    %v5916 = vunpack.c.l.b16 %v4514
    %v5917 = vunpack.c.h.b16 %v4514
    %v5918 = vunpack.c.l.b16 %v4515
    %v5919 = vunpack.c.l.b16 %v4516
    %v5920 = vunpack.c.h.b16 %v4516
    %v5921 = vunpack.c.l.b16 %v4517
    %v5922 = vunpack.c.h.b16 %v4517
    %v5923 = vunpack.c.l.b16 %v4518
    %v5924 = vunpack.c.h.b16 %v4518
    %v5925 = vunpack.c.l.b16 %v4519
    %v5926 = vunpack.c.l.b16 %v4520
    %v5927 = vunpack.c.h.b16 %v4520
    %v5928 = vunpack.c.l.b16 %v4521
    %v5929 = vunpack.c.h.b16 %v4521
    %v5930 = vunpack.c.l.b16 %v4522
    %v5931 = vunpack.c.h.b16 %v4522
    %v5932 = vunpack.c.l.b16 %v4523
    %v5933 = vunpack.c.l.b16 %v4524
    %v5934 = vunpack.c.h.b16 %v4524
    %v5935 = vunpack.c.l.b16 %v4525
    %v5936 = vunpack.c.h.b16 %v4525
    %v5937 = vunpack.c.l.b16 %v4526
    %v5938 = vunpack.c.h.b16 %v4526
    %v5939 = vunpack.c.l.b16 %v4527
    %v5940 = vunpack.c.l.b16 %v4528
    %v5941 = vunpack.c.h.b16 %v4528
    %v5942 = vunpack.c.l.b16 %v4529
    %v5943 = vunpack.c.h.b16 %v4529
    %v5944 = vunpack.c.l.b16 %v4530
    %v5945 = vunpack.c.h.b16 %v4530
    %v5946 = vunpack.c.l.b16 %v4531
    %v5947 = vunpack.c.l.b16 %v4532
    %v5948 = vunpack.c.h.b16 %v4532
    %v5949 = vunpack.c.l.b16 %v4533
    %v5950 = vunpack.c.h.b16 %v4533
    %v5951 = vunpack.c.l.b16 %v4534
    %v5952 = vunpack.c.h.b16 %v4534
    %v5953 = vunpack.c.l.b16 %v4535
    %v5954 = vunpack.c.l.b16 %v4536
    %v5955 = vunpack.c.h.b16 %v4536
    %v5956 = vunpack.c.l.b16 %v4537
    %v5957 = vunpack.c.h.b16 %v4537
    %v5958 = vunpack.c.l.b16 %v4538
    %v5959 = vunpack.c.h.b16 %v4538
    %v5960 = vunpack.c.l.b16 %v4539
    %v5961 = vunpack.c.l.b16 %v4540
    %v5962 = vunpack.c.h.b16 %v4540
    %v5963 = vunpack.c.l.b16 %v4541
    %v5964 = vunpack.c.h.b16 %v4541
    %v5965 = vunpack.c.l.b16 %v4542
    %v5966 = vunpack.c.h.b16 %v4542
    %v5967 = vunpack.c.l.b16 %v4543
    %v5968 = vunpack.c.l.b16 %v4544
    %v5969 = vunpack.c.h.b16 %v4544
    %v5970 = vunpack.c.l.b16 %v4545
    %v5971 = vunpack.c.h.b16 %v4545
    %v5972 = vunpack.c.l.b16 %v4546
    %v5973 = vunpack.c.h.b16 %v4546
    %v5974 = vunpack.c.l.b16 %v4547
    %v5975 = vunpack.c.l.b16 %v4548
    %v5976 = vunpack.c.h.b16 %v4548
    %v5977 = vunpack.c.l.b16 %v4549
    %v5978 = vunpack.c.h.b16 %v4549
    %v5979 = vunpack.c.l.b16 %v4550
    %v5980 = vunpack.c.h.b16 %v4550
    %v5981 = vunpack.c.l.b16 %v4551
    %v5982 = vunpack.c.l.b16 %v4552
    %v5983 = vunpack.c.h.b16 %v4552
    %v5984 = vunpack.c.l.b16 %v4553
    %v5985 = vunpack.c.h.b16 %v4553
    %v5986 = vunpack.c.l.b16 %v4554
    %v5987 = vunpack.c.h.b16 %v4554
    %v5988 = vunpack.c.l.b16 %v4555
    %v5989 = vunpack.c.l.b16 %v4556
    %v5990 = vunpack.c.h.b16 %v4556
    %v5991 = vunpack.c.l.b16 %v4557
    %v5992 = vunpack.c.h.b16 %v4557
    %v5993 = vunpack.c.l.b16 %v4558
    %v5994 = vunpack.c.h.b16 %v4558
    %v5995 = vunpack.c.l.b16 %v4559
    %v5996 = vunpack.c.l.b16 %v4560
    %v5997 = vunpack.c.h.b16 %v4560
    %v5998 = vunpack.c.l.b16 %v4561
    %v5999 = vunpack.c.h.b16 %v4561
    %v6000 = vunpack.c.l.b16 %v4562
    %v6001 = vunpack.c.h.b16 %v4562
    %v6002 = vunpack.c.l.b16 %v4563
    %v6003 = vunpack.c.l.b16 %v4564
    %v6004 = vunpack.c.h.b16 %v4564
    %v6005 = vunpack.c.l.b16 %v4565
    %v6006 = vunpack.c.h.b16 %v4565
    %v6007 = vunpack.c.l.b16 %v4566
    %v6008 = vunpack.c.h.b16 %v4566
    %v6009 = vunpack.c.l.b16 %v4567
    %v6010 = vunpack.c.l.b16 %v4568
    %v6011 = vunpack.c.h.b16 %v4568
    %v6012 = vunpack.c.l.b16 %v4569
    %v6013 = vunpack.c.h.b16 %v4569
    %v6014 = vunpack.c.l.b16 %v4570
    %v6015 = vunpack.c.h.b16 %v4570
    %v6016 = vunpack.c.l.b16 %v4571
    %v6017 = vpack.c.b16 %v5128, %v5121
    %v6018 = vpack.c.b16 %v5129, %v5122
    %v6019 = vpack.c.b16 %v5130, %v5123
    %v6020 = vpack.c.b16 %v5131, %v5124
    %v6021 = vpack.c.b16 %v5132, %v5125
    %v6022 = vpack.c.b16 %v5133, %v5126
    %v6023 = vpack.c.b16 %v5134, %v5127
    %v6024 = vpack.c.b16 %v5142, %v5135
    %v6025 = vpack.c.b16 %v5143, %v5136
    %v6026 = vpack.c.b16 %v5144, %v5137
    %v6027 = vpack.c.b16 %v5145, %v5138
    %v6028 = vpack.c.b16 %v5146, %v5139
    %v6029 = vpack.c.b16 %v5147, %v5140
    %v6030 = vpack.c.b16 %v5148, %v5141
    %v6031 = vpack.c.b16 %v5156, %v5149
    %v6032 = vpack.c.b16 %v5157, %v5150
    %v6033 = vpack.c.b16 %v5158, %v5151
    %v6034 = vpack.c.b16 %v5159, %v5152
    %v6035 = vpack.c.b16 %v5160, %v5153
    %v6036 = vpack.c.b16 %v5161, %v5154
    %v6037 = vpack.c.b16 %v5162, %v5155
    %v6038 = vpack.c.b16 %v5170, %v5163
    %v6039 = vpack.c.b16 %v5171, %v5164
    %v6040 = vpack.c.b16 %v5172, %v5165
    %v6041 = vpack.c.b16 %v5173, %v5166
    %v6042 = vpack.c.b16 %v5174, %v5167
    %v6043 = vpack.c.b16 %v5175, %v5168
    %v6044 = vpack.c.b16 %v5176, %v5169
    %v6045 = vpack.c.b16 %v5184, %v5177
    %v6046 = vpack.c.b16 %v5185, %v5178
    %v6047 = vpack.c.b16 %v5186, %v5179
    %v6048 = vpack.c.b16 %v5187, %v5180
    %v6049 = vpack.c.b16 %v5188, %v5181
    %v6050 = vpack.c.b16 %v5189, %v5182
    %v6051 = vpack.c.b16 %v5190, %v5183
    %v6052 = vpack.c.b16 %v5198, %v5191
    %v6053 = vpack.c.b16 %v5199, %v5192
    %v6054 = vpack.c.b16 %v5200, %v5193
    %v6055 = vpack.c.b16 %v5201, %v5194
    %v6056 = vpack.c.b16 %v5202, %v5195
    %v6057 = vpack.c.b16 %v5203, %v5196
    %v6058 = vpack.c.b16 %v5204, %v5197
    %v6059 = vpack.c.b16 %v5212, %v5205
    %v6060 = vpack.c.b16 %v5213, %v5206
    %v6061 = vpack.c.b16 %v5214, %v5207
    %v6062 = vpack.c.b16 %v5215, %v5208
    %v6063 = vpack.c.b16 %v5216, %v5209
    %v6064 = vpack.c.b16 %v5217, %v5210
    %v6065 = vpack.c.b16 %v5218, %v5211
    %v6066 = vpack.c.b16 %v5226, %v5219
    %v6067 = vpack.c.b16 %v5227, %v5220
    %v6068 = vpack.c.b16 %v5228, %v5221
    %v6069 = vpack.c.b16 %v5229, %v5222
    %v6070 = vpack.c.b16 %v5230, %v5223
    %v6071 = vpack.c.b16 %v5231, %v5224
    %v6072 = vpack.c.b16 %v5232, %v5225
    %v6073 = vpack.c.b16 %v5240, %v5233
    %v6074 = vpack.c.b16 %v5241, %v5234
    %v6075 = vpack.c.b16 %v5242, %v5235
    %v6076 = vpack.c.b16 %v5243, %v5236
    %v6077 = vpack.c.b16 %v5244, %v5237
    %v6078 = vpack.c.b16 %v5245, %v5238
    %v6079 = vpack.c.b16 %v5246, %v5239
    %v6080 = vpack.c.b16 %v5254, %v5247
    %v6081 = vpack.c.b16 %v5255, %v5248
    %v6082 = vpack.c.b16 %v5256, %v5249
    %v6083 = vpack.c.b16 %v5257, %v5250
    %v6084 = vpack.c.b16 %v5258, %v5251
    %v6085 = vpack.c.b16 %v5259, %v5252
    %v6086 = vpack.c.b16 %v5260, %v5253
    %v6087 = vpack.c.b16 %v5268, %v5261
    %v6088 = vpack.c.b16 %v5269, %v5262
    %v6089 = vpack.c.b16 %v5270, %v5263
    %v6090 = vpack.c.b16 %v5271, %v5264
    %v6091 = vpack.c.b16 %v5272, %v5265
    %v6092 = vpack.c.b16 %v5273, %v5266
    %v6093 = vpack.c.b16 %v5274, %v5267
    %v6094 = vpack.c.b16 %v5282, %v5275
    %v6095 = vpack.c.b16 %v5283, %v5276
    %v6096 = vpack.c.b16 %v5284, %v5277
    %v6097 = vpack.c.b16 %v5285, %v5278
    %v6098 = vpack.c.b16 %v5286, %v5279
    %v6099 = vpack.c.b16 %v5287, %v5280
    %v6100 = vpack.c.b16 %v5288, %v5281
    %v6101 = vpack.c.b16 %v5296, %v5289
    %v6102 = vpack.c.b16 %v5297, %v5290
    %v6103 = vpack.c.b16 %v5298, %v5291
    %v6104 = vpack.c.b16 %v5299, %v5292
    %v6105 = vpack.c.b16 %v5300, %v5293
    %v6106 = vpack.c.b16 %v5301, %v5294
    %v6107 = vpack.c.b16 %v5302, %v5295
    %v6108 = vpack.c.b16 %v5310, %v5303
    %v6109 = vpack.c.b16 %v5311, %v5304
    %v6110 = vpack.c.b16 %v5312, %v5305
    %v6111 = vpack.c.b16 %v5313, %v5306
    %v6112 = vpack.c.b16 %v5314, %v5307
    %v6113 = vpack.c.b16 %v5315, %v5308
    %v6114 = vpack.c.b16 %v5316, %v5309
    %v6115 = vpack.c.b16 %v5324, %v5317
    %v6116 = vpack.c.b16 %v5325, %v5318
    %v6117 = vpack.c.b16 %v5326, %v5319
    %v6118 = vpack.c.b16 %v5327, %v5320
    %v6119 = vpack.c.b16 %v5328, %v5321
    %v6120 = vpack.c.b16 %v5329, %v5322
    %v6121 = vpack.c.b16 %v5330, %v5323
    %v6122 = vpack.c.b16 %v5338, %v5331
    %v6123 = vpack.c.b16 %v5339, %v5332
    %v6124 = vpack.c.b16 %v5340, %v5333
    %v6125 = vpack.c.b16 %v5341, %v5334
    %v6126 = vpack.c.b16 %v5342, %v5335
    %v6127 = vpack.c.b16 %v5343, %v5336
    %v6128 = vpack.c.b16 %v5344, %v5337
    %v6129 = vpack.c.b16 %v5352, %v5345
    %v6130 = vpack.c.b16 %v5353, %v5346
    %v6131 = vpack.c.b16 %v5354, %v5347
    %v6132 = vpack.c.b16 %v5355, %v5348
    %v6133 = vpack.c.b16 %v5356, %v5349
    %v6134 = vpack.c.b16 %v5357, %v5350
    %v6135 = vpack.c.b16 %v5358, %v5351
    %v6136 = vpack.c.b16 %v5366, %v5359
    %v6137 = vpack.c.b16 %v5367, %v5360
    %v6138 = vpack.c.b16 %v5368, %v5361
    %v6139 = vpack.c.b16 %v5369, %v5362
    %v6140 = vpack.c.b16 %v5370, %v5363
    %v6141 = vpack.c.b16 %v5371, %v5364
    %v6142 = vpack.c.b16 %v5372, %v5365
    %v6143 = vpack.c.b16 %v5380, %v5373
    %v6144 = vpack.c.b16 %v5381, %v5374
    %v6145 = vpack.c.b16 %v5382, %v5375
    %v6146 = vpack.c.b16 %v5383, %v5376
    %v6147 = vpack.c.b16 %v5384, %v5377
    %v6148 = vpack.c.b16 %v5385, %v5378
    %v6149 = vpack.c.b16 %v5386, %v5379
    %v6150 = vpack.c.b16 %v5394, %v5387
    %v6151 = vpack.c.b16 %v5395, %v5388
    %v6152 = vpack.c.b16 %v5396, %v5389
    %v6153 = vpack.c.b16 %v5397, %v5390
    %v6154 = vpack.c.b16 %v5398, %v5391
    %v6155 = vpack.c.b16 %v5399, %v5392
    %v6156 = vpack.c.b16 %v5400, %v5393
    %v6157 = vpack.c.b16 %v5408, %v5401
    %v6158 = vpack.c.b16 %v5409, %v5402
    %v6159 = vpack.c.b16 %v5410, %v5403
    %v6160 = vpack.c.b16 %v5411, %v5404
    %v6161 = vpack.c.b16 %v5412, %v5405
    %v6162 = vpack.c.b16 %v5413, %v5406
    %v6163 = vpack.c.b16 %v5414, %v5407
    %v6164 = vpack.c.b16 %v5422, %v5415
    %v6165 = vpack.c.b16 %v5423, %v5416
    %v6166 = vpack.c.b16 %v5424, %v5417
    %v6167 = vpack.c.b16 %v5425, %v5418
    %v6168 = vpack.c.b16 %v5426, %v5419
    %v6169 = vpack.c.b16 %v5427, %v5420
    %v6170 = vpack.c.b16 %v5428, %v5421
    %v6171 = vpack.c.b16 %v5436, %v5429
    %v6172 = vpack.c.b16 %v5437, %v5430
    %v6173 = vpack.c.b16 %v5438, %v5431
    %v6174 = vpack.c.b16 %v5439, %v5432
    %v6175 = vpack.c.b16 %v5440, %v5433
    %v6176 = vpack.c.b16 %v5441, %v5434
    %v6177 = vpack.c.b16 %v5442, %v5435
    %v6178 = vpack.c.b16 %v5450, %v5443
    %v6179 = vpack.c.b16 %v5451, %v5444
    %v6180 = vpack.c.b16 %v5452, %v5445
    %v6181 = vpack.c.b16 %v5453, %v5446
    %v6182 = vpack.c.b16 %v5454, %v5447
    %v6183 = vpack.c.b16 %v5455, %v5448
    %v6184 = vpack.c.b16 %v5456, %v5449
    %v6185 = vpack.c.b16 %v5464, %v5457
    %v6186 = vpack.c.b16 %v5465, %v5458
    %v6187 = vpack.c.b16 %v5466, %v5459
    %v6188 = vpack.c.b16 %v5467, %v5460
    %v6189 = vpack.c.b16 %v5468, %v5461
    %v6190 = vpack.c.b16 %v5469, %v5462
    %v6191 = vpack.c.b16 %v5470, %v5463
    %v6192 = vpack.c.b16 %v5478, %v5471
    %v6193 = vpack.c.b16 %v5479, %v5472
    %v6194 = vpack.c.b16 %v5480, %v5473
    %v6195 = vpack.c.b16 %v5481, %v5474
    %v6196 = vpack.c.b16 %v5482, %v5475
    %v6197 = vpack.c.b16 %v5483, %v5476
    %v6198 = vpack.c.b16 %v5484, %v5477
    %v6199 = vpack.c.b16 %v5492, %v5485
    %v6200 = vpack.c.b16 %v5493, %v5486
    %v6201 = vpack.c.b16 %v5494, %v5487
    %v6202 = vpack.c.b16 %v5495, %v5488
    %v6203 = vpack.c.b16 %v5496, %v5489
    %v6204 = vpack.c.b16 %v5497, %v5490
    %v6205 = vpack.c.b16 %v5498, %v5491
    %v6206 = vpack.c.b16 %v5506, %v5499
    %v6207 = vpack.c.b16 %v5507, %v5500
    %v6208 = vpack.c.b16 %v5508, %v5501
    %v6209 = vpack.c.b16 %v5509, %v5502
    %v6210 = vpack.c.b16 %v5510, %v5503
    %v6211 = vpack.c.b16 %v5511, %v5504
    %v6212 = vpack.c.b16 %v5512, %v5505
    %v6213 = vpack.c.b16 %v5520, %v5513
    %v6214 = vpack.c.b16 %v5521, %v5514
    %v6215 = vpack.c.b16 %v5522, %v5515
    %v6216 = vpack.c.b16 %v5523, %v5516
    %v6217 = vpack.c.b16 %v5524, %v5517
    %v6218 = vpack.c.b16 %v5525, %v5518
    %v6219 = vpack.c.b16 %v5526, %v5519
    %v6220 = vpack.c.b16 %v5534, %v5527
    %v6221 = vpack.c.b16 %v5535, %v5528
    %v6222 = vpack.c.b16 %v5536, %v5529
    %v6223 = vpack.c.b16 %v5537, %v5530
    %v6224 = vpack.c.b16 %v5538, %v5531
    %v6225 = vpack.c.b16 %v5539, %v5532
    %v6226 = vpack.c.b16 %v5540, %v5533
    %v6227 = vpack.c.b16 %v5548, %v5541
    %v6228 = vpack.c.b16 %v5549, %v5542
    %v6229 = vpack.c.b16 %v5550, %v5543
    %v6230 = vpack.c.b16 %v5551, %v5544
    %v6231 = vpack.c.b16 %v5552, %v5545
    %v6232 = vpack.c.b16 %v5553, %v5546
    %v6233 = vpack.c.b16 %v5554, %v5547
    %v6234 = vpack.c.b16 %v5562, %v5555
    %v6235 = vpack.c.b16 %v5563, %v5556
    %v6236 = vpack.c.b16 %v5564, %v5557
    %v6237 = vpack.c.b16 %v5565, %v5558
    %v6238 = vpack.c.b16 %v5566, %v5559
    %v6239 = vpack.c.b16 %v5567, %v5560
    %v6240 = vpack.c.b16 %v5568, %v5561
    %v6241 = vpack.c.b16 %v5576, %v5569
    %v6242 = vpack.c.b16 %v5577, %v5570
    %v6243 = vpack.c.b16 %v5578, %v5571
    %v6244 = vpack.c.b16 %v5579, %v5572
    %v6245 = vpack.c.b16 %v5580, %v5573
    %v6246 = vpack.c.b16 %v5581, %v5574
    %v6247 = vpack.c.b16 %v5582, %v5575
    %v6248 = vpack.c.b16 %v5590, %v5583
    %v6249 = vpack.c.b16 %v5591, %v5584
    %v6250 = vpack.c.b16 %v5592, %v5585
    %v6251 = vpack.c.b16 %v5593, %v5586
    %v6252 = vpack.c.b16 %v5594, %v5587
    %v6253 = vpack.c.b16 %v5595, %v5588
    %v6254 = vpack.c.b16 %v5596, %v5589
    %v6255 = vpack.c.b16 %v5604, %v5597
    %v6256 = vpack.c.b16 %v5605, %v5598
    %v6257 = vpack.c.b16 %v5606, %v5599
    %v6258 = vpack.c.b16 %v5607, %v5600
    %v6259 = vpack.c.b16 %v5608, %v5601
    %v6260 = vpack.c.b16 %v5609, %v5602
    %v6261 = vpack.c.b16 %v5610, %v5603
    %v6262 = vpack.c.b16 %v5618, %v5611
    %v6263 = vpack.c.b16 %v5619, %v5612
    %v6264 = vpack.c.b16 %v5620, %v5613
    %v6265 = vpack.c.b16 %v5621, %v5614
    %v6266 = vpack.c.b16 %v5622, %v5615
    %v6267 = vpack.c.b16 %v5623, %v5616
    %v6268 = vpack.c.b16 %v5624, %v5617
    %v6269 = vpack.c.b16 %v5632, %v5625
    %v6270 = vpack.c.b16 %v5633, %v5626
    %v6271 = vpack.c.b16 %v5634, %v5627
    %v6272 = vpack.c.b16 %v5635, %v5628
    %v6273 = vpack.c.b16 %v5636, %v5629
    %v6274 = vpack.c.b16 %v5637, %v5630
    %v6275 = vpack.c.b16 %v5638, %v5631
    %v6276 = vpack.c.b16 %v5646, %v5639
    %v6277 = vpack.c.b16 %v5647, %v5640
    %v6278 = vpack.c.b16 %v5648, %v5641
    %v6279 = vpack.c.b16 %v5649, %v5642
    %v6280 = vpack.c.b16 %v5650, %v5643
    %v6281 = vpack.c.b16 %v5651, %v5644
    %v6282 = vpack.c.b16 %v5652, %v5645
    %v6283 = vpack.c.b16 %v5660, %v5653
    %v6284 = vpack.c.b16 %v5661, %v5654
    %v6285 = vpack.c.b16 %v5662, %v5655
    %v6286 = vpack.c.b16 %v5663, %v5656
    %v6287 = vpack.c.b16 %v5664, %v5657
    %v6288 = vpack.c.b16 %v5665, %v5658
    %v6289 = vpack.c.b16 %v5666, %v5659
    %v6290 = vpack.c.b16 %v5674, %v5667
    %v6291 = vpack.c.b16 %v5675, %v5668
    %v6292 = vpack.c.b16 %v5676, %v5669
    %v6293 = vpack.c.b16 %v5677, %v5670
    %v6294 = vpack.c.b16 %v5678, %v5671
    %v6295 = vpack.c.b16 %v5679, %v5672
    %v6296 = vpack.c.b16 %v5680, %v5673
    %v6297 = vpack.c.b16 %v5688, %v5681
    %v6298 = vpack.c.b16 %v5689, %v5682
    %v6299 = vpack.c.b16 %v5690, %v5683
    %v6300 = vpack.c.b16 %v5691, %v5684
    %v6301 = vpack.c.b16 %v5692, %v5685
    %v6302 = vpack.c.b16 %v5693, %v5686
    %v6303 = vpack.c.b16 %v5694, %v5687
    %v6304 = vpack.c.b16 %v5702, %v5695
    %v6305 = vpack.c.b16 %v5703, %v5696
    %v6306 = vpack.c.b16 %v5704, %v5697
    %v6307 = vpack.c.b16 %v5705, %v5698
    %v6308 = vpack.c.b16 %v5706, %v5699
    %v6309 = vpack.c.b16 %v5707, %v5700
    %v6310 = vpack.c.b16 %v5708, %v5701
    %v6311 = vpack.c.b16 %v5716, %v5709
    %v6312 = vpack.c.b16 %v5717, %v5710
    %v6313 = vpack.c.b16 %v5718, %v5711
    %v6314 = vpack.c.b16 %v5719, %v5712
    %v6315 = vpack.c.b16 %v5720, %v5713
    %v6316 = vpack.c.b16 %v5721, %v5714
    %v6317 = vpack.c.b16 %v5722, %v5715
    %v6318 = vpack.c.b16 %v5730, %v5723
    %v6319 = vpack.c.b16 %v5731, %v5724
    %v6320 = vpack.c.b16 %v5732, %v5725
    %v6321 = vpack.c.b16 %v5733, %v5726
    %v6322 = vpack.c.b16 %v5734, %v5727
    %v6323 = vpack.c.b16 %v5735, %v5728
    %v6324 = vpack.c.b16 %v5736, %v5729
    %v6325 = vpack.c.b16 %v5744, %v5737
    %v6326 = vpack.c.b16 %v5745, %v5738
    %v6327 = vpack.c.b16 %v5746, %v5739
    %v6328 = vpack.c.b16 %v5747, %v5740
    %v6329 = vpack.c.b16 %v5748, %v5741
    %v6330 = vpack.c.b16 %v5749, %v5742
    %v6331 = vpack.c.b16 %v5750, %v5743
    %v6332 = vpack.c.b16 %v5758, %v5751
    %v6333 = vpack.c.b16 %v5759, %v5752
    %v6334 = vpack.c.b16 %v5760, %v5753
    %v6335 = vpack.c.b16 %v5761, %v5754
    %v6336 = vpack.c.b16 %v5762, %v5755
    %v6337 = vpack.c.b16 %v5763, %v5756
    %v6338 = vpack.c.b16 %v5764, %v5757
    %v6339 = vpack.c.b16 %v5772, %v5765
    %v6340 = vpack.c.b16 %v5773, %v5766
    %v6341 = vpack.c.b16 %v5774, %v5767
    %v6342 = vpack.c.b16 %v5775, %v5768
    %v6343 = vpack.c.b16 %v5776, %v5769
    %v6344 = vpack.c.b16 %v5777, %v5770
    %v6345 = vpack.c.b16 %v5778, %v5771
    %v6346 = vpack.c.b16 %v5786, %v5779
    %v6347 = vpack.c.b16 %v5787, %v5780
    %v6348 = vpack.c.b16 %v5788, %v5781
    %v6349 = vpack.c.b16 %v5789, %v5782
    %v6350 = vpack.c.b16 %v5790, %v5783
    %v6351 = vpack.c.b16 %v5791, %v5784
    %v6352 = vpack.c.b16 %v5792, %v5785
    %v6353 = vpack.c.b16 %v5800, %v5793
    %v6354 = vpack.c.b16 %v5801, %v5794
    %v6355 = vpack.c.b16 %v5802, %v5795
    %v6356 = vpack.c.b16 %v5803, %v5796
    %v6357 = vpack.c.b16 %v5804, %v5797
    %v6358 = vpack.c.b16 %v5805, %v5798
    %v6359 = vpack.c.b16 %v5806, %v5799
    %v6360 = vpack.c.b16 %v5814, %v5807
    %v6361 = vpack.c.b16 %v5815, %v5808
    %v6362 = vpack.c.b16 %v5816, %v5809
    %v6363 = vpack.c.b16 %v5817, %v5810
    %v6364 = vpack.c.b16 %v5818, %v5811
    %v6365 = vpack.c.b16 %v5819, %v5812
    %v6366 = vpack.c.b16 %v5820, %v5813
    %v6367 = vpack.c.b16 %v5828, %v5821
    %v6368 = vpack.c.b16 %v5829, %v5822
    %v6369 = vpack.c.b16 %v5830, %v5823
    %v6370 = vpack.c.b16 %v5831, %v5824
    %v6371 = vpack.c.b16 %v5832, %v5825
    %v6372 = vpack.c.b16 %v5833, %v5826
    %v6373 = vpack.c.b16 %v5834, %v5827
    %v6374 = vpack.c.b16 %v5842, %v5835
    %v6375 = vpack.c.b16 %v5843, %v5836
    %v6376 = vpack.c.b16 %v5844, %v5837
    %v6377 = vpack.c.b16 %v5845, %v5838
    %v6378 = vpack.c.b16 %v5846, %v5839
    %v6379 = vpack.c.b16 %v5847, %v5840
    %v6380 = vpack.c.b16 %v5848, %v5841
    %v6381 = vpack.c.b16 %v5856, %v5849
    %v6382 = vpack.c.b16 %v5857, %v5850
    %v6383 = vpack.c.b16 %v5858, %v5851
    %v6384 = vpack.c.b16 %v5859, %v5852
    %v6385 = vpack.c.b16 %v5860, %v5853
    %v6386 = vpack.c.b16 %v5861, %v5854
    %v6387 = vpack.c.b16 %v5862, %v5855
    %v6388 = vpack.c.b16 %v5870, %v5863
    %v6389 = vpack.c.b16 %v5871, %v5864
    %v6390 = vpack.c.b16 %v5872, %v5865
    %v6391 = vpack.c.b16 %v5873, %v5866
    %v6392 = vpack.c.b16 %v5874, %v5867
    %v6393 = vpack.c.b16 %v5875, %v5868
    %v6394 = vpack.c.b16 %v5876, %v5869
    %v6395 = vpack.c.b16 %v5884, %v5877
    %v6396 = vpack.c.b16 %v5885, %v5878
    %v6397 = vpack.c.b16 %v5886, %v5879
    %v6398 = vpack.c.b16 %v5887, %v5880
    %v6399 = vpack.c.b16 %v5888, %v5881
    %v6400 = vpack.c.b16 %v5889, %v5882
    %v6401 = vpack.c.b16 %v5890, %v5883
    %v6402 = vpack.c.b16 %v5898, %v5891
    %v6403 = vpack.c.b16 %v5899, %v5892
    %v6404 = vpack.c.b16 %v5900, %v5893
    %v6405 = vpack.c.b16 %v5901, %v5894
    %v6406 = vpack.c.b16 %v5902, %v5895
    %v6407 = vpack.c.b16 %v5903, %v5896
    %v6408 = vpack.c.b16 %v5904, %v5897
    %v6409 = vpack.c.b16 %v5912, %v5905
    %v6410 = vpack.c.b16 %v5913, %v5906
    %v6411 = vpack.c.b16 %v5914, %v5907
    %v6412 = vpack.c.b16 %v5915, %v5908
    %v6413 = vpack.c.b16 %v5916, %v5909
    %v6414 = vpack.c.b16 %v5917, %v5910
    %v6415 = vpack.c.b16 %v5918, %v5911
    %v6416 = vpack.c.b16 %v5926, %v5919
    %v6417 = vpack.c.b16 %v5927, %v5920
    %v6418 = vpack.c.b16 %v5928, %v5921
    %v6419 = vpack.c.b16 %v5929, %v5922
    %v6420 = vpack.c.b16 %v5930, %v5923
    %v6421 = vpack.c.b16 %v5931, %v5924
    %v6422 = vpack.c.b16 %v5932, %v5925
    %v6423 = vpack.c.b16 %v5940, %v5933
    %v6424 = vpack.c.b16 %v5941, %v5934
    %v6425 = vpack.c.b16 %v5942, %v5935
    %v6426 = vpack.c.b16 %v5943, %v5936
    %v6427 = vpack.c.b16 %v5944, %v5937
    %v6428 = vpack.c.b16 %v5945, %v5938
    %v6429 = vpack.c.b16 %v5946, %v5939
    %v6430 = vpack.c.b16 %v5954, %v5947
    %v6431 = vpack.c.b16 %v5955, %v5948
    %v6432 = vpack.c.b16 %v5956, %v5949
    %v6433 = vpack.c.b16 %v5957, %v5950
    %v6434 = vpack.c.b16 %v5958, %v5951
    %v6435 = vpack.c.b16 %v5959, %v5952
    %v6436 = vpack.c.b16 %v5960, %v5953
    %v6437 = vpack.c.b16 %v5968, %v5961
    %v6438 = vpack.c.b16 %v5969, %v5962
    %v6439 = vpack.c.b16 %v5970, %v5963
    %v6440 = vpack.c.b16 %v5971, %v5964
    %v6441 = vpack.c.b16 %v5972, %v5965
    %v6442 = vpack.c.b16 %v5973, %v5966
    %v6443 = vpack.c.b16 %v5974, %v5967
    %v6444 = vpack.c.b16 %v5982, %v5975
    %v6445 = vpack.c.b16 %v5983, %v5976
    %v6446 = vpack.c.b16 %v5984, %v5977
    %v6447 = vpack.c.b16 %v5985, %v5978
    %v6448 = vpack.c.b16 %v5986, %v5979
    %v6449 = vpack.c.b16 %v5987, %v5980
    %v6450 = vpack.c.b16 %v5988, %v5981
    %v6451 = vpack.c.b16 %v5996, %v5989
    %v6452 = vpack.c.b16 %v5997, %v5990
    %v6453 = vpack.c.b16 %v5998, %v5991
    %v6454 = vpack.c.b16 %v5999, %v5992
    %v6455 = vpack.c.b16 %v6000, %v5993
    %v6456 = vpack.c.b16 %v6001, %v5994
    %v6457 = vpack.c.b16 %v6002, %v5995
    %v6458 = vpack.c.b16 %v6010, %v6003
    %v6459 = vpack.c.b16 %v6011, %v6004
    %v6460 = vpack.c.b16 %v6012, %v6005
    %v6461 = vpack.c.b16 %v6013, %v6006
    %v6462 = vpack.c.b16 %v6014, %v6007
    %v6463 = vpack.c.b16 %v6015, %v6008
    %v6464 = vpack.c.b16 %v6016, %v6009
    %6913 = vmatprep.subr.bf16.mxu0 %v6018
    %6914 = vmatpush1.bf16.msra.mxu0 %v6017
    %6915 = vmatprep.subr.bf16.mxu0 %v6025
    %6916 = vmatpush1.bf16.msra.mxu0 %v6024
    %6917 = vmatprep.subr.bf16.mxu0 %v6032
    %6918 = vmatpush1.bf16.msra.mxu0 %v6031
    %6919 = vmatprep.subr.bf16.mxu0 %v6039
    %6920 = vmatpush1.bf16.msra.mxu0 %v6038
    %6921 = vmatprep.subr.bf16.mxu0 %v6046
    %6922 = vmatpush1.bf16.msra.mxu0 %v6045
    %6923 = vmatprep.subr.bf16.mxu0 %v6053
    %6924 = vmatpush1.bf16.msra.mxu0 %v6052
    %6925 = vmatprep.subr.bf16.mxu0 %v6060
    %6926 = vmatpush1.bf16.msra.mxu0 %v6059
    %6927 = vmatprep.subr.bf16.mxu0 %v6067
    %6928 = vmatpush1.bf16.msra.mxu0 %v6066
    %6929 = vmatprep.subr.bf16.mxu0 %v6074
    %6930 = vmatpush1.bf16.msra.mxu0 %v6073
    %6931 = vmatprep.subr.bf16.mxu0 %v6081
    %6932 = vmatpush1.bf16.msra.mxu0 %v6080
    %6933 = vmatprep.subr.bf16.mxu0 %v6088
    %6934 = vmatpush1.bf16.msra.mxu0 %v6087
    %6935 = vmatprep.subr.bf16.mxu0 %v6095
    %6936 = vmatpush1.bf16.msra.mxu0 %v6094
    %6937 = vmatprep.subr.bf16.mxu0 %v6102
    %6938 = vmatpush1.bf16.msra.mxu0 %v6101
    %6939 = vmatprep.subr.bf16.mxu0 %v6109
    %6940 = vmatpush1.bf16.msra.mxu0 %v6108
    %6941 = vmatprep.subr.bf16.mxu0 %v6116
    %6942 = vmatpush1.bf16.msra.mxu0 %v6115
    %6943 = vmatprep.subr.bf16.mxu0 %v6123
    %6944 = vmatpush1.bf16.msra.mxu0 %v6122
    %6945 = vmatprep.mubr.bf16.mxu0 %v4053
    %6946 = vmatmul.mubr.bf16.gmra.mrb[0].mxu0 %v4052
    %v6947 = vpop.f32.mrb[0].mxu0
    %v6948 = vadd.f32 %v4577, %v6947
    %v6949 = vpop.f32.mrb[0].mxu0
    %v6950 = vadd.f32 %v4581, %v6949
    %v6951 = vpop.f32.mrb[0].mxu0
    %v6952 = vadd.f32 %v4577, %v6951
    %v6953 = vpop.f32.mrb[0].mxu0
    %v6954 = vadd.f32 %v4581, %v6953
    %6955 = vdwg.mxu0
    %6956 = vmatprep.subr.bf16.mxu0 %v6130
    %6957 = vmatpush1.bf16.msra.mxu0 %v6129
    %6958 = vmatprep.subr.bf16.mxu0 %v6137
    %6959 = vmatpush1.bf16.msra.mxu0 %v6136
    %6960 = vmatprep.subr.bf16.mxu0 %v6144
    %6961 = vmatpush1.bf16.msra.mxu0 %v6143
    %6962 = vmatprep.subr.bf16.mxu0 %v6151
    %6963 = vmatpush1.bf16.msra.mxu0 %v6150
    %6964 = vmatprep.subr.bf16.mxu0 %v6158
    %6965 = vmatpush1.bf16.msra.mxu0 %v6157
    %6966 = vmatprep.subr.bf16.mxu0 %v6165
    %6967 = vmatpush1.bf16.msra.mxu0 %v6164
    %6968 = vmatprep.subr.bf16.mxu0 %v6172
    %6969 = vmatpush1.bf16.msra.mxu0 %v6171
    %6970 = vmatprep.subr.bf16.mxu0 %v6179
    %6971 = vmatpush1.bf16.msra.mxu0 %v6178
    %6972 = vmatprep.subr.bf16.mxu0 %v6186
    %6973 = vmatpush1.bf16.msra.mxu0 %v6185
    %6974 = vmatprep.subr.bf16.mxu0 %v6193
    %6975 = vmatpush1.bf16.msra.mxu0 %v6192
    %6976 = vmatprep.subr.bf16.mxu0 %v6200
    %6977 = vmatpush1.bf16.msra.mxu0 %v6199
    %6978 = vmatprep.subr.bf16.mxu0 %v6207
    %6979 = vmatpush1.bf16.msra.mxu0 %v6206
    %6980 = vmatprep.subr.bf16.mxu0 %v6214
    %6981 = vmatpush1.bf16.msra.mxu0 %v6213
    %6982 = vmatprep.subr.bf16.mxu0 %v6221
    %6983 = vmatpush1.bf16.msra.mxu0 %v6220
    %6984 = vmatprep.subr.bf16.mxu0 %v6228
    %6985 = vmatpush1.bf16.msra.mxu0 %v6227
    %6986 = vmatprep.subr.bf16.mxu0 %v6235
    %6987 = vmatpush1.bf16.msra.mxu0 %v6234
    %6988 = vmatprep.mubr.bf16.mxu0 %v4055
    %6989 = vmatmul.mubr.bf16.gmra.mrb[0].mxu0 %v4054
    %v6990 = vpop.f32.mrb[0].mxu0
    %v6991 = vadd.f32 %v6948, %v6990
    %v6992 = vpop.f32.mrb[0].mxu0
    %v6993 = vadd.f32 %v6950, %v6992
    %v6994 = vpop.f32.mrb[0].mxu0
    %v6995 = vadd.f32 %v6952, %v6994
    %v6996 = vpop.f32.mrb[0].mxu0
    %v6997 = vadd.f32 %v6954, %v6996
    %6998 = vdwg.mxu0
    %6999 = vmatprep.subr.bf16.mxu0 %v6242
    %7000 = vmatpush1.bf16.msra.mxu0 %v6241
    %7001 = vmatprep.subr.bf16.mxu0 %v6249
    %7002 = vmatpush1.bf16.msra.mxu0 %v6248
    %7003 = vmatprep.subr.bf16.mxu0 %v6256
    %7004 = vmatpush1.bf16.msra.mxu0 %v6255
    %7005 = vmatprep.subr.bf16.mxu0 %v6263
    %7006 = vmatpush1.bf16.msra.mxu0 %v6262
    %7007 = vmatprep.subr.bf16.mxu0 %v6270
    %7008 = vmatpush1.bf16.msra.mxu0 %v6269
    %7009 = vmatprep.subr.bf16.mxu0 %v6277
    %7010 = vmatpush1.bf16.msra.mxu0 %v6276
    %7011 = vmatprep.subr.bf16.mxu0 %v6284
    %7012 = vmatpush1.bf16.msra.mxu0 %v6283
    %7013 = vmatprep.subr.bf16.mxu0 %v6291
    %7014 = vmatpush1.bf16.msra.mxu0 %v6290
    %7015 = vmatprep.subr.bf16.mxu0 %v6298
    %7016 = vmatpush1.bf16.msra.mxu0 %v6297
    %7017 = vmatprep.subr.bf16.mxu0 %v6305
    %7018 = vmatpush1.bf16.msra.mxu0 %v6304
    %7019 = vmatprep.subr.bf16.mxu0 %v6312
    %7020 = vmatpush1.bf16.msra.mxu0 %v6311
    %7021 = vmatprep.subr.bf16.mxu0 %v6319
    %7022 = vmatpush1.bf16.msra.mxu0 %v6318
    %7023 = vmatprep.subr.bf16.mxu0 %v6326
    %7024 = vmatpush1.bf16.msra.mxu0 %v6325
    %7025 = vmatprep.subr.bf16.mxu0 %v6333
    %7026 = vmatpush1.bf16.msra.mxu0 %v6332
    %7027 = vmatprep.subr.bf16.mxu0 %v6340
    %7028 = vmatpush1.bf16.msra.mxu0 %v6339
    %7029 = vmatprep.subr.bf16.mxu0 %v6347
    %7030 = vmatpush1.bf16.msra.mxu0 %v6346
    %7031 = vmatprep.mubr.bf16.mxu0 %v4057
    %7032 = vmatmul.mubr.bf16.gmra.mrb[0].mxu0 %v4056
    %v7033 = vpop.f32.mrb[0].mxu0
    %v7034 = vadd.f32 %v6991, %v7033
    %v7035 = vpop.f32.mrb[0].mxu0
    %v7036 = vadd.f32 %v6993, %v7035
    %v7037 = vpop.f32.mrb[0].mxu0
    %v7038 = vadd.f32 %v6995, %v7037
    %v7039 = vpop.f32.mrb[0].mxu0
    %v7040 = vadd.f32 %v6997, %v7039
    %7041 = vdwg.mxu0
    %7042 = vmatprep.subr.bf16.mxu0 %v6354
    %7043 = vmatpush1.bf16.msra.mxu0 %v6353
    %7044 = vmatprep.subr.bf16.mxu0 %v6361
    %7045 = vmatpush1.bf16.msra.mxu0 %v6360
    %7046 = vmatprep.subr.bf16.mxu0 %v6368
    %7047 = vmatpush1.bf16.msra.mxu0 %v6367
    %7048 = vmatprep.subr.bf16.mxu0 %v6375
    %7049 = vmatpush1.bf16.msra.mxu0 %v6374
    %7050 = vmatprep.subr.bf16.mxu0 %v6382
    %7051 = vmatpush1.bf16.msra.mxu0 %v6381
    %7052 = vmatprep.subr.bf16.mxu0 %v6389
    %7053 = vmatpush1.bf16.msra.mxu0 %v6388
    %7054 = vmatprep.subr.bf16.mxu0 %v6396
    %7055 = vmatpush1.bf16.msra.mxu0 %v6395
    %7056 = vmatprep.subr.bf16.mxu0 %v6403
    %7057 = vmatpush1.bf16.msra.mxu0 %v6402
    %7058 = vmatprep.subr.bf16.mxu0 %v6410
    %7059 = vmatpush1.bf16.msra.mxu0 %v6409
    %7060 = vmatprep.subr.bf16.mxu0 %v6417
    %7061 = vmatpush1.bf16.msra.mxu0 %v6416
    %7062 = vmatprep.subr.bf16.mxu0 %v6424
    %7063 = vmatpush1.bf16.msra.mxu0 %v6423
    %7064 = vmatprep.subr.bf16.mxu0 %v6431
    %7065 = vmatpush1.bf16.msra.mxu0 %v6430
    %7066 = vmatprep.subr.bf16.mxu0 %v6438
    %7067 = vmatpush1.bf16.msra.mxu0 %v6437
    %7068 = vmatprep.subr.bf16.mxu0 %v6445
    %7069 = vmatpush1.bf16.msra.mxu0 %v6444
    %7070 = vmatprep.subr.bf16.mxu0 %v6452
    %7071 = vmatpush1.bf16.msra.mxu0 %v6451
    %7072 = vmatprep.subr.bf16.mxu0 %v6459
    %7073 = vmatpush1.bf16.msra.mxu0 %v6458
    %7074 = vmatprep.mubr.bf16.mxu0 %v4059
    %7075 = vmatmul.mubr.bf16.gmra.mrb[0].mxu0 %v4058
    %v7076 = vpop.f32.mrb[0].mxu0
    %v7077 = vadd.f32 %v7034, %v7076
    %v7078 = vpop.f32.mrb[0].mxu0
    %v7079 = vadd.f32 %v7036, %v7078
    %v7080 = vpop.f32.mrb[0].mxu0
    %v7081 = vadd.f32 %v7038, %v7080
    %v7082 = vpop.f32.mrb[0].mxu0
    %v7083 = vadd.f32 %v7040, %v7082
    %7084 = vdwg.mxu0
    %7085 = vmatprep.subr.bf16.mxu0 %v6020
    %7086 = vmatpush1.bf16.msra.mxu0 %v6019
    %7087 = vmatprep.subr.bf16.mxu0 %v6027
    %7088 = vmatpush1.bf16.msra.mxu0 %v6026
    %7089 = vmatprep.subr.bf16.mxu0 %v6034
    %7090 = vmatpush1.bf16.msra.mxu0 %v6033
    %7091 = vmatprep.subr.bf16.mxu0 %v6041
    %7092 = vmatpush1.bf16.msra.mxu0 %v6040
    %7093 = vmatprep.subr.bf16.mxu0 %v6048
    %7094 = vmatpush1.bf16.msra.mxu0 %v6047
    %7095 = vmatprep.subr.bf16.mxu0 %v6055
    %7096 = vmatpush1.bf16.msra.mxu0 %v6054
    %7097 = vmatprep.subr.bf16.mxu0 %v6062
    %7098 = vmatpush1.bf16.msra.mxu0 %v6061
    %7099 = vmatprep.subr.bf16.mxu0 %v6069
    %7100 = vmatpush1.bf16.msra.mxu0 %v6068
    %7101 = vmatprep.subr.bf16.mxu0 %v6076
    %7102 = vmatpush1.bf16.msra.mxu0 %v6075
    %7103 = vmatprep.subr.bf16.mxu0 %v6083
    %7104 = vmatpush1.bf16.msra.mxu0 %v6082
    %7105 = vmatprep.subr.bf16.mxu0 %v6090
    %7106 = vmatpush1.bf16.msra.mxu0 %v6089
    %7107 = vmatprep.subr.bf16.mxu0 %v6097
    %7108 = vmatpush1.bf16.msra.mxu0 %v6096
    %7109 = vmatprep.subr.bf16.mxu0 %v6104
    %7110 = vmatpush1.bf16.msra.mxu0 %v6103
    %7111 = vmatprep.subr.bf16.mxu0 %v6111
    %7112 = vmatpush1.bf16.msra.mxu0 %v6110
    %7113 = vmatprep.subr.bf16.mxu0 %v6118
    %7114 = vmatpush1.bf16.msra.mxu0 %v6117
    %7115 = vmatprep.subr.bf16.mxu0 %v6125
    %7116 = vmatpush1.bf16.msra.mxu0 %v6124
    %7117 = vmatprep.mubr.bf16.mxu0 %v4053
    %7118 = vmatmul.mubr.bf16.gmra.mrb[0].mxu0 %v4052
    %v7119 = vpop.f32.mrb[0].mxu0
    %v7120 = vadd.f32 %v4585, %v7119
    %v7121 = vpop.f32.mrb[0].mxu0
    %v7122 = vadd.f32 %v4589, %v7121
    %v7123 = vpop.f32.mrb[0].mxu0
    %v7124 = vadd.f32 %v4585, %v7123
    %v7125 = vpop.f32.mrb[0].mxu0
    %v7126 = vadd.f32 %v4589, %v7125
    %7127 = vdwg.mxu0
    %7128 = vmatprep.subr.bf16.mxu0 %v6132
    %7129 = vmatpush1.bf16.msra.mxu0 %v6131
    %7130 = vmatprep.subr.bf16.mxu0 %v6139
    %7131 = vmatpush1.bf16.msra.mxu0 %v6138
    %7132 = vmatprep.subr.bf16.mxu0 %v6146
    %7133 = vmatpush1.bf16.msra.mxu0 %v6145
    %7134 = vmatprep.subr.bf16.mxu0 %v6153
    %7135 = vmatpush1.bf16.msra.mxu0 %v6152
    %7136 = vmatprep.subr.bf16.mxu0 %v6160
    %7137 = vmatpush1.bf16.msra.mxu0 %v6159
    %7138 = vmatprep.subr.bf16.mxu0 %v6167
    %7139 = vmatpush1.bf16.msra.mxu0 %v6166
    %7140 = vmatprep.subr.bf16.mxu0 %v6174
    %7141 = vmatpush1.bf16.msra.mxu0 %v6173
    %7142 = vmatprep.subr.bf16.mxu0 %v6181
    %7143 = vmatpush1.bf16.msra.mxu0 %v6180
    %7144 = vmatprep.subr.bf16.mxu0 %v6188
    %7145 = vmatpush1.bf16.msra.mxu0 %v6187
    %7146 = vmatprep.subr.bf16.mxu0 %v6195
    %7147 = vmatpush1.bf16.msra.mxu0 %v6194
    %7148 = vmatprep.subr.bf16.mxu0 %v6202
    %7149 = vmatpush1.bf16.msra.mxu0 %v6201
    %7150 = vmatprep.subr.bf16.mxu0 %v6209
    %7151 = vmatpush1.bf16.msra.mxu0 %v6208
    %7152 = vmatprep.subr.bf16.mxu0 %v6216
    %7153 = vmatpush1.bf16.msra.mxu0 %v6215
    %7154 = vmatprep.subr.bf16.mxu0 %v6223
    %7155 = vmatpush1.bf16.msra.mxu0 %v6222
    %7156 = vmatprep.subr.bf16.mxu0 %v6230
    %7157 = vmatpush1.bf16.msra.mxu0 %v6229
    %7158 = vmatprep.subr.bf16.mxu0 %v6237
    %7159 = vmatpush1.bf16.msra.mxu0 %v6236
    %7160 = vmatprep.mubr.bf16.mxu0 %v4055
    %7161 = vmatmul.mubr.bf16.gmra.mrb[0].mxu0 %v4054
    %v7162 = vpop.f32.mrb[0].mxu0
    %v7163 = vadd.f32 %v7120, %v7162
    %v7164 = vpop.f32.mrb[0].mxu0
    %v7165 = vadd.f32 %v7122, %v7164
    %v7166 = vpop.f32.mrb[0].mxu0
    %v7167 = vadd.f32 %v7124, %v7166
    %v7168 = vpop.f32.mrb[0].mxu0
    %v7169 = vadd.f32 %v7126, %v7168
    %7170 = vdwg.mxu0
    %7171 = vmatprep.subr.bf16.mxu0 %v6244
    %7172 = vmatpush1.bf16.msra.mxu0 %v6243
    %7173 = vmatprep.subr.bf16.mxu0 %v6251
    %7174 = vmatpush1.bf16.msra.mxu0 %v6250
    %7175 = vmatprep.subr.bf16.mxu0 %v6258
    %7176 = vmatpush1.bf16.msra.mxu0 %v6257
    %7177 = vmatprep.subr.bf16.mxu0 %v6265
    %7178 = vmatpush1.bf16.msra.mxu0 %v6264
    %7179 = vmatprep.subr.bf16.mxu0 %v6272
    %7180 = vmatpush1.bf16.msra.mxu0 %v6271
    %7181 = vmatprep.subr.bf16.mxu0 %v6279
    %7182 = vmatpush1.bf16.msra.mxu0 %v6278
    %7183 = vmatprep.subr.bf16.mxu0 %v6286
    %7184 = vmatpush1.bf16.msra.mxu0 %v6285
    %7185 = vmatprep.subr.bf16.mxu0 %v6293
    %7186 = vmatpush1.bf16.msra.mxu0 %v6292
    %7187 = vmatprep.subr.bf16.mxu0 %v6300
    %7188 = vmatpush1.bf16.msra.mxu0 %v6299
    %7189 = vmatprep.subr.bf16.mxu0 %v6307
    %7190 = vmatpush1.bf16.msra.mxu0 %v6306
    %7191 = vmatprep.subr.bf16.mxu0 %v6314
    %7192 = vmatpush1.bf16.msra.mxu0 %v6313
    %7193 = vmatprep.subr.bf16.mxu0 %v6321
    %7194 = vmatpush1.bf16.msra.mxu0 %v6320
    %7195 = vmatprep.subr.bf16.mxu0 %v6328
    %7196 = vmatpush1.bf16.msra.mxu0 %v6327
    %7197 = vmatprep.subr.bf16.mxu0 %v6335
    %7198 = vmatpush1.bf16.msra.mxu0 %v6334
    %7199 = vmatprep.subr.bf16.mxu0 %v6342
    %7200 = vmatpush1.bf16.msra.mxu0 %v6341
    %7201 = vmatprep.subr.bf16.mxu0 %v6349
    %7202 = vmatpush1.bf16.msra.mxu0 %v6348
    %7203 = vmatprep.mubr.bf16.mxu0 %v4057
    %7204 = vmatmul.mubr.bf16.gmra.mrb[0].mxu0 %v4056
    %v7205 = vpop.f32.mrb[0].mxu0
    %v7206 = vadd.f32 %v7163, %v7205
    %v7207 = vpop.f32.mrb[0].mxu0
    %v7208 = vadd.f32 %v7165, %v7207
    %v7209 = vpop.f32.mrb[0].mxu0
    %v7210 = vadd.f32 %v7167, %v7209
    %v7211 = vpop.f32.mrb[0].mxu0
    %v7212 = vadd.f32 %v7169, %v7211
    %7213 = vdwg.mxu0
    %7214 = vmatprep.subr.bf16.mxu0 %v6356
    %7215 = vmatpush1.bf16.msra.mxu0 %v6355
    %7216 = vmatprep.subr.bf16.mxu0 %v6363
    %7217 = vmatpush1.bf16.msra.mxu0 %v6362
    %7218 = vmatprep.subr.bf16.mxu0 %v6370
    %7219 = vmatpush1.bf16.msra.mxu0 %v6369
    %7220 = vmatprep.subr.bf16.mxu0 %v6377
    %7221 = vmatpush1.bf16.msra.mxu0 %v6376
    %7222 = vmatprep.subr.bf16.mxu0 %v6384
    %7223 = vmatpush1.bf16.msra.mxu0 %v6383
    %7224 = vmatprep.subr.bf16.mxu0 %v6391
    %7225 = vmatpush1.bf16.msra.mxu0 %v6390
    %7226 = vmatprep.subr.bf16.mxu0 %v6398
    %7227 = vmatpush1.bf16.msra.mxu0 %v6397
    %7228 = vmatprep.subr.bf16.mxu0 %v6405
    %7229 = vmatpush1.bf16.msra.mxu0 %v6404
    %7230 = vmatprep.subr.bf16.mxu0 %v6412
    %7231 = vmatpush1.bf16.msra.mxu0 %v6411
    %7232 = vmatprep.subr.bf16.mxu0 %v6419
    %7233 = vmatpush1.bf16.msra.mxu0 %v6418
    %7234 = vmatprep.subr.bf16.mxu0 %v6426
    %7235 = vmatpush1.bf16.msra.mxu0 %v6425
    %7236 = vmatprep.subr.bf16.mxu0 %v6433
    %7237 = vmatpush1.bf16.msra.mxu0 %v6432
    %7238 = vmatprep.subr.bf16.mxu0 %v6440
    %7239 = vmatpush1.bf16.msra.mxu0 %v6439
    %7240 = vmatprep.subr.bf16.mxu0 %v6447
    %7241 = vmatpush1.bf16.msra.mxu0 %v6446
    %7242 = vmatprep.subr.bf16.mxu0 %v6454
    %7243 = vmatpush1.bf16.msra.mxu0 %v6453
    %7244 = vmatprep.subr.bf16.mxu0 %v6461
    %7245 = vmatpush1.bf16.msra.mxu0 %v6460
    %7246 = vmatprep.mubr.bf16.mxu0 %v4059
    %7247 = vmatmul.mubr.bf16.gmra.mrb[0].mxu0 %v4058
    %v7248 = vpop.f32.mrb[0].mxu0
    %v7249 = vadd.f32 %v7206, %v7248
    %v7250 = vpop.f32.mrb[0].mxu0
    %v7251 = vadd.f32 %v7208, %v7250
    %v7252 = vpop.f32.mrb[0].mxu0
    %v7253 = vadd.f32 %v7210, %v7252
    %v7254 = vpop.f32.mrb[0].mxu0
    %v7255 = vadd.f32 %v7212, %v7254
    %7256 = vdwg.mxu0
    %7257 = vmatprep.subr.bf16.mxu0 %v6022
    %7258 = vmatpush1.bf16.msra.mxu0 %v6021
    %7259 = vmatprep.subr.bf16.mxu0 %v6029
    %7260 = vmatpush1.bf16.msra.mxu0 %v6028
    %7261 = vmatprep.subr.bf16.mxu0 %v6036
    %7262 = vmatpush1.bf16.msra.mxu0 %v6035
    %7263 = vmatprep.subr.bf16.mxu0 %v6043
    %7264 = vmatpush1.bf16.msra.mxu0 %v6042
    %7265 = vmatprep.subr.bf16.mxu0 %v6050
    %7266 = vmatpush1.bf16.msra.mxu0 %v6049
    %7267 = vmatprep.subr.bf16.mxu0 %v6057
    %7268 = vmatpush1.bf16.msra.mxu0 %v6056
    %7269 = vmatprep.subr.bf16.mxu0 %v6064
    %7270 = vmatpush1.bf16.msra.mxu0 %v6063
    %7271 = vmatprep.subr.bf16.mxu0 %v6071
    %7272 = vmatpush1.bf16.msra.mxu0 %v6070
    %7273 = vmatprep.subr.bf16.mxu0 %v6078
    %7274 = vmatpush1.bf16.msra.mxu0 %v6077
    %7275 = vmatprep.subr.bf16.mxu0 %v6085
    %7276 = vmatpush1.bf16.msra.mxu0 %v6084
    %7277 = vmatprep.subr.bf16.mxu0 %v6092
    %7278 = vmatpush1.bf16.msra.mxu0 %v6091
    %7279 = vmatprep.subr.bf16.mxu0 %v6099
    %7280 = vmatpush1.bf16.msra.mxu0 %v6098
    %7281 = vmatprep.subr.bf16.mxu0 %v6106
    %7282 = vmatpush1.bf16.msra.mxu0 %v6105
    %7283 = vmatprep.subr.bf16.mxu0 %v6113
    %7284 = vmatpush1.bf16.msra.mxu0 %v6112
    %7285 = vmatprep.subr.bf16.mxu0 %v6120
    %7286 = vmatpush1.bf16.msra.mxu0 %v6119
    %7287 = vmatprep.subr.bf16.mxu0 %v6127
    %7288 = vmatpush1.bf16.msra.mxu0 %v6126
    %7289 = vmatprep.mubr.bf16.mxu0 %v4053
    %7290 = vmatmul.mubr.bf16.gmra.mrb[0].mxu0 %v4052
    %v7291 = vpop.f32.mrb[0].mxu0
    %v7292 = vadd.f32 %v4593, %v7291
    %v7293 = vpop.f32.mrb[0].mxu0
    %v7294 = vadd.f32 %v4597, %v7293
    %v7295 = vpop.f32.mrb[0].mxu0
    %v7296 = vadd.f32 %v4593, %v7295
    %v7297 = vpop.f32.mrb[0].mxu0
    %v7298 = vadd.f32 %v4597, %v7297
    %7299 = vdwg.mxu0
    %7300 = vmatprep.subr.bf16.mxu0 %v6134
    %7301 = vmatpush1.bf16.msra.mxu0 %v6133
    %7302 = vmatprep.subr.bf16.mxu0 %v6141
    %7303 = vmatpush1.bf16.msra.mxu0 %v6140
    %7304 = vmatprep.subr.bf16.mxu0 %v6148
    %7305 = vmatpush1.bf16.msra.mxu0 %v6147
    %7306 = vmatprep.subr.bf16.mxu0 %v6155
    %7307 = vmatpush1.bf16.msra.mxu0 %v6154
    %7308 = vmatprep.subr.bf16.mxu0 %v6162
    %7309 = vmatpush1.bf16.msra.mxu0 %v6161
    %7310 = vmatprep.subr.bf16.mxu0 %v6169
    %7311 = vmatpush1.bf16.msra.mxu0 %v6168
    %7312 = vmatprep.subr.bf16.mxu0 %v6176
    %7313 = vmatpush1.bf16.msra.mxu0 %v6175
    %7314 = vmatprep.subr.bf16.mxu0 %v6183
    %7315 = vmatpush1.bf16.msra.mxu0 %v6182
    %7316 = vmatprep.subr.bf16.mxu0 %v6190
    %7317 = vmatpush1.bf16.msra.mxu0 %v6189
    %7318 = vmatprep.subr.bf16.mxu0 %v6197
    %7319 = vmatpush1.bf16.msra.mxu0 %v6196
    %7320 = vmatprep.subr.bf16.mxu0 %v6204
    %7321 = vmatpush1.bf16.msra.mxu0 %v6203
    %7322 = vmatprep.subr.bf16.mxu0 %v6211
    %7323 = vmatpush1.bf16.msra.mxu0 %v6210
    %7324 = vmatprep.subr.bf16.mxu0 %v6218
    %7325 = vmatpush1.bf16.msra.mxu0 %v6217
    %7326 = vmatprep.subr.bf16.mxu0 %v6225
    %7327 = vmatpush1.bf16.msra.mxu0 %v6224
    %7328 = vmatprep.subr.bf16.mxu0 %v6232
    %7329 = vmatpush1.bf16.msra.mxu0 %v6231
    %7330 = vmatprep.subr.bf16.mxu0 %v6239
    %7331 = vmatpush1.bf16.msra.mxu0 %v6238
    %7332 = vmatprep.mubr.bf16.mxu0 %v4055
    %7333 = vmatmul.mubr.bf16.gmra.mrb[0].mxu0 %v4054
    %v7334 = vpop.f32.mrb[0].mxu0
    %v7335 = vadd.f32 %v7292, %v7334
    %v7336 = vpop.f32.mrb[0].mxu0
    %v7337 = vadd.f32 %v7294, %v7336
    %v7338 = vpop.f32.mrb[0].mxu0
    %v7339 = vadd.f32 %v7296, %v7338
    %v7340 = vpop.f32.mrb[0].mxu0
    %v7341 = vadd.f32 %v7298, %v7340
    %7342 = vdwg.mxu0
    %7343 = vmatprep.subr.bf16.mxu0 %v6246
    %7344 = vmatpush1.bf16.msra.mxu0 %v6245
    %7345 = vmatprep.subr.bf16.mxu0 %v6253
    %7346 = vmatpush1.bf16.msra.mxu0 %v6252
    %7347 = vmatprep.subr.bf16.mxu0 %v6260
    %7348 = vmatpush1.bf16.msra.mxu0 %v6259
    %7349 = vmatprep.subr.bf16.mxu0 %v6267
    %7350 = vmatpush1.bf16.msra.mxu0 %v6266
    %7351 = vmatprep.subr.bf16.mxu0 %v6274
    %7352 = vmatpush1.bf16.msra.mxu0 %v6273
    %7353 = vmatprep.subr.bf16.mxu0 %v6281
    %7354 = vmatpush1.bf16.msra.mxu0 %v6280
    %7355 = vmatprep.subr.bf16.mxu0 %v6288
    %7356 = vmatpush1.bf16.msra.mxu0 %v6287
    %7357 = vmatprep.subr.bf16.mxu0 %v6295
    %7358 = vmatpush1.bf16.msra.mxu0 %v6294
    %7359 = vmatprep.subr.bf16.mxu0 %v6302
    %7360 = vmatpush1.bf16.msra.mxu0 %v6301
    %7361 = vmatprep.subr.bf16.mxu0 %v6309
    %7362 = vmatpush1.bf16.msra.mxu0 %v6308
    %7363 = vmatprep.subr.bf16.mxu0 %v6316
    %7364 = vmatpush1.bf16.msra.mxu0 %v6315
    %7365 = vmatprep.subr.bf16.mxu0 %v6323
    %7366 = vmatpush1.bf16.msra.mxu0 %v6322
    %7367 = vmatprep.subr.bf16.mxu0 %v6330
    %7368 = vmatpush1.bf16.msra.mxu0 %v6329
    %7369 = vmatprep.subr.bf16.mxu0 %v6337
    %7370 = vmatpush1.bf16.msra.mxu0 %v6336
    %7371 = vmatprep.subr.bf16.mxu0 %v6344
    %7372 = vmatpush1.bf16.msra.mxu0 %v6343
    %7373 = vmatprep.subr.bf16.mxu0 %v6351
    %7374 = vmatpush1.bf16.msra.mxu0 %v6350
    %7375 = vmatprep.mubr.bf16.mxu0 %v4057
    %7376 = vmatmul.mubr.bf16.gmra.mrb[0].mxu0 %v4056
    %v7377 = vpop.f32.mrb[0].mxu0
    %v7378 = vadd.f32 %v7335, %v7377
    %v7379 = vpop.f32.mrb[0].mxu0
    %v7380 = vadd.f32 %v7337, %v7379
    %v7381 = vpop.f32.mrb[0].mxu0
    %v7382 = vadd.f32 %v7339, %v7381
    %v7383 = vpop.f32.mrb[0].mxu0
    %v7384 = vadd.f32 %v7341, %v7383
    %7385 = vdwg.mxu0
    %7386 = vmatprep.subr.bf16.mxu0 %v6358
    %7387 = vmatpush1.bf16.msra.mxu0 %v6357
    %7388 = vmatprep.subr.bf16.mxu0 %v6365
    %7389 = vmatpush1.bf16.msra.mxu0 %v6364
    %7390 = vmatprep.subr.bf16.mxu0 %v6372
    %7391 = vmatpush1.bf16.msra.mxu0 %v6371
    %7392 = vmatprep.subr.bf16.mxu0 %v6379
    %7393 = vmatpush1.bf16.msra.mxu0 %v6378
    %7394 = vmatprep.subr.bf16.mxu0 %v6386
    %7395 = vmatpush1.bf16.msra.mxu0 %v6385
    %7396 = vmatprep.subr.bf16.mxu0 %v6393
    %7397 = vmatpush1.bf16.msra.mxu0 %v6392
    %7398 = vmatprep.subr.bf16.mxu0 %v6400
    %7399 = vmatpush1.bf16.msra.mxu0 %v6399
    %7400 = vmatprep.subr.bf16.mxu0 %v6407
    %7401 = vmatpush1.bf16.msra.mxu0 %v6406
    %7402 = vmatprep.subr.bf16.mxu0 %v6414
    %7403 = vmatpush1.bf16.msra.mxu0 %v6413
    %7404 = vmatprep.subr.bf16.mxu0 %v6421
    %7405 = vmatpush1.bf16.msra.mxu0 %v6420
    %7406 = vmatprep.subr.bf16.mxu0 %v6428
    %7407 = vmatpush1.bf16.msra.mxu0 %v6427
    %7408 = vmatprep.subr.bf16.mxu0 %v6435
    %7409 = vmatpush1.bf16.msra.mxu0 %v6434
    %7410 = vmatprep.subr.bf16.mxu0 %v6442
    %7411 = vmatpush1.bf16.msra.mxu0 %v6441
    %7412 = vmatprep.subr.bf16.mxu0 %v6449
    %7413 = vmatpush1.bf16.msra.mxu0 %v6448
    %7414 = vmatprep.subr.bf16.mxu0 %v6456
    %7415 = vmatpush1.bf16.msra.mxu0 %v6455
    %7416 = vmatprep.subr.bf16.mxu0 %v6463
    %7417 = vmatpush1.bf16.msra.mxu0 %v6462
    %7418 = vmatprep.mubr.bf16.mxu0 %v4059
    %7419 = vmatmul.mubr.bf16.gmra.mrb[0].mxu0 %v4058
    %v7420 = vpop.f32.mrb[0].mxu0
    %v7421 = vadd.f32 %v7378, %v7420
    %v7422 = vpop.f32.mrb[0].mxu0
    %v7423 = vadd.f32 %v7380, %v7422
    %v7424 = vpop.f32.mrb[0].mxu0
    %v7425 = vadd.f32 %v7382, %v7424
    %v7426 = vpop.f32.mrb[0].mxu0
    %v7427 = vadd.f32 %v7384, %v7426
    %7428 = vdwg.mxu0
    %7429 = vmatprep.subr.bf16.mxu0 0
    %7430 = vmatpush1.bf16.msra.mxu0 %v6023
    %7431 = vmatprep.subr.bf16.mxu0 0
    %7432 = vmatpush1.bf16.msra.mxu0 %v6030
    %7433 = vmatprep.subr.bf16.mxu0 0
    %7434 = vmatpush1.bf16.msra.mxu0 %v6037
    %7435 = vmatprep.subr.bf16.mxu0 0
    %7436 = vmatpush1.bf16.msra.mxu0 %v6044
    %7437 = vmatprep.subr.bf16.mxu0 0
    %7438 = vmatpush1.bf16.msra.mxu0 %v6051
    %7439 = vmatprep.subr.bf16.mxu0 0
    %7440 = vmatpush1.bf16.msra.mxu0 %v6058
    %7441 = vmatprep.subr.bf16.mxu0 0
    %7442 = vmatpush1.bf16.msra.mxu0 %v6065
    %7443 = vmatprep.subr.bf16.mxu0 0
    %7444 = vmatpush1.bf16.msra.mxu0 %v6072
    %7445 = vmatprep.subr.bf16.mxu0 0
    %7446 = vmatpush1.bf16.msra.mxu0 %v6079
    %7447 = vmatprep.subr.bf16.mxu0 0
    %7448 = vmatpush1.bf16.msra.mxu0 %v6086
    %7449 = vmatprep.subr.bf16.mxu0 0
    %7450 = vmatpush1.bf16.msra.mxu0 %v6093
    %7451 = vmatprep.subr.bf16.mxu0 0
    %7452 = vmatpush1.bf16.msra.mxu0 %v6100
    %7453 = vmatprep.subr.bf16.mxu0 0
    %7454 = vmatpush1.bf16.msra.mxu0 %v6107
    %7455 = vmatprep.subr.bf16.mxu0 0
    %7456 = vmatpush1.bf16.msra.mxu0 %v6114
    %7457 = vmatprep.subr.bf16.mxu0 0
    %7458 = vmatpush1.bf16.msra.mxu0 %v6121
    %7459 = vmatprep.subr.bf16.mxu0 0
    %7460 = vmatpush1.bf16.msra.mxu0 %v6128
    %7461 = vmatprep.mubr.bf16.mxu0 %v4053
    %7462 = vmatmul.mubr.bf16.gmra.mrb[0].mxu0 %v4052
    %v7463 = vpop.f32.mrb[0].mxu0
    %v7464 = vadd.f32 %v4601, %v7463
    %v7465 = vpop.f32.mrb[0].mxu0
    %v7466 = vpop.f32.mrb[0].mxu0
    %v7467 = vadd.f32 %v4601, %v7466
    %v7468 = vpop.f32.mrb[0].mxu0
    %7469 = vdwg.mxu0
    %7470 = vmatprep.subr.bf16.mxu0 0
    %7471 = vmatpush1.bf16.msra.mxu0 %v6135
    %7472 = vmatprep.subr.bf16.mxu0 0
    %7473 = vmatpush1.bf16.msra.mxu0 %v6142
    %7474 = vmatprep.subr.bf16.mxu0 0
    %7475 = vmatpush1.bf16.msra.mxu0 %v6149
    %7476 = vmatprep.subr.bf16.mxu0 0
    %7477 = vmatpush1.bf16.msra.mxu0 %v6156
    %7478 = vmatprep.subr.bf16.mxu0 0
    %7479 = vmatpush1.bf16.msra.mxu0 %v6163
    %7480 = vmatprep.subr.bf16.mxu0 0
    %7481 = vmatpush1.bf16.msra.mxu0 %v6170
    %7482 = vmatprep.subr.bf16.mxu0 0
    %7483 = vmatpush1.bf16.msra.mxu0 %v6177
    %7484 = vmatprep.subr.bf16.mxu0 0
    %7485 = vmatpush1.bf16.msra.mxu0 %v6184
    %7486 = vmatprep.subr.bf16.mxu0 0
    %7487 = vmatpush1.bf16.msra.mxu0 %v6191
    %7488 = vmatprep.subr.bf16.mxu0 0
    %7489 = vmatpush1.bf16.msra.mxu0 %v6198
    %7490 = vmatprep.subr.bf16.mxu0 0
    %7491 = vmatpush1.bf16.msra.mxu0 %v6205
    %7492 = vmatprep.subr.bf16.mxu0 0
    %7493 = vmatpush1.bf16.msra.mxu0 %v6212
    %7494 = vmatprep.subr.bf16.mxu0 0
    %7495 = vmatpush1.bf16.msra.mxu0 %v6219
    %7496 = vmatprep.subr.bf16.mxu0 0
    %7497 = vmatpush1.bf16.msra.mxu0 %v6226
    %7498 = vmatprep.subr.bf16.mxu0 0
    %7499 = vmatpush1.bf16.msra.mxu0 %v6233
    %7500 = vmatprep.subr.bf16.mxu0 0
    %7501 = vmatpush1.bf16.msra.mxu0 %v6240
    %7502 = vmatprep.mubr.bf16.mxu0 %v4055
    %7503 = vmatmul.mubr.bf16.gmra.mrb[0].mxu0 %v4054
    %v7504 = vpop.f32.mrb[0].mxu0
    %v7505 = vadd.f32 %v7464, %v7504
    %v7506 = vpop.f32.mrb[0].mxu0
    %v7507 = vpop.f32.mrb[0].mxu0
    %v7508 = vadd.f32 %v7467, %v7507
    %v7509 = vpop.f32.mrb[0].mxu0
    %7510 = vdwg.mxu0
    %7511 = vmatprep.subr.bf16.mxu0 0
    %7512 = vmatpush1.bf16.msra.mxu0 %v6247
    %7513 = vmatprep.subr.bf16.mxu0 0
    %7514 = vmatpush1.bf16.msra.mxu0 %v6254
    %7515 = vmatprep.subr.bf16.mxu0 0
    %7516 = vmatpush1.bf16.msra.mxu0 %v6261
    %7517 = vmatprep.subr.bf16.mxu0 0
    %7518 = vmatpush1.bf16.msra.mxu0 %v6268
    %7519 = vmatprep.subr.bf16.mxu0 0
    %7520 = vmatpush1.bf16.msra.mxu0 %v6275
    %7521 = vmatprep.subr.bf16.mxu0 0
    %7522 = vmatpush1.bf16.msra.mxu0 %v6282
    %7523 = vmatprep.subr.bf16.mxu0 0
    %7524 = vmatpush1.bf16.msra.mxu0 %v6289
    %7525 = vmatprep.subr.bf16.mxu0 0
    %7526 = vmatpush1.bf16.msra.mxu0 %v6296
    %7527 = vmatprep.subr.bf16.mxu0 0
    %7528 = vmatpush1.bf16.msra.mxu0 %v6303
    %7529 = vmatprep.subr.bf16.mxu0 0
    %7530 = vmatpush1.bf16.msra.mxu0 %v6310
    %7531 = vmatprep.subr.bf16.mxu0 0
    %7532 = vmatpush1.bf16.msra.mxu0 %v6317
    %7533 = vmatprep.subr.bf16.mxu0 0
    %7534 = vmatpush1.bf16.msra.mxu0 %v6324
    %7535 = vmatprep.subr.bf16.mxu0 0
    %7536 = vmatpush1.bf16.msra.mxu0 %v6331
    %7537 = vmatprep.subr.bf16.mxu0 0
    %7538 = vmatpush1.bf16.msra.mxu0 %v6338
    %7539 = vmatprep.subr.bf16.mxu0 0
    %7540 = vmatpush1.bf16.msra.mxu0 %v6345
    %7541 = vmatprep.subr.bf16.mxu0 0
    %7542 = vmatpush1.bf16.msra.mxu0 %v6352
    %7543 = vmatprep.mubr.bf16.mxu0 %v4057
    %7544 = vmatmul.mubr.bf16.gmra.mrb[0].mxu0 %v4056
    %v7545 = vpop.f32.mrb[0].mxu0
    %v7546 = vadd.f32 %v7505, %v7545
    %v7547 = vpop.f32.mrb[0].mxu0
    %v7548 = vpop.f32.mrb[0].mxu0
    %v7549 = vadd.f32 %v7508, %v7548
    %v7550 = vpop.f32.mrb[0].mxu0
    %7551 = vdwg.mxu0
    %7552 = vmatprep.subr.bf16.mxu0 0
    %7553 = vmatpush1.bf16.msra.mxu0 %v6359
    %7554 = vmatprep.subr.bf16.mxu0 0
    %7555 = vmatpush1.bf16.msra.mxu0 %v6366
    %7556 = vmatprep.subr.bf16.mxu0 0
    %7557 = vmatpush1.bf16.msra.mxu0 %v6373
    %7558 = vmatprep.subr.bf16.mxu0 0
    %7559 = vmatpush1.bf16.msra.mxu0 %v6380
    %7560 = vmatprep.subr.bf16.mxu0 0
    %7561 = vmatpush1.bf16.msra.mxu0 %v6387
    %7562 = vmatprep.subr.bf16.mxu0 0
    %7563 = vmatpush1.bf16.msra.mxu0 %v6394
    %7564 = vmatprep.subr.bf16.mxu0 0
    %7565 = vmatpush1.bf16.msra.mxu0 %v6401
    %7566 = vmatprep.subr.bf16.mxu0 0
    %7567 = vmatpush1.bf16.msra.mxu0 %v6408
    %7568 = vmatprep.subr.bf16.mxu0 0
    %7569 = vmatpush1.bf16.msra.mxu0 %v6415
    %7570 = vmatprep.subr.bf16.mxu0 0
    %7571 = vmatpush1.bf16.msra.mxu0 %v6422
    %7572 = vmatprep.subr.bf16.mxu0 0
    %7573 = vmatpush1.bf16.msra.mxu0 %v6429
    %7574 = vmatprep.subr.bf16.mxu0 0
    %7575 = vmatpush1.bf16.msra.mxu0 %v6436
    %7576 = vmatprep.subr.bf16.mxu0 0
    %7577 = vmatpush1.bf16.msra.mxu0 %v6443
    %7578 = vmatprep.subr.bf16.mxu0 0
    %7579 = vmatpush1.bf16.msra.mxu0 %v6450
    %7580 = vmatprep.subr.bf16.mxu0 0
    %7581 = vmatpush1.bf16.msra.mxu0 %v6457
    %7582 = vmatprep.subr.bf16.mxu0 0
    %7583 = vmatpush1.bf16.msra.mxu0 %v6464
    %7584 = vmatprep.mubr.bf16.mxu0 %v4059
    %7585 = vmatmul.mubr.bf16.gmra.mrb[0].mxu0 %v4058
    %v7586 = vpop.f32.mrb[0].mxu0
    %v7587 = vadd.f32 %v7546, %v7586
    %v7588 = vpop.f32.mrb[0].mxu0
    %v7589 = vpop.f32.mrb[0].mxu0
    %v7590 = vadd.f32 %v7549, %v7589
    %v7591 = vpop.f32.mrb[0].mxu0
    %7592 = vdwg.mxu0
    %v7593 = vsub.f32 0.0, %v7077
    %v7594 = vsub.f32 0.0, %v7079
    %v7595 = vsub.f32 0.0, %v7249
    %v7596 = vsub.f32 0.0, %v7251
    %v7597 = vsub.f32 0.0, %v7421
    %v7598 = vsub.f32 0.0, %v7423
    %v7599 = vsub.f32 0.0, %v7587
    %v7600 = vsub.f32 0.0, %v7081
    %v7601 = vsub.f32 0.0, %v7083
    %v7602 = vsub.f32 0.0, %v7253
    %v7603 = vsub.f32 0.0, %v7255
    %v7604 = vsub.f32 0.0, %v7425
    %v7605 = vsub.f32 0.0, %v7427
    %v7606 = vsub.f32 0.0, %v7590
    %v7607 = vmul.f32 %v7593, 1.442695
    %v7608 = vpow.pop %v7607
    %v7609 = vmul.f32 %v7594, 1.442695
    %v7610 = vpow.pop %v7609
    %v7611 = vmul.f32 %v7595, 1.442695
    %v7612 = vpow.pop %v7611
    %v7613 = vmul.f32 %v7596, 1.442695
    %v7614 = vpow.pop %v7613
    %v7615 = vmul.f32 %v7597, 1.442695
    %v7616 = vpow.pop %v7615
    %v7617 = vmul.f32 %v7598, 1.442695
    %v7618 = vpow.pop %v7617
    %v7619 = vmul.f32 %v7599, 1.442695
    %v7620 = vpow.pop %v7619
    %v7621 = vmul.f32 %v7600, 1.442695
    %v7622 = vpow.pop %v7621
    %v7623 = vmul.f32 %v7601, 1.442695
    %v7624 = vpow.pop %v7623
    %v7625 = vmul.f32 %v7602, 1.442695
    %v7626 = vpow.pop %v7625
    %v7627 = vmul.f32 %v7603, 1.442695
    %v7628 = vpow.pop %v7627
    %v7629 = vmul.f32 %v7604, 1.442695
    %v7630 = vpow.pop %v7629
    %v7631 = vmul.f32 %v7605, 1.442695
    %v7632 = vpow.pop %v7631
    %v7633 = vmul.f32 %v7606, 1.442695
    %v7634 = vpow.pop %v7633
    %v7635 = vadd.f32 %v7608, 1.0
    %v7636 = vadd.f32 %v7610, 1.0
    %v7637 = vadd.f32 %v7612, 1.0
    %v7638 = vadd.f32 %v7614, 1.0
    %v7639 = vadd.f32 %v7616, 1.0
    %v7640 = vadd.f32 %v7618, 1.0
    %v7641 = vadd.f32 %v7620, 1.0
    %v7642 = vadd.f32 %v7622, 1.0
    %v7643 = vadd.f32 %v7624, 1.0
    %v7644 = vadd.f32 %v7626, 1.0
    %v7645 = vadd.f32 %v7628, 1.0
    %v7646 = vadd.f32 %v7630, 1.0
    %v7647 = vadd.f32 %v7632, 1.0
    %v7648 = vadd.f32 %v7634, 1.0
    %v7649 = vrcp.pop %v7635
    %v7650 = vrcp.pop %v7636
    %v7651 = vrcp.pop %v7637
    %v7652 = vrcp.pop %v7638
    %v7653 = vrcp.pop %v7639
    %v7654 = vrcp.pop %v7640
    %v7655 = vrcp.pop %v7641
    %v7656 = vrcp.pop %v7642
    %v7657 = vrcp.pop %v7643
    %v7658 = vrcp.pop %v7644
    %v7659 = vrcp.pop %v7645
    %v7660 = vrcp.pop %v7646
    %v7661 = vrcp.pop %v7647
    %v7662 = vrcp.pop %v7648
    %7663 = vst [vmem:[#allocation2] sm:$0xff] %v7649
    %7664 = vst [vmem:[#allocation2 + $0x8] sm:$0xff] %v7650
    %7665 = vst [vmem:[#allocation2 + $0x10] sm:$0xff] %v7651
    %7666 = vst [vmem:[#allocation2 + $0x18] sm:$0xff] %v7652
    %7667 = vst [vmem:[#allocation2 + $0x20] sm:$0xff] %v7653
    %7668 = vst [vmem:[#allocation2 + $0x28] sm:$0xff] %v7654
    %vm7669 = vcmask 130048
    %7670 = vst.msk [vmem:[#allocation2 + $0x30] sm:$0xff] %vm7669, %v7655
    %7671 = vst [vmem:[#allocation2 + $0x38] sm:$0xff] %v7656
    %7672 = vst [vmem:[#allocation2 + $0x40] sm:$0xff] %v7657
    %7673 = vst [vmem:[#allocation2 + $0x48] sm:$0xff] %v7658
    %7674 = vst [vmem:[#allocation2 + $0x50] sm:$0xff] %v7659
    %7675 = vst [vmem:[#allocation2 + $0x58] sm:$0xff] %v7660
    %7676 = vst [vmem:[#allocation2 + $0x60] sm:$0xff] %v7661
    %7677 = vst.msk [vmem:[#allocation2 + $0x68] sm:$0xff] %vm7669, %v7662
    // Predicated region
    $region30: #{pnet_forward.1} parent=1 // pred_check
      _
    $region31: #{pnet_forward.1} parent=1 // pred_check_branch
      %7679 = sbr.rel (0) target = $region33
    $region32: #{pnet_forward.1} parent=1 // pred_region
      %s7681 = ssub.s32 1792, 1792
      %7682 = vsyncadd [#allocation3], %s7681
      %s7683 = sshll.u32 [#allocation2], 4
      %s7684 = int_to_ptr.vmem [resolvable:$true] %s7683
      %7689 = dma.vmem_to_hbm [thread:$0]  %s7684, 1792, %s7, [#allocation3], 896, 896, 56
    $region33: #{pnet_forward.1} parent=1 // pred_fallthru
      _
    // Predicated region
    $region34: #{pnet_forward.1} parent=1 // pred_check
      _
    $region35: #{pnet_forward.1} parent=1 // pred_check_branch
      %7691 = sbr.rel (0) target = $region37
    $region36: #{pnet_forward.1} parent=1 // pred_region
      %7692 = dma.done [#allocation3], 1792
    $region37: #{pnet_forward.1} parent=1 // pred_fallthru
      _
    %7693 = vsyncpa [#allocation3], 1

</llo_original>
